<compile_context>
chip_gen: v6e
topology: v6e:2x2x1
jax: 0.10.0
libtpu: 0.0.40
codegen_flags: <defaults>
</compile_context>

<pallas_src>
import functools
import math

import jax
import jax.numpy as jnp
from jax.experimental import pallas as pl
from jax.experimental.pallas import tpu as pltpu


def _attention_layer(h, valid, W, a_src, a_dst, *, num_heads, alpha,
                     apply_log_softmax):
    """One (multi-head) GraphAttentionLayer, fully in-VMEM.

    h:      (N, Fin)  f32 activations
    valid:  (N, N)    bool, valid[j, i] = edge i -> j (incl. self loops)
    W:      (Fin, num_heads * Fout) f32
    a_src:  (num_heads, Fout) f32   == a[:Fout].T per head (source-node half)
    a_dst:  (num_heads, Fout) f32   == a[Fout:].T per head (target-node half)
    """
    N = h.shape[0]
    fout = a_src.shape[1]

    # Wh_all = h @ W_all  -- single MXU pass for all heads, bf16 in / f32 acc.
    Wh_all = jnp.dot(h.astype(jnp.bfloat16), W.astype(jnp.bfloat16),
                     preferred_element_type=jnp.float32)       # (N, H*Fout)

    head_outs = []
    for hd in range(num_heads):
        Wh = Wh_all[:, hd * fout:(hd + 1) * fout]               # (N, Fout) f32
        a_s = a_src[hd:hd + 1, :]                               # (1, Fout)
        a_d = a_dst[hd:hd + 1, :]                               # (1, Fout)

        # Source-node scores as a (1, N) row: wh1[i] = Wh[i] . a_src
        wh1_row = jax.lax.dot_general(a_s, Wh, (((1,), (1,)), ((), ())),
                                      preferred_element_type=jnp.float32)
        # Target-node scores as an (N, 1) column: wh2[j] = Wh[j] . a_dst (VPU)
        wh2_col = jnp.sum(Wh * a_d, axis=-1, keepdims=True)

        # e[j, i] = LeakyReLU(wh2[j] + wh1[i])
        e = wh2_col + wh1_row                                   # (N, N)
        e = jnp.maximum(e, alpha * e)                           # LeakyReLU (alpha<1)

        # Masked segment softmax over source nodes i for each target j (f32).
        neg = jnp.float32(-1e30)
        e_m = jnp.where(valid, e, neg)
        row_max = jnp.max(e_m, axis=-1, keepdims=True)
        p = jnp.where(valid, jnp.exp(e_m - row_max), 0.0)
        denom = jnp.sum(p, axis=-1, keepdims=True)
        # Rows with no incoming edges -> zero output (PyTorch ref would be NaN).
        denom = jnp.where(denom <= 0.0, 1.0, denom)
        att = p * pl.reciprocal(denom, approx=True)             # (N, N)

        # h_prime[j] = sum_i att[j, i] * Wh[i]  -- bf16 MXU, f32 accumulate.
        hp = jnp.dot(att.astype(jnp.bfloat16), Wh.astype(jnp.bfloat16),
                     preferred_element_type=jnp.float32)        # (N, Fout)

        # ELU (f32)
        hp = jnp.where(hp > 0, hp, jnp.exp(jnp.minimum(hp, 0.0)) - 1.0)
        head_outs.append(hp)

    out = head_outs[0] if num_heads == 1 else jnp.concatenate(head_outs, axis=1)

    if apply_log_softmax:
        mm = jnp.max(out, axis=-1, keepdims=True)
        z = out - mm
        lse = jnp.log(jnp.sum(jnp.exp(z), axis=-1, keepdims=True))
        out = z - lse
    return out


def _gat_fused_kernel(*refs, alpha, num_heads):
    # refs = (x, mask, [W, a_src, a_dst] * num_layers, out)
    x_ref, mask_ref = refs[0], refs[1]
    out_ref = refs[-1]
    param_refs = refs[2:-1]
    num_layers = len(param_refs) // 3

    valid = mask_ref[...] > 0.0            # computed once, reused by all layers
    h = x_ref[...]

    for l in range(num_layers):
        W_ref, a_src_ref, a_dst_ref = param_refs[3 * l:3 * l + 3]
        is_last = l == num_layers - 1
        h = _attention_layer(
            h, valid, W_ref[...], a_src_ref[...], a_dst_ref[...],
            num_heads=1 if is_last else num_heads,
            alpha=alpha,
            apply_log_softmax=is_last)

    out_ref[...] = h


def gat_forward(x, mask, layers, *, alpha=0.2, num_heads=2):
    """Fused GAT forward.  layers = [(W_all, a_src_all, a_dst_all), ...];
    the last entry is the single-head output layer."""
    N = x.shape[0]
    out_features = layers[-1][0].shape[1]

    args = [x, mask]
    in_specs = [pl.BlockSpec(x.shape, lambda i: (0, 0)),
                pl.BlockSpec(mask.shape, lambda i: (0, 0))]
    for (W, a_s, a_d) in layers:
        for arr in (W, a_s, a_d):
            args.append(arr)
            in_specs.append(pl.BlockSpec(arr.shape, lambda i: (0, 0)))

    kernel = functools.partial(_gat_fused_kernel, alpha=alpha,
                               num_heads=num_heads)
    return pl.pallas_call(
        kernel,
        out_shape=jax.ShapeDtypeStruct((N, out_features), jnp.float32),
        grid=(1,),
        in_specs=in_specs,
        out_specs=pl.BlockSpec((N, out_features), lambda i: (0, 0)),
        compiler_params=pltpu.CompilerParams(
            dimension_semantics=("arbitrary",)),
    )(*args)


def build_dense_mask(edge_index, num_nodes):
    """Densify (2, E) edge list; mask[j, i] = 1 iff edge i -> j, plus target self-loops."""
    src = edge_index[0]
    dst = edge_index[1]
    mask = jnp.zeros((num_nodes, num_nodes), jnp.float32)
    mask = mask.at[dst, src].set(1.0)
    mask = mask.at[dst, dst].set(1.0)   # == appending (u, u) for u in adj_col.unique()
    return mask


def init_gat_params(key, input_size, hidden_size, output_size, num_hidden, num_heads):
    def xavier(k, shape, gain=1.414):
        fan_out, fan_in = shape[0], shape[1]          # torch convention for 2-D tensors
        bound = gain * math.sqrt(6.0 / (fan_in + fan_out))
        return jax.random.uniform(k, shape, jnp.float32, -bound, bound)

    layers = []
    fin = input_size
    for _ in range(num_hidden - 1):
        Ws, a_srcs, a_dsts = [], [], []
        for _ in range(num_heads):
            key, k1, k2 = jax.random.split(key, 3)
            Ws.append(xavier(k1, (fin, hidden_size)))
            a = xavier(k2, (2 * hidden_size, 1))
            a_srcs.append(a[:hidden_size].reshape(1, hidden_size))
            a_dsts.append(a[hidden_size:].reshape(1, hidden_size))
        layers.append((jnp.concatenate(Ws, axis=1),          # (Fin, H*Fout)
                       jnp.concatenate(a_srcs, axis=0),       # (H, Fout)
                       jnp.concatenate(a_dsts, axis=0)))      # (H, Fout)
        fin = hidden_size * num_heads

    # Output layer: single head, concat=False (ELU + log_softmax applied by GAT.forward).
    key, k1, k2 = jax.random.split(key, 3)
    W = xavier(k1, (fin, output_size))
    a = xavier(k2, (2 * output_size, 1))
    layers.append((W,
                   a[:output_size].reshape(1, output_size),
                   a[output_size:].reshape(1, output_size)))
    return layers


if __name__ == "__main__":
    N = 128                  # number of graph nodes
    input_size = 16
    hidden_size = 32
    output_size = 8
    num_hidden = 3
    num_heads = 2

    key = jax.random.PRNGKey(0)
    kx, kp = jax.random.split(key)
    x = jax.random.normal(kx, (N, input_size), dtype=jnp.float32)

    # Deterministic simple directed graph: three circulant offsets (no dup edges,
    # no pre-existing self-loops), E = 3 * N = 384 edges.
    nodes = jnp.arange(N, dtype=jnp.int32)
    src = jnp.concatenate([nodes, nodes, nodes])
    dst = jnp.concatenate([(nodes + 1) % N, (nodes + 5) % N, (nodes + 17) % N])
    edge_index = jnp.stack([src, dst]).astype(jnp.int32)        # (2, 384)

    mask = build_dense_mask(edge_index, N)
    layers = init_gat_params(kp, input_size, hidden_size, output_size,
                             num_hidden, num_heads)

    out = gat_forward(x, mask, layers, alpha=0.2, num_heads=num_heads)
    out = jax.block_until_ready(out)

    assert out.shape == (N, output_size)
    assert bool(jnp.all(jnp.isfinite(out)))
    # log_softmax rows must exponentiate-sum to 1
    assert bool(jnp.allclose(jnp.sum(jnp.exp(out), axis=1), 1.0, atol=1e-3))
    print("KERNEL_OK")
</pallas_src>

<mosaic_0001>
module attributes {stable_mosaic.version = 11 : i64} {
  func.func @_gat_fused_kernel(%arg0: i32, %arg1: memref<128x16xf32, #tpu.memory_space<vmem>>, %arg2: memref<128x128xf32, #tpu.memory_space<vmem>>, %arg3: memref<16x64xf32, #tpu.memory_space<vmem>>, %arg4: memref<2x32xf32, #tpu.memory_space<vmem>>, %arg5: memref<2x32xf32, #tpu.memory_space<vmem>>, %arg6: memref<64x64xf32, #tpu.memory_space<vmem>>, %arg7: memref<2x32xf32, #tpu.memory_space<vmem>>, %arg8: memref<2x32xf32, #tpu.memory_space<vmem>>, %arg9: memref<64x8xf32, #tpu.memory_space<vmem>>, %arg10: memref<1x8xf32, #tpu.memory_space<vmem>>, %arg11: memref<1x8xf32, #tpu.memory_space<vmem>>, %arg12: memref<128x8xf32, #tpu.memory_space<vmem>>) attributes {dimension_semantics = [#tpu.dimension_semantics<arbitrary>], iteration_bounds = array<i64: 1>, scalar_prefetch = 0 : i64, scratch_operands = 0 : i64, tpu.core_type = #tpu.core_type<tc>, window_params = [{pipeline_mode = #tpu.pipeline_mode<synchronous>, transform_indices = @transform_0, window_bounds = array<i64: 128, 16>}, {pipeline_mode = #tpu.pipeline_mode<synchronous>, transform_indices = @transform_1, window_bounds = array<i64: 128, 128>}, {pipeline_mode = #tpu.pipeline_mode<synchronous>, transform_indices = @transform_2, window_bounds = array<i64: 16, 64>}, {pipeline_mode = #tpu.pipeline_mode<synchronous>, transform_indices = @transform_3, window_bounds = array<i64: 2, 32>}, {pipeline_mode = #tpu.pipeline_mode<synchronous>, transform_indices = @transform_4, window_bounds = array<i64: 2, 32>}, {pipeline_mode = #tpu.pipeline_mode<synchronous>, transform_indices = @transform_5, window_bounds = array<i64: 64, 64>}, {pipeline_mode = #tpu.pipeline_mode<synchronous>, transform_indices = @transform_6, window_bounds = array<i64: 2, 32>}, {pipeline_mode = #tpu.pipeline_mode<synchronous>, transform_indices = @transform_7, window_bounds = array<i64: 2, 32>}, {pipeline_mode = #tpu.pipeline_mode<synchronous>, transform_indices = @transform_8, window_bounds = array<i64: 64, 8>}, {pipeline_mode = #tpu.pipeline_mode<synchronous>, transform_indices = @transform_9, window_bounds = array<i64: 1, 8>}, {pipeline_mode = #tpu.pipeline_mode<synchronous>, transform_indices = @transform_10, window_bounds = array<i64: 1, 8>}, {pipeline_mode = #tpu.pipeline_mode<synchronous>, transform_indices = @transform_11, window_bounds = array<i64: 128, 8>}]} {
    %c0 = arith.constant 0 : index
    %c0_0 = arith.constant 0 : index
    %0 = vector.load %arg2[%c0, %c0_0] : memref<128x128xf32, #tpu.memory_space<vmem>>, vector<128x128xf32>
    %cst = arith.constant 0.000000e+00 : f32
    %1 = vector.broadcast %cst : f32 to vector<128x128xf32>
    %2 = arith.cmpf ogt, %0, %1 : vector<128x128xf32>
    %c0_1 = arith.constant 0 : index
    %c0_2 = arith.constant 0 : index
    %3 = vector.load %arg1[%c0_1, %c0_2] : memref<128x16xf32, #tpu.memory_space<vmem>>, vector<128x16xf32>
    %c0_3 = arith.constant 0 : index
    %c0_4 = arith.constant 0 : index
    %4 = vector.load %arg3[%c0_3, %c0_4] : memref<16x64xf32, #tpu.memory_space<vmem>>, vector<16x64xf32>
    %c0_5 = arith.constant 0 : index
    %c0_6 = arith.constant 0 : index
    %5 = vector.load %arg4[%c0_5, %c0_6] : memref<2x32xf32, #tpu.memory_space<vmem>>, vector<2x32xf32>
    %c0_7 = arith.constant 0 : index
    %c0_8 = arith.constant 0 : index
    %6 = vector.load %arg5[%c0_7, %c0_8] : memref<2x32xf32, #tpu.memory_space<vmem>>, vector<2x32xf32>
    %7 = arith.truncf %3 : vector<128x16xf32> to vector<128x16xbf16>
    %8 = arith.truncf %4 : vector<16x64xf32> to vector<16x64xbf16>
    %cst_9 = arith.constant dense<0.000000e+00> : vector<128x64xf32>
    %9 = tpu.matmul %7, %8, %cst_9 {dimension_numbers = #tpu.dot_dimension_numbers<[1], [0], [0], [1], [0, 0, 1, 1], [], []>} : vector<128x16xbf16>, vector<16x64xbf16>, vector<128x64xf32> -> vector<128x64xf32>
    %10 = vector.extract_strided_slice %9 {offsets = [0, 0], sizes = [128, 32], strides = [1, 1]} : vector<128x64xf32> to vector<128x32xf32>
    %11 = vector.extract_strided_slice %5 {offsets = [0, 0], sizes = [1, 32], strides = [1, 1]} : vector<2x32xf32> to vector<1x32xf32>
    %12 = vector.extract_strided_slice %6 {offsets = [0, 0], sizes = [1, 32], strides = [1, 1]} : vector<2x32xf32> to vector<1x32xf32>
    %cst_10 = arith.constant dense<0.000000e+00> : vector<1x128xf32>
    %13 = tpu.matmul %11, %10, %cst_10 {dimension_numbers = #tpu.dot_dimension_numbers<[1], [1], [0], [0], [0, 0, 1, 0], [], []>} : vector<1x32xf32>, vector<128x32xf32>, vector<1x128xf32> -> vector<1x128xf32>
    %14 = vector.broadcast %12 : vector<1x32xf32> to vector<128x32xf32>
    %15 = arith.mulf %10, %14 : vector<128x32xf32>
    %cst_11 = arith.constant dense<0.000000e+00> : vector<128xf32>
    %16 = vector.multi_reduction <add>, %15, %cst_11 [1] : vector<128x32xf32> to vector<128xf32>
    %17 = vector.shape_cast %16 : vector<128xf32> to vector<128x1xf32>
    %18 = vector.broadcast %17 : vector<128x1xf32> to vector<128x128xf32>
    %19 = vector.broadcast %13 : vector<1x128xf32> to vector<128x128xf32>
    %20 = arith.addf %18, %19 : vector<128x128xf32>
    %cst_12 = arith.constant 2.000000e-01 : f32
    %21 = vector.broadcast %cst_12 : f32 to vector<128x128xf32>
    %22 = arith.mulf %21, %20 : vector<128x128xf32>
    %23 = arith.maximumf %20, %22 : vector<128x128xf32>
    %cst_13 = arith.constant -1.000000e+30 : f32
    %24 = vector.broadcast %cst_13 : f32 to vector<128x128xf32>
    %25 = arith.select %2, %23, %24 : vector<128x128xi1>, vector<128x128xf32>
    %cst_14 = arith.constant dense<0xFF800000> : vector<128xf32>
    %26 = vector.multi_reduction <maximumf>, %25, %cst_14 [1] : vector<128x128xf32> to vector<128xf32>
    %27 = vector.shape_cast %26 : vector<128xf32> to vector<128x1xf32>
    %28 = vector.broadcast %27 : vector<128x1xf32> to vector<128x128xf32>
    %29 = arith.subf %25, %28 : vector<128x128xf32>
    %30 = math.exp %29 : vector<128x128xf32>
    %cst_15 = arith.constant 0.000000e+00 : f32
    %31 = vector.broadcast %cst_15 : f32 to vector<128x128xf32>
    %32 = arith.select %2, %30, %31 : vector<128x128xi1>, vector<128x128xf32>
    %cst_16 = arith.constant dense<0.000000e+00> : vector<128xf32>
    %33 = vector.multi_reduction <add>, %32, %cst_16 [1] : vector<128x128xf32> to vector<128xf32>
    %34 = vector.shape_cast %33 : vector<128xf32> to vector<128x1xf32>
    %cst_17 = arith.constant 0.000000e+00 : f32
    %35 = vector.broadcast %cst_17 : f32 to vector<128x1xf32>
    %36 = arith.cmpf ole, %34, %35 : vector<128x1xf32>
    %cst_18 = arith.constant 1.000000e+00 : f32
    %37 = vector.broadcast %cst_18 : f32 to vector<128x1xf32>
    %38 = arith.select %36, %37, %34 : vector<128x1xi1>, vector<128x1xf32>
    %39 = tpu.reciprocal %38 {approx = true} : vector<128x1xf32> -> vector<128x1xf32>
    %40 = vector.broadcast %39 : vector<128x1xf32> to vector<128x128xf32>
    %41 = arith.mulf %32, %40 : vector<128x128xf32>
    %42 = arith.truncf %41 : vector<128x128xf32> to vector<128x128xbf16>
    %43 = arith.truncf %10 : vector<128x32xf32> to vector<128x32xbf16>
    %cst_19 = arith.constant dense<0.000000e+00> : vector<128x32xf32>
    %44 = tpu.matmul %42, %43, %cst_19 {dimension_numbers = #tpu.dot_dimension_numbers<[1], [0], [0], [1], [0, 0, 1, 1], [], []>} : vector<128x128xbf16>, vector<128x32xbf16>, vector<128x32xf32> -> vector<128x32xf32>
    %cst_20 = arith.constant 0.000000e+00 : f32
    %45 = vector.broadcast %cst_20 : f32 to vector<128x32xf32>
    %46 = arith.cmpf ogt, %44, %45 : vector<128x32xf32>
    %cst_21 = arith.constant 0.000000e+00 : f32
    %47 = vector.broadcast %cst_21 : f32 to vector<128x32xf32>
    %48 = arith.minimumf %44, %47 : vector<128x32xf32>
    %49 = math.exp %48 : vector<128x32xf32>
    %cst_22 = arith.constant 1.000000e+00 : f32
    %50 = vector.broadcast %cst_22 : f32 to vector<128x32xf32>
    %51 = arith.subf %49, %50 : vector<128x32xf32>
    %52 = arith.select %46, %44, %51 : vector<128x32xi1>, vector<128x32xf32>
    %53 = vector.extract_strided_slice %9 {offsets = [0, 32], sizes = [128, 32], strides = [1, 1]} : vector<128x64xf32> to vector<128x32xf32>
    %54 = vector.extract_strided_slice %5 {offsets = [1, 0], sizes = [1, 32], strides = [1, 1]} : vector<2x32xf32> to vector<1x32xf32>
    %55 = vector.extract_strided_slice %6 {offsets = [1, 0], sizes = [1, 32], strides = [1, 1]} : vector<2x32xf32> to vector<1x32xf32>
    %cst_23 = arith.constant dense<0.000000e+00> : vector<1x128xf32>
    %56 = tpu.matmul %54, %53, %cst_23 {dimension_numbers = #tpu.dot_dimension_numbers<[1], [1], [0], [0], [0, 0, 1, 0], [], []>} : vector<1x32xf32>, vector<128x32xf32>, vector<1x128xf32> -> vector<1x128xf32>
    %57 = vector.broadcast %55 : vector<1x32xf32> to vector<128x32xf32>
    %58 = arith.mulf %53, %57 : vector<128x32xf32>
    %cst_24 = arith.constant dense<0.000000e+00> : vector<128xf32>
    %59 = vector.multi_reduction <add>, %58, %cst_24 [1] : vector<128x32xf32> to vector<128xf32>
    %60 = vector.shape_cast %59 : vector<128xf32> to vector<128x1xf32>
    %61 = vector.broadcast %60 : vector<128x1xf32> to vector<128x128xf32>
    %62 = vector.broadcast %56 : vector<1x128xf32> to vector<128x128xf32>
    %63 = arith.addf %61, %62 : vector<128x128xf32>
    %cst_25 = arith.constant 2.000000e-01 : f32
    %64 = vector.broadcast %cst_25 : f32 to vector<128x128xf32>
    %65 = arith.mulf %64, %63 : vector<128x128xf32>
    %66 = arith.maximumf %63, %65 : vector<128x128xf32>
    %cst_26 = arith.constant -1.000000e+30 : f32
    %67 = vector.broadcast %cst_26 : f32 to vector<128x128xf32>
    %68 = arith.select %2, %66, %67 : vector<128x128xi1>, vector<128x128xf32>
    %cst_27 = arith.constant dense<0xFF800000> : vector<128xf32>
    %69 = vector.multi_reduction <maximumf>, %68, %cst_27 [1] : vector<128x128xf32> to vector<128xf32>
    %70 = vector.shape_cast %69 : vector<128xf32> to vector<128x1xf32>
    %71 = vector.broadcast %70 : vector<128x1xf32> to vector<128x128xf32>
    %72 = arith.subf %68, %71 : vector<128x128xf32>
    %73 = math.exp %72 : vector<128x128xf32>
    %cst_28 = arith.constant 0.000000e+00 : f32
    %74 = vector.broadcast %cst_28 : f32 to vector<128x128xf32>
    %75 = arith.select %2, %73, %74 : vector<128x128xi1>, vector<128x128xf32>
    %cst_29 = arith.constant dense<0.000000e+00> : vector<128xf32>
    %76 = vector.multi_reduction <add>, %75, %cst_29 [1] : vector<128x128xf32> to vector<128xf32>
    %77 = vector.shape_cast %76 : vector<128xf32> to vector<128x1xf32>
    %cst_30 = arith.constant 0.000000e+00 : f32
    %78 = vector.broadcast %cst_30 : f32 to vector<128x1xf32>
    %79 = arith.cmpf ole, %77, %78 : vector<128x1xf32>
    %cst_31 = arith.constant 1.000000e+00 : f32
    %80 = vector.broadcast %cst_31 : f32 to vector<128x1xf32>
    %81 = arith.select %79, %80, %77 : vector<128x1xi1>, vector<128x1xf32>
    %82 = tpu.reciprocal %81 {approx = true} : vector<128x1xf32> -> vector<128x1xf32>
    %83 = vector.broadcast %82 : vector<128x1xf32> to vector<128x128xf32>
    %84 = arith.mulf %75, %83 : vector<128x128xf32>
    %85 = arith.truncf %84 : vector<128x128xf32> to vector<128x128xbf16>
    %86 = arith.truncf %53 : vector<128x32xf32> to vector<128x32xbf16>
    %cst_32 = arith.constant dense<0.000000e+00> : vector<128x32xf32>
    %87 = tpu.matmul %85, %86, %cst_32 {dimension_numbers = #tpu.dot_dimension_numbers<[1], [0], [0], [1], [0, 0, 1, 1], [], []>} : vector<128x128xbf16>, vector<128x32xbf16>, vector<128x32xf32> -> vector<128x32xf32>
    %cst_33 = arith.constant 0.000000e+00 : f32
    %88 = vector.broadcast %cst_33 : f32 to vector<128x32xf32>
    %89 = arith.cmpf ogt, %87, %88 : vector<128x32xf32>
    %cst_34 = arith.constant 0.000000e+00 : f32
    %90 = vector.broadcast %cst_34 : f32 to vector<128x32xf32>
    %91 = arith.minimumf %87, %90 : vector<128x32xf32>
    %92 = math.exp %91 : vector<128x32xf32>
    %cst_35 = arith.constant 1.000000e+00 : f32
    %93 = vector.broadcast %cst_35 : f32 to vector<128x32xf32>
    %94 = arith.subf %92, %93 : vector<128x32xf32>
    %95 = arith.select %89, %87, %94 : vector<128x32xi1>, vector<128x32xf32>
    %96 = tpu.concatenate %52, %95 in 1 : vector<128x32xf32>, vector<128x32xf32> -> vector<128x64xf32>
    %c0_36 = arith.constant 0 : index
    %c0_37 = arith.constant 0 : index
    %97 = vector.load %arg6[%c0_36, %c0_37] : memref<64x64xf32, #tpu.memory_space<vmem>>, vector<64x64xf32>
    %c0_38 = arith.constant 0 : index
    %c0_39 = arith.constant 0 : index
    %98 = vector.load %arg7[%c0_38, %c0_39] : memref<2x32xf32, #tpu.memory_space<vmem>>, vector<2x32xf32>
    %c0_40 = arith.constant 0 : index
    %c0_41 = arith.constant 0 : index
    %99 = vector.load %arg8[%c0_40, %c0_41] : memref<2x32xf32, #tpu.memory_space<vmem>>, vector<2x32xf32>
    %100 = arith.truncf %96 : vector<128x64xf32> to vector<128x64xbf16>
    %101 = arith.truncf %97 : vector<64x64xf32> to vector<64x64xbf16>
    %cst_42 = arith.constant dense<0.000000e+00> : vector<128x64xf32>
    %102 = tpu.matmul %100, %101, %cst_42 {dimension_numbers = #tpu.dot_dimension_numbers<[1], [0], [0], [1], [0, 0, 1, 1], [], []>} : vector<128x64xbf16>, vector<64x64xbf16>, vector<128x64xf32> -> vector<128x64xf32>
    %103 = vector.extract_strided_slice %102 {offsets = [0, 0], sizes = [128, 32], strides = [1, 1]} : vector<128x64xf32> to vector<128x32xf32>
    %104 = vector.extract_strided_slice %98 {offsets = [0, 0], sizes = [1, 32], strides = [1, 1]} : vector<2x32xf32> to vector<1x32xf32>
    %105 = vector.extract_strided_slice %99 {offsets = [0, 0], sizes = [1, 32], strides = [1, 1]} : vector<2x32xf32> to vector<1x32xf32>
    %cst_43 = arith.constant dense<0.000000e+00> : vector<1x128xf32>
    %106 = tpu.matmul %104, %103, %cst_43 {dimension_numbers = #tpu.dot_dimension_numbers<[1], [1], [0], [0], [0, 0, 1, 0], [], []>} : vector<1x32xf32>, vector<128x32xf32>, vector<1x128xf32> -> vector<1x128xf32>
    %107 = vector.broadcast %105 : vector<1x32xf32> to vector<128x32xf32>
    %108 = arith.mulf %103, %107 : vector<128x32xf32>
    %cst_44 = arith.constant dense<0.000000e+00> : vector<128xf32>
    %109 = vector.multi_reduction <add>, %108, %cst_44 [1] : vector<128x32xf32> to vector<128xf32>
    %110 = vector.shape_cast %109 : vector<128xf32> to vector<128x1xf32>
    %111 = vector.broadcast %110 : vector<128x1xf32> to vector<128x128xf32>
    %112 = vector.broadcast %106 : vector<1x128xf32> to vector<128x128xf32>
    %113 = arith.addf %111, %112 : vector<128x128xf32>
    %cst_45 = arith.constant 2.000000e-01 : f32
    %114 = vector.broadcast %cst_45 : f32 to vector<128x128xf32>
    %115 = arith.mulf %114, %113 : vector<128x128xf32>
    %116 = arith.maximumf %113, %115 : vector<128x128xf32>
    %cst_46 = arith.constant -1.000000e+30 : f32
    %117 = vector.broadcast %cst_46 : f32 to vector<128x128xf32>
    %118 = arith.select %2, %116, %117 : vector<128x128xi1>, vector<128x128xf32>
    %cst_47 = arith.constant dense<0xFF800000> : vector<128xf32>
    %119 = vector.multi_reduction <maximumf>, %118, %cst_47 [1] : vector<128x128xf32> to vector<128xf32>
    %120 = vector.shape_cast %119 : vector<128xf32> to vector<128x1xf32>
    %121 = vector.broadcast %120 : vector<128x1xf32> to vector<128x128xf32>
    %122 = arith.subf %118, %121 : vector<128x128xf32>
    %123 = math.exp %122 : vector<128x128xf32>
    %cst_48 = arith.constant 0.000000e+00 : f32
    %124 = vector.broadcast %cst_48 : f32 to vector<128x128xf32>
    %125 = arith.select %2, %123, %124 : vector<128x128xi1>, vector<128x128xf32>
    %cst_49 = arith.constant dense<0.000000e+00> : vector<128xf32>
    %126 = vector.multi_reduction <add>, %125, %cst_49 [1] : vector<128x128xf32> to vector<128xf32>
    %127 = vector.shape_cast %126 : vector<128xf32> to vector<128x1xf32>
    %cst_50 = arith.constant 0.000000e+00 : f32
    %128 = vector.broadcast %cst_50 : f32 to vector<128x1xf32>
    %129 = arith.cmpf ole, %127, %128 : vector<128x1xf32>
    %cst_51 = arith.constant 1.000000e+00 : f32
    %130 = vector.broadcast %cst_51 : f32 to vector<128x1xf32>
    %131 = arith.select %129, %130, %127 : vector<128x1xi1>, vector<128x1xf32>
    %132 = tpu.reciprocal %131 {approx = true} : vector<128x1xf32> -> vector<128x1xf32>
    %133 = vector.broadcast %132 : vector<128x1xf32> to vector<128x128xf32>
    %134 = arith.mulf %125, %133 : vector<128x128xf32>
    %135 = arith.truncf %134 : vector<128x128xf32> to vector<128x128xbf16>
    %136 = arith.truncf %103 : vector<128x32xf32> to vector<128x32xbf16>
    %cst_52 = arith.constant dense<0.000000e+00> : vector<128x32xf32>
    %137 = tpu.matmul %135, %136, %cst_52 {dimension_numbers = #tpu.dot_dimension_numbers<[1], [0], [0], [1], [0, 0, 1, 1], [], []>} : vector<128x128xbf16>, vector<128x32xbf16>, vector<128x32xf32> -> vector<128x32xf32>
    %cst_53 = arith.constant 0.000000e+00 : f32
    %138 = vector.broadcast %cst_53 : f32 to vector<128x32xf32>
    %139 = arith.cmpf ogt, %137, %138 : vector<128x32xf32>
    %cst_54 = arith.constant 0.000000e+00 : f32
    %140 = vector.broadcast %cst_54 : f32 to vector<128x32xf32>
    %141 = arith.minimumf %137, %140 : vector<128x32xf32>
    %142 = math.exp %141 : vector<128x32xf32>
    %cst_55 = arith.constant 1.000000e+00 : f32
    %143 = vector.broadcast %cst_55 : f32 to vector<128x32xf32>
    %144 = arith.subf %142, %143 : vector<128x32xf32>
    %145 = arith.select %139, %137, %144 : vector<128x32xi1>, vector<128x32xf32>
    %146 = vector.extract_strided_slice %102 {offsets = [0, 32], sizes = [128, 32], strides = [1, 1]} : vector<128x64xf32> to vector<128x32xf32>
    %147 = vector.extract_strided_slice %98 {offsets = [1, 0], sizes = [1, 32], strides = [1, 1]} : vector<2x32xf32> to vector<1x32xf32>
    %148 = vector.extract_strided_slice %99 {offsets = [1, 0], sizes = [1, 32], strides = [1, 1]} : vector<2x32xf32> to vector<1x32xf32>
    %cst_56 = arith.constant dense<0.000000e+00> : vector<1x128xf32>
    %149 = tpu.matmul %147, %146, %cst_56 {dimension_numbers = #tpu.dot_dimension_numbers<[1], [1], [0], [0], [0, 0, 1, 0], [], []>} : vector<1x32xf32>, vector<128x32xf32>, vector<1x128xf32> -> vector<1x128xf32>
    %150 = vector.broadcast %148 : vector<1x32xf32> to vector<128x32xf32>
    %151 = arith.mulf %146, %150 : vector<128x32xf32>
    %cst_57 = arith.constant dense<0.000000e+00> : vector<128xf32>
    %152 = vector.multi_reduction <add>, %151, %cst_57 [1] : vector<128x32xf32> to vector<128xf32>
    %153 = vector.shape_cast %152 : vector<128xf32> to vector<128x1xf32>
    %154 = vector.broadcast %153 : vector<128x1xf32> to vector<128x128xf32>
    %155 = vector.broadcast %149 : vector<1x128xf32> to vector<128x128xf32>
    %156 = arith.addf %154, %155 : vector<128x128xf32>
    %cst_58 = arith.constant 2.000000e-01 : f32
    %157 = vector.broadcast %cst_58 : f32 to vector<128x128xf32>
    %158 = arith.mulf %157, %156 : vector<128x128xf32>
    %159 = arith.maximumf %156, %158 : vector<128x128xf32>
    %cst_59 = arith.constant -1.000000e+30 : f32
    %160 = vector.broadcast %cst_59 : f32 to vector<128x128xf32>
    %161 = arith.select %2, %159, %160 : vector<128x128xi1>, vector<128x128xf32>
    %cst_60 = arith.constant dense<0xFF800000> : vector<128xf32>
    %162 = vector.multi_reduction <maximumf>, %161, %cst_60 [1] : vector<128x128xf32> to vector<128xf32>
    %163 = vector.shape_cast %162 : vector<128xf32> to vector<128x1xf32>
    %164 = vector.broadcast %163 : vector<128x1xf32> to vector<128x128xf32>
    %165 = arith.subf %161, %164 : vector<128x128xf32>
    %166 = math.exp %165 : vector<128x128xf32>
    %cst_61 = arith.constant 0.000000e+00 : f32
    %167 = vector.broadcast %cst_61 : f32 to vector<128x128xf32>
    %168 = arith.select %2, %166, %167 : vector<128x128xi1>, vector<128x128xf32>
    %cst_62 = arith.constant dense<0.000000e+00> : vector<128xf32>
    %169 = vector.multi_reduction <add>, %168, %cst_62 [1] : vector<128x128xf32> to vector<128xf32>
    %170 = vector.shape_cast %169 : vector<128xf32> to vector<128x1xf32>
    %cst_63 = arith.constant 0.000000e+00 : f32
    %171 = vector.broadcast %cst_63 : f32 to vector<128x1xf32>
    %172 = arith.cmpf ole, %170, %171 : vector<128x1xf32>
    %cst_64 = arith.constant 1.000000e+00 : f32
    %173 = vector.broadcast %cst_64 : f32 to vector<128x1xf32>
    %174 = arith.select %172, %173, %170 : vector<128x1xi1>, vector<128x1xf32>
    %175 = tpu.reciprocal %174 {approx = true} : vector<128x1xf32> -> vector<128x1xf32>
    %176 = vector.broadcast %175 : vector<128x1xf32> to vector<128x128xf32>
    %177 = arith.mulf %168, %176 : vector<128x128xf32>
    %178 = arith.truncf %177 : vector<128x128xf32> to vector<128x128xbf16>
    %179 = arith.truncf %146 : vector<128x32xf32> to vector<128x32xbf16>
    %cst_65 = arith.constant dense<0.000000e+00> : vector<128x32xf32>
    %180 = tpu.matmul %178, %179, %cst_65 {dimension_numbers = #tpu.dot_dimension_numbers<[1], [0], [0], [1], [0, 0, 1, 1], [], []>} : vector<128x128xbf16>, vector<128x32xbf16>, vector<128x32xf32> -> vector<128x32xf32>
    %cst_66 = arith.constant 0.000000e+00 : f32
    %181 = vector.broadcast %cst_66 : f32 to vector<128x32xf32>
    %182 = arith.cmpf ogt, %180, %181 : vector<128x32xf32>
    %cst_67 = arith.constant 0.000000e+00 : f32
    %183 = vector.broadcast %cst_67 : f32 to vector<128x32xf32>
    %184 = arith.minimumf %180, %183 : vector<128x32xf32>
    %185 = math.exp %184 : vector<128x32xf32>
    %cst_68 = arith.constant 1.000000e+00 : f32
    %186 = vector.broadcast %cst_68 : f32 to vector<128x32xf32>
    %187 = arith.subf %185, %186 : vector<128x32xf32>
    %188 = arith.select %182, %180, %187 : vector<128x32xi1>, vector<128x32xf32>
    %189 = tpu.concatenate %145, %188 in 1 : vector<128x32xf32>, vector<128x32xf32> -> vector<128x64xf32>
    %c0_69 = arith.constant 0 : index
    %c0_70 = arith.constant 0 : index
    %190 = vector.load %arg9[%c0_69, %c0_70] : memref<64x8xf32, #tpu.memory_space<vmem>>, vector<64x8xf32>
    %c0_71 = arith.constant 0 : index
    %c0_72 = arith.constant 0 : index
    %191 = vector.load %arg10[%c0_71, %c0_72] : memref<1x8xf32, #tpu.memory_space<vmem>>, vector<1x8xf32>
    %c0_73 = arith.constant 0 : index
    %c0_74 = arith.constant 0 : index
    %192 = vector.load %arg11[%c0_73, %c0_74] : memref<1x8xf32, #tpu.memory_space<vmem>>, vector<1x8xf32>
    %193 = arith.truncf %189 : vector<128x64xf32> to vector<128x64xbf16>
    %194 = arith.truncf %190 : vector<64x8xf32> to vector<64x8xbf16>
    %cst_75 = arith.constant dense<0.000000e+00> : vector<128x8xf32>
    %195 = tpu.matmul %193, %194, %cst_75 {dimension_numbers = #tpu.dot_dimension_numbers<[1], [0], [0], [1], [0, 0, 1, 1], [], []>} : vector<128x64xbf16>, vector<64x8xbf16>, vector<128x8xf32> -> vector<128x8xf32>
    %cst_76 = arith.constant dense<0.000000e+00> : vector<1x128xf32>
    %196 = tpu.matmul %191, %195, %cst_76 {dimension_numbers = #tpu.dot_dimension_numbers<[1], [1], [0], [0], [0, 0, 1, 0], [], []>} : vector<1x8xf32>, vector<128x8xf32>, vector<1x128xf32> -> vector<1x128xf32>
    %197 = vector.broadcast %192 : vector<1x8xf32> to vector<128x8xf32>
    %198 = arith.mulf %195, %197 : vector<128x8xf32>
    %cst_77 = arith.constant dense<0.000000e+00> : vector<128xf32>
    %199 = vector.multi_reduction <add>, %198, %cst_77 [1] : vector<128x8xf32> to vector<128xf32>
    %200 = vector.shape_cast %199 : vector<128xf32> to vector<128x1xf32>
    %201 = vector.broadcast %200 : vector<128x1xf32> to vector<128x128xf32>
    %202 = vector.broadcast %196 : vector<1x128xf32> to vector<128x128xf32>
    %203 = arith.addf %201, %202 : vector<128x128xf32>
    %cst_78 = arith.constant 2.000000e-01 : f32
    %204 = vector.broadcast %cst_78 : f32 to vector<128x128xf32>
    %205 = arith.mulf %204, %203 : vector<128x128xf32>
    %206 = arith.maximumf %203, %205 : vector<128x128xf32>
    %cst_79 = arith.constant -1.000000e+30 : f32
    %207 = vector.broadcast %cst_79 : f32 to vector<128x128xf32>
    %208 = arith.select %2, %206, %207 : vector<128x128xi1>, vector<128x128xf32>
    %cst_80 = arith.constant dense<0xFF800000> : vector<128xf32>
    %209 = vector.multi_reduction <maximumf>, %208, %cst_80 [1] : vector<128x128xf32> to vector<128xf32>
    %210 = vector.shape_cast %209 : vector<128xf32> to vector<128x1xf32>
    %211 = vector.broadcast %210 : vector<128x1xf32> to vector<128x128xf32>
    %212 = arith.subf %208, %211 : vector<128x128xf32>
    %213 = math.exp %212 : vector<128x128xf32>
    %cst_81 = arith.constant 0.000000e+00 : f32
    %214 = vector.broadcast %cst_81 : f32 to vector<128x128xf32>
    %215 = arith.select %2, %213, %214 : vector<128x128xi1>, vector<128x128xf32>
    %cst_82 = arith.constant dense<0.000000e+00> : vector<128xf32>
    %216 = vector.multi_reduction <add>, %215, %cst_82 [1] : vector<128x128xf32> to vector<128xf32>
    %217 = vector.shape_cast %216 : vector<128xf32> to vector<128x1xf32>
    %cst_83 = arith.constant 0.000000e+00 : f32
    %218 = vector.broadcast %cst_83 : f32 to vector<128x1xf32>
    %219 = arith.cmpf ole, %217, %218 : vector<128x1xf32>
    %cst_84 = arith.constant 1.000000e+00 : f32
    %220 = vector.broadcast %cst_84 : f32 to vector<128x1xf32>
    %221 = arith.select %219, %220, %217 : vector<128x1xi1>, vector<128x1xf32>
    %222 = tpu.reciprocal %221 {approx = true} : vector<128x1xf32> -> vector<128x1xf32>
    %223 = vector.broadcast %222 : vector<128x1xf32> to vector<128x128xf32>
    %224 = arith.mulf %215, %223 : vector<128x128xf32>
    %225 = arith.truncf %224 : vector<128x128xf32> to vector<128x128xbf16>
    %226 = arith.truncf %195 : vector<128x8xf32> to vector<128x8xbf16>
    %cst_85 = arith.constant dense<0.000000e+00> : vector<128x8xf32>
    %227 = tpu.matmul %225, %226, %cst_85 {dimension_numbers = #tpu.dot_dimension_numbers<[1], [0], [0], [1], [0, 0, 1, 1], [], []>} : vector<128x128xbf16>, vector<128x8xbf16>, vector<128x8xf32> -> vector<128x8xf32>
    %cst_86 = arith.constant 0.000000e+00 : f32
    %228 = vector.broadcast %cst_86 : f32 to vector<128x8xf32>
    %229 = arith.cmpf ogt, %227, %228 : vector<128x8xf32>
    %cst_87 = arith.constant 0.000000e+00 : f32
    %230 = vector.broadcast %cst_87 : f32 to vector<128x8xf32>
    %231 = arith.minimumf %227, %230 : vector<128x8xf32>
    %232 = math.exp %231 : vector<128x8xf32>
    %cst_88 = arith.constant 1.000000e+00 : f32
    %233 = vector.broadcast %cst_88 : f32 to vector<128x8xf32>
    %234 = arith.subf %232, %233 : vector<128x8xf32>
    %235 = arith.select %229, %227, %234 : vector<128x8xi1>, vector<128x8xf32>
    %cst_89 = arith.constant dense<0xFF800000> : vector<128xf32>
    %236 = vector.multi_reduction <maximumf>, %235, %cst_89 [1] : vector<128x8xf32> to vector<128xf32>
    %237 = vector.shape_cast %236 : vector<128xf32> to vector<128x1xf32>
    %238 = vector.broadcast %237 : vector<128x1xf32> to vector<128x8xf32>
    %239 = arith.subf %235, %238 : vector<128x8xf32>
    %240 = math.exp %239 : vector<128x8xf32>
    %cst_90 = arith.constant dense<0.000000e+00> : vector<128xf32>
    %241 = vector.multi_reduction <add>, %240, %cst_90 [1] : vector<128x8xf32> to vector<128xf32>
    %242 = vector.shape_cast %241 : vector<128xf32> to vector<128x1xf32>
    %243 = math.log %242 : vector<128x1xf32>
    %244 = vector.broadcast %243 : vector<128x1xf32> to vector<128x8xf32>
    %245 = arith.subf %239, %244 : vector<128x8xf32>
    %c0_91 = arith.constant 0 : index
    %c0_92 = arith.constant 0 : index
    %246 = vector.load %arg12[%c0_91, %c0_92] : memref<128x8xf32, #tpu.memory_space<vmem>>, vector<128x8xf32>
    tpu.vector_store %arg12[%c0_91, %c0_92], %245 {strides = array<i32>} : memref<128x8xf32, #tpu.memory_space<vmem>>, vector<128x8xf32>,
    return
  }
  func.func @transform_0(%arg0: i32) -> (i32, i32) {
    %c0_i32 = arith.constant 0 : i32
    %c0_i32_0 = arith.constant 0 : i32
    %c0_i32_1 = arith.constant 0 : i32
    return %c0_i32, %c0_i32_0 : i32, i32
  }
  func.func @transform_1(%arg0: i32) -> (i32, i32) {
    %c0_i32 = arith.constant 0 : i32
    %c0_i32_0 = arith.constant 0 : i32
    %c0_i32_1 = arith.constant 0 : i32
    return %c0_i32, %c0_i32_0 : i32, i32
  }
  func.func @transform_2(%arg0: i32) -> (i32, i32) {
    %c0_i32 = arith.constant 0 : i32
    %c0_i32_0 = arith.constant 0 : i32
    %c0_i32_1 = arith.constant 0 : i32
    return %c0_i32, %c0_i32_0 : i32, i32
  }
  func.func @transform_3(%arg0: i32) -> (i32, i32) {
    %c0_i32 = arith.constant 0 : i32
    %c0_i32_0 = arith.constant 0 : i32
    %c0_i32_1 = arith.constant 0 : i32
    return %c0_i32, %c0_i32_0 : i32, i32
  }
  func.func @transform_4(%arg0: i32) -> (i32, i32) {
    %c0_i32 = arith.constant 0 : i32
    %c0_i32_0 = arith.constant 0 : i32
    %c0_i32_1 = arith.constant 0 : i32
    return %c0_i32, %c0_i32_0 : i32, i32
  }
  func.func @transform_5(%arg0: i32) -> (i32, i32) {
    %c0_i32 = arith.constant 0 : i32
    %c0_i32_0 = arith.constant 0 : i32
    %c0_i32_1 = arith.constant 0 : i32
    return %c0_i32, %c0_i32_0 : i32, i32
  }
  func.func @transform_6(%arg0: i32) -> (i32, i32) {
    %c0_i32 = arith.constant 0 : i32
    %c0_i32_0 = arith.constant 0 : i32
    %c0_i32_1 = arith.constant 0 : i32
    return %c0_i32, %c0_i32_0 : i32, i32
  }
  func.func @transform_7(%arg0: i32) -> (i32, i32) {
    %c0_i32 = arith.constant 0 : i32
    %c0_i32_0 = arith.constant 0 : i32
    %c0_i32_1 = arith.constant 0 : i32
    return %c0_i32, %c0_i32_0 : i32, i32
  }
  func.func @transform_8(%arg0: i32) -> (i32, i32) {
    %c0_i32 = arith.constant 0 : i32
    %c0_i32_0 = arith.constant 0 : i32
    %c0_i32_1 = arith.constant 0 : i32
    return %c0_i32, %c0_i32_0 : i32, i32
  }
  func.func @transform_9(%arg0: i32) -> (i32, i32) {
    %c0_i32 = arith.constant 0 : i32
    %c0_i32_0 = arith.constant 0 : i32
    %c0_i32_1 = arith.constant 0 : i32
    return %c0_i32, %c0_i32_0 : i32, i32
  }
  func.func @transform_10(%arg0: i32) -> (i32, i32) {
    %c0_i32 = arith.constant 0 : i32
    %c0_i32_0 = arith.constant 0 : i32
    %c0_i32_1 = arith.constant 0 : i32
    return %c0_i32, %c0_i32_0 : i32, i32
  }
  func.func @transform_11(%arg0: i32) -> (i32, i32) {
    %c0_i32 = arith.constant 0 : i32
    %c0_i32_0 = arith.constant 0 : i32
    %c0_i32_1 = arith.constant 0 : i32
    return %c0_i32, %c0_i32_0 : i32, i32
  }
}

</mosaic_0001>

<llo_original>
// kernel: tpu_custom_call.1
$region0: #{tpu_custom_call.1}
  #allocation0 [shape = 'u32[]', space=smem, size = 0x4, offset = 0x4, fixed_abs, tag = 'smem constant byte address 0x4 - core index']
  #allocation1 [shape = 'u32[144,128]{1,0:T(1,128)}', space=vmem, size = 0x12000, scoped, tag = 'internal scratch']
  %s0 = inlined_call_operand.vmem [shape: f32[128,16], index: 0, kind: input, shape index: {}]
  %s1 = inlined_call_operand.vmem [shape: f32[128,128], index: 1, kind: input, shape index: {}]
  %s2 = inlined_call_operand.vmem [shape: f32[16,64], index: 2, kind: input, shape index: {}]
  %s3 = inlined_call_operand.vmem [shape: f32[2,32], index: 3, kind: input, shape index: {}]
  %s4 = inlined_call_operand.vmem [shape: f32[2,32], index: 4, kind: input, shape index: {}]
  %s5 = inlined_call_operand.vmem [shape: f32[64,64], index: 5, kind: input, shape index: {}]
  %s6 = inlined_call_operand.vmem [shape: f32[2,32], index: 6, kind: input, shape index: {}]
  %s7 = inlined_call_operand.vmem [shape: f32[2,32], index: 7, kind: input, shape index: {}]
  %s8 = inlined_call_operand.vmem [shape: f32[64,8], index: 8, kind: input, shape index: {}]
  %s9 = inlined_call_operand.vmem [shape: f32[1,8], index: 9, kind: input, shape index: {}]
  %s10 = inlined_call_operand.vmem [shape: f32[1,8], index: 10, kind: input, shape index: {}]
  %s11 = inlined_call_operand.vmem [shape: f32[128,8], index: 11, kind: output, shape index: {}]
  %s12 = sld [smem:[#allocation0]]
  $region54: #{tpu_custom_call.1} parent=0
    _
  %s14 = ssub.s32 1, %s12
  %s15 = scalar_select 0, %s14, %s12
  // Predicated region
  $region2: #{tpu_custom_call.1} parent=0 // pred_check
    _
  $region3: #{tpu_custom_call.1} parent=0 // pred_check_branch
    %17 = sbr.rel (0) target = $region5
  $region4: #{tpu_custom_call.1} parent=0 // pred_region
    _
  $region5: #{tpu_custom_call.1} parent=0 // pred_fallthru
    _
  // Predicated region
  $region6: #{tpu_custom_call.1} parent=0 // pred_check
    _
  $region7: #{tpu_custom_call.1} parent=0 // pred_check_branch
    %19 = sbr.rel (0) target = $region9
  $region8: #{tpu_custom_call.1} parent=0 // pred_region
    _
  $region9: #{tpu_custom_call.1} parent=0 // pred_fallthru
    _
  // Predicated region
  $region10: #{tpu_custom_call.1} parent=0 // pred_check
    _
  $region11: #{tpu_custom_call.1} parent=0 // pred_check_branch
    %21 = sbr.rel (0) target = $region13
  $region12: #{tpu_custom_call.1} parent=0 // pred_region
    _
  $region13: #{tpu_custom_call.1} parent=0 // pred_fallthru
    _
  // Predicated region
  $region14: #{tpu_custom_call.1} parent=0 // pred_check
    _
  $region15: #{tpu_custom_call.1} parent=0 // pred_check_branch
    %23 = sbr.rel (0) target = $region17
  $region16: #{tpu_custom_call.1} parent=0 // pred_region
    _
  $region17: #{tpu_custom_call.1} parent=0 // pred_fallthru
    _
  // Predicated region
  $region18: #{tpu_custom_call.1} parent=0 // pred_check
    _
  $region19: #{tpu_custom_call.1} parent=0 // pred_check_branch
    %25 = sbr.rel (0) target = $region21
  $region20: #{tpu_custom_call.1} parent=0 // pred_region
    _
  $region21: #{tpu_custom_call.1} parent=0 // pred_fallthru
    _
  // Predicated region
  $region22: #{tpu_custom_call.1} parent=0 // pred_check
    _
  $region23: #{tpu_custom_call.1} parent=0 // pred_check_branch
    %27 = sbr.rel (0) target = $region25
  $region24: #{tpu_custom_call.1} parent=0 // pred_region
    _
  $region25: #{tpu_custom_call.1} parent=0 // pred_fallthru
    _
  // Predicated region
  $region26: #{tpu_custom_call.1} parent=0 // pred_check
    _
  $region27: #{tpu_custom_call.1} parent=0 // pred_check_branch
    %29 = sbr.rel (0) target = $region29
  $region28: #{tpu_custom_call.1} parent=0 // pred_region
    _
  $region29: #{tpu_custom_call.1} parent=0 // pred_fallthru
    _
  // Predicated region
  $region30: #{tpu_custom_call.1} parent=0 // pred_check
    _
  $region31: #{tpu_custom_call.1} parent=0 // pred_check_branch
    %31 = sbr.rel (0) target = $region33
  $region32: #{tpu_custom_call.1} parent=0 // pred_region
    _
  $region33: #{tpu_custom_call.1} parent=0 // pred_fallthru
    _
  // Predicated region
  $region34: #{tpu_custom_call.1} parent=0 // pred_check
    _
  $region35: #{tpu_custom_call.1} parent=0 // pred_check_branch
    %33 = sbr.rel (0) target = $region37
  $region36: #{tpu_custom_call.1} parent=0 // pred_region
    _
  $region37: #{tpu_custom_call.1} parent=0 // pred_fallthru
    _
  // Predicated region
  $region38: #{tpu_custom_call.1} parent=0 // pred_check
    _
  $region39: #{tpu_custom_call.1} parent=0 // pred_check_branch
    %35 = sbr.rel (0) target = $region41
  $region40: #{tpu_custom_call.1} parent=0 // pred_region
    _
  $region41: #{tpu_custom_call.1} parent=0 // pred_fallthru
    _
  // Predicated region
  $region42: #{tpu_custom_call.1} parent=0 // pred_check
    _
  $region43: #{tpu_custom_call.1} parent=0 // pred_check_branch
    %37 = sbr.rel (0) target = $region45
  $region44: #{tpu_custom_call.1} parent=0 // pred_region
    _
  $region45: #{tpu_custom_call.1} parent=0 // pred_fallthru
    _
  %v39 = vld [vmem:[%s1] sm:$0xff]
  %v40 = vld [vmem:[%s1 + $0x8] sm:$0xff]
  %v41 = vld [vmem:[%s1 + $0x10] sm:$0xff]
  %v42 = vld [vmem:[%s1 + $0x18] sm:$0xff]
  %v43 = vld [vmem:[%s1 + $0x20] sm:$0xff]
  %v44 = vld [vmem:[%s1 + $0x28] sm:$0xff]
  %v45 = vld [vmem:[%s1 + $0x30] sm:$0xff]
  %v46 = vld [vmem:[%s1 + $0x38] sm:$0xff]
  %v47 = vld [vmem:[%s1 + $0x40] sm:$0xff]
  %v48 = vld [vmem:[%s1 + $0x48] sm:$0xff]
  %v49 = vld [vmem:[%s1 + $0x50] sm:$0xff]
  %v50 = vld [vmem:[%s1 + $0x58] sm:$0xff]
  %v51 = vld [vmem:[%s1 + $0x60] sm:$0xff]
  %v52 = vld [vmem:[%s1 + $0x68] sm:$0xff]
  %v53 = vld [vmem:[%s1 + $0x70] sm:$0xff]
  %v54 = vld [vmem:[%s1 + $0x78] sm:$0xff]
  %vm55 = vcmp.gt.f32.partialorder %v39, 0.0
  %vm56 = vcmp.gt.f32.partialorder %v40, 0.0
  %vm57 = vcmp.gt.f32.partialorder %v41, 0.0
  %vm58 = vcmp.gt.f32.partialorder %v42, 0.0
  %vm59 = vcmp.gt.f32.partialorder %v43, 0.0
  %vm60 = vcmp.gt.f32.partialorder %v44, 0.0
  %vm61 = vcmp.gt.f32.partialorder %v45, 0.0
  %vm62 = vcmp.gt.f32.partialorder %v46, 0.0
  %vm63 = vcmp.gt.f32.partialorder %v47, 0.0
  %vm64 = vcmp.gt.f32.partialorder %v48, 0.0
  %vm65 = vcmp.gt.f32.partialorder %v49, 0.0
  %vm66 = vcmp.gt.f32.partialorder %v50, 0.0
  %vm67 = vcmp.gt.f32.partialorder %v51, 0.0
  %vm68 = vcmp.gt.f32.partialorder %v52, 0.0
  %vm69 = vcmp.gt.f32.partialorder %v53, 0.0
  %vm70 = vcmp.gt.f32.partialorder %v54, 0.0
  %v71 = vld [vmem:[%s0] sm:$0xff]
  %v72 = vld [vmem:[%s0 + $0x8] sm:$0xff]
  %v73 = vld [vmem:[%s0 + $0x10] sm:$0xff]
  %v74 = vld [vmem:[%s0 + $0x18] sm:$0xff]
  %v75 = vld [vmem:[%s0 + $0x20] sm:$0xff]
  %v76 = vld [vmem:[%s0 + $0x28] sm:$0xff]
  %v77 = vld [vmem:[%s0 + $0x30] sm:$0xff]
  %v78 = vld [vmem:[%s0 + $0x38] sm:$0xff]
  %v79 = vld [vmem:[%s0 + $0x40] sm:$0xff]
  %v80 = vld [vmem:[%s0 + $0x48] sm:$0xff]
  %v81 = vld [vmem:[%s0 + $0x50] sm:$0xff]
  %v82 = vld [vmem:[%s0 + $0x58] sm:$0xff]
  %v83 = vld [vmem:[%s0 + $0x60] sm:$0xff]
  %v84 = vld [vmem:[%s0 + $0x68] sm:$0xff]
  %v85 = vld [vmem:[%s0 + $0x70] sm:$0xff]
  %v86 = vld [vmem:[%s0 + $0x78] sm:$0xff]
  %v87 = vld [vmem:[%s2] sm:$0xff]
  %v88 = vld [vmem:[%s2 + $0x8] sm:$0xff]
  %v89 = vld [vmem:[%s3] sm:$0x3]
  %v90 = vld [vmem:[%s4] sm:$0x3]
  %v91 = vpack.c.bf16 %v72, %v71
  %v92 = vpack.c.bf16 %v74, %v73
  %v93 = vpack.c.bf16 %v76, %v75
  %v94 = vpack.c.bf16 %v78, %v77
  %v95 = vpack.c.bf16 %v80, %v79
  %v96 = vpack.c.bf16 %v82, %v81
  %v97 = vpack.c.bf16 %v84, %v83
  %v98 = vpack.c.bf16 %v86, %v85
  %v99 = vpack.c.bf16 %v88, %v87
  %vm100 = vcmask 130048
  %v102 = vsel %vm100, %v91, 0
  %v105 = vsel %vm100, %v92, 0
  %v108 = vsel %vm100, %v93, 0
  %v111 = vsel %vm100, %v94, 0
  %v114 = vsel %vm100, %v95, 0
  %v117 = vsel %vm100, %v96, 0
  %v120 = vsel %vm100, %v97, 0
  %v123 = vsel %vm100, %v98, 0
  %125 = vmatprep.subr.bf16.mxu0 0
  %126 = vmatpush1.bf16.msra.mxu0 0
  %127 = vmatprep.subr.bf16.mxu0 0
  %128 = vmatpush1.bf16.msra.mxu0 0
  %129 = vmatprep.subr.bf16.mxu0 0
  %130 = vmatpush1.bf16.msra.mxu0 0
  %131 = vmatprep.subr.bf16.mxu0 0
  %132 = vmatpush1.bf16.msra.mxu0 0
  %133 = vmatprep.subr.bf16.mxu0 0
  %134 = vmatpush1.bf16.msra.mxu0 0
  %135 = vmatprep.subr.bf16.mxu0 0
  %136 = vmatpush1.bf16.msra.mxu0 0
  %137 = vmatprep.subr.bf16.mxu0 0
  %138 = vmatpush1.bf16.msra.mxu0 0
  %139 = vmatprep.subr.bf16.mxu0 0
  %140 = vmatpush1.bf16.msra.mxu0 %v99
  %141 = vmatprep.subr.bf16.mxu0 0
  %142 = vmatpush2.bf16.msra.mxu0 0
  %143 = vmatprep.subr.bf16.mxu0 0
  %144 = vmatpush2.bf16.msra.mxu0 0
  %145 = vmatprep.subr.bf16.mxu0 0
  %146 = vmatpush2.bf16.msra.mxu0 0
  %147 = vmatprep.subr.bf16.mxu0 0
  %148 = vmatpush2.bf16.msra.mxu0 0
  %149 = vmatprep.subr.bf16.mxu0 0
  %150 = vmatpush2.bf16.msra.mxu0 0
  %151 = vmatprep.subr.bf16.mxu0 0
  %152 = vmatpush2.bf16.msra.mxu0 0
  %153 = vmatprep.subr.bf16.mxu0 0
  %154 = vmatpush2.bf16.msra.mxu0 0
  %155 = vmatprep.subr.bf16.mxu0 0
  %156 = vmatpush2.bf16.msra.mxu0 0
  %157 = vmatprep.mubr.bf16.mxu0 0
  %158 = vmatmul.mubr.bf16.gmra.mxu0 %v102
  %v159 = vpop.f32.mrf.mxu0
  %v160 = vadd.f32 0.0, %v159
  %v161 = vpop.f32.mrf.mxu0
  %v162 = vpop.f32.mrf.mxu0
  %v163 = vadd.f32 0.0, %v162
  %v164 = vpop.f32.mrf.mxu0
  %165 = vmatprep.mubr.bf16.mxu0 0
  %166 = vmatmul.mubr.bf16.gmra.mxu0 %v105
  %v167 = vpop.f32.mrf.mxu0
  %v168 = vadd.f32 0.0, %v167
  %v169 = vpop.f32.mrf.mxu0
  %v170 = vpop.f32.mrf.mxu0
  %v171 = vadd.f32 0.0, %v170
  %v172 = vpop.f32.mrf.mxu0
  %173 = vmatprep.mubr.bf16.mxu0 0
  %174 = vmatmul.mubr.bf16.gmra.mxu0 %v108
  %v175 = vpop.f32.mrf.mxu0
  %v176 = vadd.f32 0.0, %v175
  %v177 = vpop.f32.mrf.mxu0
  %v178 = vpop.f32.mrf.mxu0
  %v179 = vadd.f32 0.0, %v178
  %v180 = vpop.f32.mrf.mxu0
  %181 = vmatprep.mubr.bf16.mxu0 0
  %182 = vmatmul.mubr.bf16.gmra.mxu0 %v111
  %v183 = vpop.f32.mrf.mxu0
  %v184 = vadd.f32 0.0, %v183
  %v185 = vpop.f32.mrf.mxu0
  %v186 = vpop.f32.mrf.mxu0
  %v187 = vadd.f32 0.0, %v186
  %v188 = vpop.f32.mrf.mxu0
  %189 = vmatprep.mubr.bf16.mxu0 0
  %190 = vmatmul.mubr.bf16.gmra.mxu0 %v114
  %v191 = vpop.f32.mrf.mxu0
  %v192 = vadd.f32 0.0, %v191
  %v193 = vpop.f32.mrf.mxu0
  %v194 = vpop.f32.mrf.mxu0
  %v195 = vadd.f32 0.0, %v194
  %v196 = vpop.f32.mrf.mxu0
  %197 = vmatprep.mubr.bf16.mxu0 0
  %198 = vmatmul.mubr.bf16.gmra.mxu0 %v117
  %v199 = vpop.f32.mrf.mxu0
  %v200 = vadd.f32 0.0, %v199
  %v201 = vpop.f32.mrf.mxu0
  %v202 = vpop.f32.mrf.mxu0
  %v203 = vadd.f32 0.0, %v202
  %v204 = vpop.f32.mrf.mxu0
  %205 = vmatprep.mubr.bf16.mxu0 0
  %206 = vmatmul.mubr.bf16.gmra.mxu0 %v120
  %v207 = vpop.f32.mrf.mxu0
  %v208 = vadd.f32 0.0, %v207
  %v209 = vpop.f32.mrf.mxu0
  %v210 = vpop.f32.mrf.mxu0
  %v211 = vadd.f32 0.0, %v210
  %v212 = vpop.f32.mrf.mxu0
  %213 = vmatprep.mubr.bf16.mxu0 0
  %214 = vmatmul.mubr.bf16.gmra.mxu0 %v123
  %v215 = vpop.f32.mrf.mxu0
  %v216 = vadd.f32 0.0, %v215
  %v217 = vpop.f32.mrf.mxu0
  %v218 = vpop.f32.mrf.mxu0
  %v219 = vadd.f32 0.0, %v218
  %v220 = vpop.f32.mrf.mxu0
  %221 = vdwg.mxu0
  %vm222 = vcmask 261120
  %v224 = vsel %vm222, %v89, 0
  %v227 = vsel %vm222, %v160, 0
  %v230 = vsel %vm222, %v163, 0
  %v233 = vsel %vm222, %v168, 0
  %v236 = vsel %vm222, %v171, 0
  %v239 = vsel %vm222, %v176, 0
  %v242 = vsel %vm222, %v179, 0
  %v245 = vsel %vm222, %v184, 0
  %v248 = vsel %vm222, %v187, 0
  %v251 = vsel %vm222, %v192, 0
  %v254 = vsel %vm222, %v195, 0
  %v257 = vsel %vm222, %v200, 0
  %v260 = vsel %vm222, %v203, 0
  %v263 = vsel %vm222, %v208, 0
  %v266 = vsel %vm222, %v211, 0
  %v269 = vsel %vm222, %v216, 0
  %v272 = vsel %vm222, %v219, 0
  %274 = vmatprep.subr.mxu0 0.0
  %275 = vmatpush1.xpose.msra.mxu0 %v272
  %276 = vmatprep.subr.mxu0 0.0
  %277 = vmatpush1.xpose.msra.mxu0 %v269
  %278 = vmatprep.subr.mxu0 0.0
  %279 = vmatpush1.xpose.msra.mxu0 %v266
  %280 = vmatprep.subr.mxu0 0.0
  %281 = vmatpush1.xpose.msra.mxu0 %v263
  %282 = vmatprep.subr.mxu0 0.0
  %283 = vmatpush1.xpose.msra.mxu0 %v260
  %284 = vmatprep.subr.mxu0 0.0
  %285 = vmatpush1.xpose.msra.mxu0 %v257
  %286 = vmatprep.subr.mxu0 0.0
  %287 = vmatpush1.xpose.msra.mxu0 %v254
  %288 = vmatprep.subr.mxu0 0.0
  %289 = vmatpush1.xpose.msra.mxu0 %v251
  %290 = vmatprep.subr.mxu0 0.0
  %291 = vmatpush1.xpose.msra.mxu0 %v248
  %292 = vmatprep.subr.mxu0 0.0
  %293 = vmatpush1.xpose.msra.mxu0 %v245
  %294 = vmatprep.subr.mxu0 0.0
  %295 = vmatpush1.xpose.msra.mxu0 %v242
  %296 = vmatprep.subr.mxu0 0.0
  %297 = vmatpush1.xpose.msra.mxu0 %v239
  %298 = vmatprep.subr.mxu0 0.0
  %299 = vmatpush1.xpose.msra.mxu0 %v236
  %300 = vmatprep.subr.mxu0 0.0
  %301 = vmatpush1.xpose.msra.mxu0 %v233
  %302 = vmatprep.subr.mxu0 0.0
  %303 = vmatpush1.xpose.msra.mxu0 %v230
  %304 = vmatprep.subr.mxu0 0.0
  %305 = vmatpush1.xpose.msra.mxu0 %v227
  %306 = vmatprep.subr.mxu0 0.0
  %307 = vmatpush2.xpose.msra.mxu0 0.0
  %308 = vmatprep.subr.mxu0 0.0
  %309 = vmatpush2.xpose.msra.mxu0 0.0
  %310 = vmatprep.subr.mxu0 0.0
  %311 = vmatpush2.xpose.msra.mxu0 0.0
  %312 = vmatprep.subr.mxu0 0.0
  %313 = vmatpush2.xpose.msra.mxu0 0.0
  %314 = vmatprep.subr.mxu0 0.0
  %315 = vmatpush2.xpose.msra.mxu0 0.0
  %316 = vmatprep.subr.mxu0 0.0
  %317 = vmatpush2.xpose.msra.mxu0 0.0
  %318 = vmatprep.subr.mxu0 0.0
  %319 = vmatpush2.xpose.msra.mxu0 0.0
  %320 = vmatprep.subr.mxu0 0.0
  %321 = vmatpush2.xpose.msra.mxu0 0.0
  %322 = vmatprep.subr.mxu0 0.0
  %323 = vmatpush2.xpose.msra.mxu0 0.0
  %324 = vmatprep.subr.mxu0 0.0
  %325 = vmatpush2.xpose.msra.mxu0 0.0
  %326 = vmatprep.subr.mxu0 0.0
  %327 = vmatpush2.xpose.msra.mxu0 0.0
  %328 = vmatprep.subr.mxu0 0.0
  %329 = vmatpush2.xpose.msra.mxu0 0.0
  %330 = vmatprep.subr.mxu0 0.0
  %331 = vmatpush2.xpose.msra.mxu0 0.0
  %332 = vmatprep.subr.mxu0 0.0
  %333 = vmatpush2.xpose.msra.mxu0 0.0
  %334 = vmatprep.subr.mxu0 0.0
  %335 = vmatpush2.xpose.msra.mxu0 0.0
  %336 = vmatprep.subr.mxu0 0.0
  %337 = vmatpush2.xpose.msra.mxu0 0.0
  %338 = vmatprep.mubr.f32.mxu0 0.0
  %339 = vmatmul.mubr.f32.gmra.mxu0 %v224
  %v340 = vpop.f32.mrf.mxu0
  %v341 = vadd.f32 0.0, %v340
  %v342 = vpop.f32.mrf.mxu0
  %343 = vdwg.mxu0
  %v344 = vlaneseq
  %v345 = vshrl.u32 %v344, 7
  %v346 = vsub.s32 0, %v345
  %v347 = vrot.slane %v90, %v346
  %v348 = vmul.f32 %v160, %v347
  %v349 = vmul.f32 %v163, %v347
  %v350 = vmul.f32 %v168, %v347
  %v351 = vmul.f32 %v171, %v347
  %v352 = vmul.f32 %v176, %v347
  %v353 = vmul.f32 %v179, %v347
  %v354 = vmul.f32 %v184, %v347
  %v355 = vmul.f32 %v187, %v347
  %v356 = vmul.f32 %v192, %v347
  %v357 = vmul.f32 %v195, %v347
  %v358 = vmul.f32 %v200, %v347
  %v359 = vmul.f32 %v203, %v347
  %v360 = vmul.f32 %v208, %v347
  %v361 = vmul.f32 %v211, %v347
  %v362 = vmul.f32 %v216, %v347
  %v363 = vmul.f32 %v219, %v347
  %v364 = vsel %vm222, %v348, 0.0
  %365 = vadd.xlane.f32.xlu0 %v364
  %v366 = vpop.xlane.xlu0 %365
  %v367 = vsel %vm222, %v349, 0.0
  %368 = vadd.xlane.f32.xlu0 %v367
  %v369 = vpop.xlane.xlu0 %368
  %v370 = vsel %vm222, %v350, 0.0
  %371 = vadd.xlane.f32.xlu0 %v370
  %v372 = vpop.xlane.xlu0 %371
  %v373 = vsel %vm222, %v351, 0.0
  %374 = vadd.xlane.f32.xlu0 %v373
  %v375 = vpop.xlane.xlu0 %374
  %v376 = vsel %vm222, %v352, 0.0
  %377 = vadd.xlane.f32.xlu0 %v376
  %v378 = vpop.xlane.xlu0 %377
  %v379 = vsel %vm222, %v353, 0.0
  %380 = vadd.xlane.f32.xlu0 %v379
  %v381 = vpop.xlane.xlu0 %380
  %v382 = vsel %vm222, %v354, 0.0
  %383 = vadd.xlane.f32.xlu0 %v382
  %v384 = vpop.xlane.xlu0 %383
  %v385 = vsel %vm222, %v355, 0.0
  %386 = vadd.xlane.f32.xlu0 %v385
  %v387 = vpop.xlane.xlu0 %386
  %v388 = vsel %vm222, %v356, 0.0
  %389 = vadd.xlane.f32.xlu0 %v388
  %v390 = vpop.xlane.xlu0 %389
  %v391 = vsel %vm222, %v357, 0.0
  %392 = vadd.xlane.f32.xlu0 %v391
  %v393 = vpop.xlane.xlu0 %392
  %v394 = vsel %vm222, %v358, 0.0
  %395 = vadd.xlane.f32.xlu0 %v394
  %v396 = vpop.xlane.xlu0 %395
  %v397 = vsel %vm222, %v359, 0.0
  %398 = vadd.xlane.f32.xlu0 %v397
  %v399 = vpop.xlane.xlu0 %398
  %v400 = vsel %vm222, %v360, 0.0
  %401 = vadd.xlane.f32.xlu0 %v400
  %v402 = vpop.xlane.xlu0 %401
  %v403 = vsel %vm222, %v361, 0.0
  %404 = vadd.xlane.f32.xlu0 %v403
  %v405 = vpop.xlane.xlu0 %404
  %v406 = vsel %vm222, %v362, 0.0
  %407 = vadd.xlane.f32.xlu0 %v406
  %v408 = vpop.xlane.xlu0 %407
  %v409 = vsel %vm222, %v363, 0.0
  %410 = vadd.xlane.f32.xlu0 %v409
  %v411 = vpop.xlane.xlu0 %410
  %v412 = vlaneseq
  %v413 = vshrl.u32 %v412, 7
  %v414 = vsub.s32 0, %v413
  %v415 = vrot.slane %v341, %v414
  %v416 = vadd.f32 %v366, %v415
  %v417 = vadd.f32 %v369, %v415
  %v418 = vadd.f32 %v372, %v415
  %v419 = vadd.f32 %v375, %v415
  %v420 = vadd.f32 %v378, %v415
  %v421 = vadd.f32 %v381, %v415
  %v422 = vadd.f32 %v384, %v415
  %v423 = vadd.f32 %v387, %v415
  %v424 = vadd.f32 %v390, %v415
  %v425 = vadd.f32 %v393, %v415
  %v426 = vadd.f32 %v396, %v415
  %v427 = vadd.f32 %v399, %v415
  %v428 = vadd.f32 %v402, %v415
  %v429 = vadd.f32 %v405, %v415
  %v430 = vadd.f32 %v408, %v415
  %v431 = vadd.f32 %v411, %v415
  %v432 = vmul.f32 %v416, 0.2
  %v433 = vmul.f32 %v417, 0.2
  %v434 = vmul.f32 %v418, 0.2
  %v435 = vmul.f32 %v419, 0.2
  %v436 = vmul.f32 %v420, 0.2
  %v437 = vmul.f32 %v421, 0.2
  %v438 = vmul.f32 %v422, 0.2
  %v439 = vmul.f32 %v423, 0.2
  %v440 = vmul.f32 %v424, 0.2
  %v441 = vmul.f32 %v425, 0.2
  %v442 = vmul.f32 %v426, 0.2
  %v443 = vmul.f32 %v427, 0.2
  %v444 = vmul.f32 %v428, 0.2
  %v445 = vmul.f32 %v429, 0.2
  %v446 = vmul.f32 %v430, 0.2
  %v447 = vmul.f32 %v431, 0.2
  %v448 = vmax.f32 %v416, %v432
  %v449 = vmax.f32 %v417, %v433
  %v450 = vmax.f32 %v418, %v434
  %v451 = vmax.f32 %v419, %v435
  %v452 = vmax.f32 %v420, %v436
  %v453 = vmax.f32 %v421, %v437
  %v454 = vmax.f32 %v422, %v438
  %v455 = vmax.f32 %v423, %v439
  %v456 = vmax.f32 %v424, %v440
  %v457 = vmax.f32 %v425, %v441
  %v458 = vmax.f32 %v426, %v442
  %v459 = vmax.f32 %v427, %v443
  %v460 = vmax.f32 %v428, %v444
  %v461 = vmax.f32 %v429, %v445
  %v462 = vmax.f32 %v430, %v446
  %v463 = vmax.f32 %v431, %v447
  %v464 = vsel %vm55, %v448, -1e+30
  %v465 = vsel %vm56, %v449, -1e+30
  %v466 = vsel %vm57, %v450, -1e+30
  %v467 = vsel %vm58, %v451, -1e+30
  %v468 = vsel %vm59, %v452, -1e+30
  %v469 = vsel %vm60, %v453, -1e+30
  %v470 = vsel %vm61, %v454, -1e+30
  %v471 = vsel %vm62, %v455, -1e+30
  %v472 = vsel %vm63, %v456, -1e+30
  %v473 = vsel %vm64, %v457, -1e+30
  %v474 = vsel %vm65, %v458, -1e+30
  %v475 = vsel %vm66, %v459, -1e+30
  %v476 = vsel %vm67, %v460, -1e+30
  %v477 = vsel %vm68, %v461, -1e+30
  %v478 = vsel %vm69, %v462, -1e+30
  %v479 = vsel %vm70, %v463, -1e+30
  %480 = vmax.xlane.f32.xlu0 %v464
  %v481 = vpop.xlane.xlu0 %480
  %482 = vmax.xlane.f32.xlu0 %v465
  %v483 = vpop.xlane.xlu0 %482
  %484 = vmax.xlane.f32.xlu0 %v466
  %v485 = vpop.xlane.xlu0 %484
  %486 = vmax.xlane.f32.xlu0 %v467
  %v487 = vpop.xlane.xlu0 %486
  %488 = vmax.xlane.f32.xlu0 %v468
  %v489 = vpop.xlane.xlu0 %488
  %490 = vmax.xlane.f32.xlu0 %v469
  %v491 = vpop.xlane.xlu0 %490
  %492 = vmax.xlane.f32.xlu0 %v470
  %v493 = vpop.xlane.xlu0 %492
  %494 = vmax.xlane.f32.xlu0 %v471
  %v495 = vpop.xlane.xlu0 %494
  %496 = vmax.xlane.f32.xlu0 %v472
  %v497 = vpop.xlane.xlu0 %496
  %498 = vmax.xlane.f32.xlu0 %v473
  %v499 = vpop.xlane.xlu0 %498
  %500 = vmax.xlane.f32.xlu0 %v474
  %v501 = vpop.xlane.xlu0 %500
  %502 = vmax.xlane.f32.xlu0 %v475
  %v503 = vpop.xlane.xlu0 %502
  %504 = vmax.xlane.f32.xlu0 %v476
  %v505 = vpop.xlane.xlu0 %504
  %506 = vmax.xlane.f32.xlu0 %v477
  %v507 = vpop.xlane.xlu0 %506
  %508 = vmax.xlane.f32.xlu0 %v478
  %v509 = vpop.xlane.xlu0 %508
  %510 = vmax.xlane.f32.xlu0 %v479
  %v511 = vpop.xlane.xlu0 %510
  %v512 = vsub.f32 %v464, %v481
  %v513 = vsub.f32 %v465, %v483
  %v514 = vsub.f32 %v466, %v485
  %v515 = vsub.f32 %v467, %v487
  %v516 = vsub.f32 %v468, %v489
  %v517 = vsub.f32 %v469, %v491
  %v518 = vsub.f32 %v470, %v493
  %v519 = vsub.f32 %v471, %v495
  %v520 = vsub.f32 %v472, %v497
  %v521 = vsub.f32 %v473, %v499
  %v522 = vsub.f32 %v474, %v501
  %v523 = vsub.f32 %v475, %v503
  %v524 = vsub.f32 %v476, %v505
  %v525 = vsub.f32 %v477, %v507
  %v526 = vsub.f32 %v478, %v509
  %v527 = vsub.f32 %v479, %v511
  %v528 = vmul.f32 %v512, 1.442695
  %v529 = vpow.pop %v528
  %v530 = vmul.f32 %v513, 1.442695
  %v531 = vpow.pop %v530
  %v532 = vmul.f32 %v514, 1.442695
  %v533 = vpow.pop %v532
  %v534 = vmul.f32 %v515, 1.442695
  %v535 = vpow.pop %v534
  %v536 = vmul.f32 %v516, 1.442695
  %v537 = vpow.pop %v536
  %v538 = vmul.f32 %v517, 1.442695
  %v539 = vpow.pop %v538
  %v540 = vmul.f32 %v518, 1.442695
  %v541 = vpow.pop %v540
  %v542 = vmul.f32 %v519, 1.442695
  %v543 = vpow.pop %v542
  %v544 = vmul.f32 %v520, 1.442695
  %v545 = vpow.pop %v544
  %v546 = vmul.f32 %v521, 1.442695
  %v547 = vpow.pop %v546
  %v548 = vmul.f32 %v522, 1.442695
  %v549 = vpow.pop %v548
  %v550 = vmul.f32 %v523, 1.442695
  %v551 = vpow.pop %v550
  %v552 = vmul.f32 %v524, 1.442695
  %v553 = vpow.pop %v552
  %v554 = vmul.f32 %v525, 1.442695
  %v555 = vpow.pop %v554
  %v556 = vmul.f32 %v526, 1.442695
  %v557 = vpow.pop %v556
  %v558 = vmul.f32 %v527, 1.442695
  %v559 = vpow.pop %v558
  %v560 = vsel %vm55, %v529, 0.0
  %v561 = vsel %vm56, %v531, 0.0
  %v562 = vsel %vm57, %v533, 0.0
  %v563 = vsel %vm58, %v535, 0.0
  %v564 = vsel %vm59, %v537, 0.0
  %v565 = vsel %vm60, %v539, 0.0
  %v566 = vsel %vm61, %v541, 0.0
  %v567 = vsel %vm62, %v543, 0.0
  %v568 = vsel %vm63, %v545, 0.0
  %v569 = vsel %vm64, %v547, 0.0
  %v570 = vsel %vm65, %v549, 0.0
  %v571 = vsel %vm66, %v551, 0.0
  %v572 = vsel %vm67, %v553, 0.0
  %v573 = vsel %vm68, %v555, 0.0
  %v574 = vsel %vm69, %v557, 0.0
  %v575 = vsel %vm70, %v559, 0.0
  %576 = vadd.xlane.f32.xlu0 %v560
  %v577 = vpop.xlane.xlu0 %576
  %578 = vadd.xlane.f32.xlu0 %v561
  %v579 = vpop.xlane.xlu0 %578
  %580 = vadd.xlane.f32.xlu0 %v562
  %v581 = vpop.xlane.xlu0 %580
  %582 = vadd.xlane.f32.xlu0 %v563
  %v583 = vpop.xlane.xlu0 %582
  %584 = vadd.xlane.f32.xlu0 %v564
  %v585 = vpop.xlane.xlu0 %584
  %586 = vadd.xlane.f32.xlu0 %v565
  %v587 = vpop.xlane.xlu0 %586
  %588 = vadd.xlane.f32.xlu0 %v566
  %v589 = vpop.xlane.xlu0 %588
  %590 = vadd.xlane.f32.xlu0 %v567
  %v591 = vpop.xlane.xlu0 %590
  %592 = vadd.xlane.f32.xlu0 %v568
  %v593 = vpop.xlane.xlu0 %592
  %594 = vadd.xlane.f32.xlu0 %v569
  %v595 = vpop.xlane.xlu0 %594
  %596 = vadd.xlane.f32.xlu0 %v570
  %v597 = vpop.xlane.xlu0 %596
  %598 = vadd.xlane.f32.xlu0 %v571
  %v599 = vpop.xlane.xlu0 %598
  %600 = vadd.xlane.f32.xlu0 %v572
  %v601 = vpop.xlane.xlu0 %600
  %602 = vadd.xlane.f32.xlu0 %v573
  %v603 = vpop.xlane.xlu0 %602
  %604 = vadd.xlane.f32.xlu0 %v574
  %v605 = vpop.xlane.xlu0 %604
  %606 = vadd.xlane.f32.xlu0 %v575
  %v607 = vpop.xlane.xlu0 %606
  %vm608 = vcmp.le.f32.partialorder %v577, 0.0
  %vm609 = vcmp.le.f32.partialorder %v579, 0.0
  %vm610 = vcmp.le.f32.partialorder %v581, 0.0
  %vm611 = vcmp.le.f32.partialorder %v583, 0.0
  %vm612 = vcmp.le.f32.partialorder %v585, 0.0
  %vm613 = vcmp.le.f32.partialorder %v587, 0.0
  %vm614 = vcmp.le.f32.partialorder %v589, 0.0
  %vm615 = vcmp.le.f32.partialorder %v591, 0.0
  %vm616 = vcmp.le.f32.partialorder %v593, 0.0
  %vm617 = vcmp.le.f32.partialorder %v595, 0.0
  %vm618 = vcmp.le.f32.partialorder %v597, 0.0
  %vm619 = vcmp.le.f32.partialorder %v599, 0.0
  %vm620 = vcmp.le.f32.partialorder %v601, 0.0
  %vm621 = vcmp.le.f32.partialorder %v603, 0.0
  %vm622 = vcmp.le.f32.partialorder %v605, 0.0
  %vm623 = vcmp.le.f32.partialorder %v607, 0.0
  %v624 = vsel %vm608, 1.0, %v577
  %v625 = vsel %vm609, 1.0, %v579
  %v626 = vsel %vm610, 1.0, %v581
  %v627 = vsel %vm611, 1.0, %v583
  %v628 = vsel %vm612, 1.0, %v585
  %v629 = vsel %vm613, 1.0, %v587
  %v630 = vsel %vm614, 1.0, %v589
  %v631 = vsel %vm615, 1.0, %v591
  %v632 = vsel %vm616, 1.0, %v593
  %v633 = vsel %vm617, 1.0, %v595
  %v634 = vsel %vm618, 1.0, %v597
  %v635 = vsel %vm619, 1.0, %v599
  %v636 = vsel %vm620, 1.0, %v601
  %v637 = vsel %vm621, 1.0, %v603
  %v638 = vsel %vm622, 1.0, %v605
  %v639 = vsel %vm623, 1.0, %v607
  %v640 = vrcp.pop %v624
  %v641 = vrcp.pop %v625
  %v642 = vrcp.pop %v626
  %v643 = vrcp.pop %v627
  %v644 = vrcp.pop %v628
  %v645 = vrcp.pop %v629
  %v646 = vrcp.pop %v630
  %v647 = vrcp.pop %v631
  %v648 = vrcp.pop %v632
  %v649 = vrcp.pop %v633
  %v650 = vrcp.pop %v634
  %v651 = vrcp.pop %v635
  %v652 = vrcp.pop %v636
  %v653 = vrcp.pop %v637
  %v654 = vrcp.pop %v638
  %v655 = vrcp.pop %v639
  %v656 = vmul.f32 %v560, %v640
  %v657 = vmul.f32 %v561, %v641
  %v658 = vmul.f32 %v562, %v642
  %v659 = vmul.f32 %v563, %v643
  %v660 = vmul.f32 %v564, %v644
  %v661 = vmul.f32 %v565, %v645
  %v662 = vmul.f32 %v566, %v646
  %v663 = vmul.f32 %v567, %v647
  %v664 = vmul.f32 %v568, %v648
  %v665 = vmul.f32 %v569, %v649
  %v666 = vmul.f32 %v570, %v650
  %v667 = vmul.f32 %v571, %v651
  %v668 = vmul.f32 %v572, %v652
  %v669 = vmul.f32 %v573, %v653
  %v670 = vmul.f32 %v574, %v654
  %v671 = vmul.f32 %v575, %v655
  %v672 = vpack.c.bf16 %v657, %v656
  %v673 = vpack.c.bf16 %v659, %v658
  %v674 = vpack.c.bf16 %v661, %v660
  %v675 = vpack.c.bf16 %v663, %v662
  %v676 = vpack.c.bf16 %v665, %v664
  %v677 = vpack.c.bf16 %v667, %v666
  %v678 = vpack.c.bf16 %v669, %v668
  %v679 = vpack.c.bf16 %v671, %v670
  %v680 = vpack.c.bf16 %v163, %v160
  %v681 = vpack.c.bf16 %v171, %v168
  %v682 = vpack.c.bf16 %v179, %v176
  %v683 = vpack.c.bf16 %v187, %v184
  %v684 = vpack.c.bf16 %v195, %v192
  %v685 = vpack.c.bf16 %v203, %v200
  %v686 = vpack.c.bf16 %v211, %v208
  %v687 = vpack.c.bf16 %v219, %v216
  %688 = vmatprep.subr.bf16.mxu0 0
  %689 = vmatpush1.bf16.msra.mxu0 %v687
  %690 = vmatprep.subr.bf16.mxu0 0
  %691 = vmatpush1.bf16.msra.mxu0 %v686
  %692 = vmatprep.subr.bf16.mxu0 0
  %693 = vmatpush1.bf16.msra.mxu0 %v685
  %694 = vmatprep.subr.bf16.mxu0 0
  %695 = vmatpush1.bf16.msra.mxu0 %v684
  %696 = vmatprep.subr.bf16.mxu0 0
  %697 = vmatpush1.bf16.msra.mxu0 %v683
  %698 = vmatprep.subr.bf16.mxu0 0
  %699 = vmatpush1.bf16.msra.mxu0 %v682
  %700 = vmatprep.subr.bf16.mxu0 0
  %701 = vmatpush1.bf16.msra.mxu0 %v681
  %702 = vmatprep.subr.bf16.mxu0 0
  %703 = vmatpush1.bf16.msra.mxu0 %v680
  %704 = vmatprep.subr.bf16.mxu0 0
  %705 = vmatpush2.bf16.msra.mxu0 0
  %706 = vmatprep.subr.bf16.mxu0 0
  %707 = vmatpush2.bf16.msra.mxu0 0
  %708 = vmatprep.subr.bf16.mxu0 0
  %709 = vmatpush2.bf16.msra.mxu0 0
  %710 = vmatprep.subr.bf16.mxu0 0
  %711 = vmatpush2.bf16.msra.mxu0 0
  %712 = vmatprep.subr.bf16.mxu0 0
  %713 = vmatpush2.bf16.msra.mxu0 0
  %714 = vmatprep.subr.bf16.mxu0 0
  %715 = vmatpush2.bf16.msra.mxu0 0
  %716 = vmatprep.subr.bf16.mxu0 0
  %717 = vmatpush2.bf16.msra.mxu0 0
  %718 = vmatprep.subr.bf16.mxu0 0
  %719 = vmatpush2.bf16.msra.mxu0 0
  %720 = vmatprep.mubr.bf16.mxu0 0
  %721 = vmatmul.mubr.bf16.gmra.mxu0 %v672
  %v722 = vpop.f32.mrf.mxu0
  %v723 = vadd.f32 0.0, %v722
  %v724 = vpop.f32.mrf.mxu0
  %v725 = vpop.f32.mrf.mxu0
  %v726 = vadd.f32 0.0, %v725
  %v727 = vpop.f32.mrf.mxu0
  %728 = vmatprep.mubr.bf16.mxu0 0
  %729 = vmatmul.mubr.bf16.gmra.mxu0 %v673
  %v730 = vpop.f32.mrf.mxu0
  %v731 = vadd.f32 0.0, %v730
  %v732 = vpop.f32.mrf.mxu0
  %v733 = vpop.f32.mrf.mxu0
  %v734 = vadd.f32 0.0, %v733
  %v735 = vpop.f32.mrf.mxu0
  %736 = vmatprep.mubr.bf16.mxu0 0
  %737 = vmatmul.mubr.bf16.gmra.mxu0 %v674
  %v738 = vpop.f32.mrf.mxu0
  %v739 = vadd.f32 0.0, %v738
  %v740 = vpop.f32.mrf.mxu0
  %v741 = vpop.f32.mrf.mxu0
  %v742 = vadd.f32 0.0, %v741
  %v743 = vpop.f32.mrf.mxu0
  %744 = vmatprep.mubr.bf16.mxu0 0
  %745 = vmatmul.mubr.bf16.gmra.mxu0 %v675
  %v746 = vpop.f32.mrf.mxu0
  %v747 = vadd.f32 0.0, %v746
  %v748 = vpop.f32.mrf.mxu0
  %v749 = vpop.f32.mrf.mxu0
  %v750 = vadd.f32 0.0, %v749
  %v751 = vpop.f32.mrf.mxu0
  %752 = vmatprep.mubr.bf16.mxu0 0
  %753 = vmatmul.mubr.bf16.gmra.mxu0 %v676
  %v754 = vpop.f32.mrf.mxu0
  %v755 = vadd.f32 0.0, %v754
  %v756 = vpop.f32.mrf.mxu0
  %v757 = vpop.f32.mrf.mxu0
  %v758 = vadd.f32 0.0, %v757
  %v759 = vpop.f32.mrf.mxu0
  %760 = vmatprep.mubr.bf16.mxu0 0
  %761 = vmatmul.mubr.bf16.gmra.mxu0 %v677
  %v762 = vpop.f32.mrf.mxu0
  %v763 = vadd.f32 0.0, %v762
  %v764 = vpop.f32.mrf.mxu0
  %v765 = vpop.f32.mrf.mxu0
  %v766 = vadd.f32 0.0, %v765
  %v767 = vpop.f32.mrf.mxu0
  %768 = vmatprep.mubr.bf16.mxu0 0
  %769 = vmatmul.mubr.bf16.gmra.mxu0 %v678
  %v770 = vpop.f32.mrf.mxu0
  %v771 = vadd.f32 0.0, %v770
  %v772 = vpop.f32.mrf.mxu0
  %v773 = vpop.f32.mrf.mxu0
  %v774 = vadd.f32 0.0, %v773
  %v775 = vpop.f32.mrf.mxu0
  %776 = vmatprep.mubr.bf16.mxu0 0
  %777 = vmatmul.mubr.bf16.gmra.mxu0 %v679
  %v778 = vpop.f32.mrf.mxu0
  %v779 = vadd.f32 0.0, %v778
  %v780 = vpop.f32.mrf.mxu0
  %v781 = vpop.f32.mrf.mxu0
  %v782 = vadd.f32 0.0, %v781
  %v783 = vpop.f32.mrf.mxu0
  %784 = vdwg.mxu0
  %vm785 = vcmp.gt.f32.partialorder %v723, 0.0
  %vm786 = vcmp.gt.f32.partialorder %v726, 0.0
  %vm787 = vcmp.gt.f32.partialorder %v731, 0.0
  %vm788 = vcmp.gt.f32.partialorder %v734, 0.0
  %vm789 = vcmp.gt.f32.partialorder %v739, 0.0
  %vm790 = vcmp.gt.f32.partialorder %v742, 0.0
  %vm791 = vcmp.gt.f32.partialorder %v747, 0.0
  %vm792 = vcmp.gt.f32.partialorder %v750, 0.0
  %vm793 = vcmp.gt.f32.partialorder %v755, 0.0
  %vm794 = vcmp.gt.f32.partialorder %v758, 0.0
  %vm795 = vcmp.gt.f32.partialorder %v763, 0.0
  %vm796 = vcmp.gt.f32.partialorder %v766, 0.0
  %vm797 = vcmp.gt.f32.partialorder %v771, 0.0
  %vm798 = vcmp.gt.f32.partialorder %v774, 0.0
  %vm799 = vcmp.gt.f32.partialorder %v779, 0.0
  %vm800 = vcmp.gt.f32.partialorder %v782, 0.0
  %v801 = vmin.f32 %v723, 0.0
  %v802 = vmin.f32 %v726, 0.0
  %v803 = vmin.f32 %v731, 0.0
  %v804 = vmin.f32 %v734, 0.0
  %v805 = vmin.f32 %v739, 0.0
  %v806 = vmin.f32 %v742, 0.0
  %v807 = vmin.f32 %v747, 0.0
  %v808 = vmin.f32 %v750, 0.0
  %v809 = vmin.f32 %v755, 0.0
  %v810 = vmin.f32 %v758, 0.0
  %v811 = vmin.f32 %v763, 0.0
  %v812 = vmin.f32 %v766, 0.0
  %v813 = vmin.f32 %v771, 0.0
  %v814 = vmin.f32 %v774, 0.0
  %v815 = vmin.f32 %v779, 0.0
  %v816 = vmin.f32 %v782, 0.0
  %v817 = vmul.f32 %v801, 1.442695
  %v818 = vpow.pop %v817
  %v819 = vmul.f32 %v802, 1.442695
  %v820 = vpow.pop %v819
  %v821 = vmul.f32 %v803, 1.442695
  %v822 = vpow.pop %v821
  %v823 = vmul.f32 %v804, 1.442695
  %v824 = vpow.pop %v823
  %v825 = vmul.f32 %v805, 1.442695
  %v826 = vpow.pop %v825
  %v827 = vmul.f32 %v806, 1.442695
  %v828 = vpow.pop %v827
  %v829 = vmul.f32 %v807, 1.442695
  %v830 = vpow.pop %v829
  %v831 = vmul.f32 %v808, 1.442695
  %v832 = vpow.pop %v831
  %v833 = vmul.f32 %v809, 1.442695
  %v834 = vpow.pop %v833
  %v835 = vmul.f32 %v810, 1.442695
  %v836 = vpow.pop %v835
  %v837 = vmul.f32 %v811, 1.442695
  %v838 = vpow.pop %v837
  %v839 = vmul.f32 %v812, 1.442695
  %v840 = vpow.pop %v839
  %v841 = vmul.f32 %v813, 1.442695
  %v842 = vpow.pop %v841
  %v843 = vmul.f32 %v814, 1.442695
  %v844 = vpow.pop %v843
  %v845 = vmul.f32 %v815, 1.442695
  %v846 = vpow.pop %v845
  %v847 = vmul.f32 %v816, 1.442695
  %v848 = vpow.pop %v847
  %v849 = vsub.f32 %v818, 1.0
  %v850 = vsub.f32 %v820, 1.0
  %v851 = vsub.f32 %v822, 1.0
  %v852 = vsub.f32 %v824, 1.0
  %v853 = vsub.f32 %v826, 1.0
  %v854 = vsub.f32 %v828, 1.0
  %v855 = vsub.f32 %v830, 1.0
  %v856 = vsub.f32 %v832, 1.0
  %v857 = vsub.f32 %v834, 1.0
  %v858 = vsub.f32 %v836, 1.0
  %v859 = vsub.f32 %v838, 1.0
  %v860 = vsub.f32 %v840, 1.0
  %v861 = vsub.f32 %v842, 1.0
  %v862 = vsub.f32 %v844, 1.0
  %v863 = vsub.f32 %v846, 1.0
  %v864 = vsub.f32 %v848, 1.0
  %v865 = vsel %vm785, %v723, %v849
  %v866 = vsel %vm786, %v726, %v850
  %v867 = vsel %vm787, %v731, %v851
  %v868 = vsel %vm788, %v734, %v852
  %v869 = vsel %vm789, %v739, %v853
  %v870 = vsel %vm790, %v742, %v854
  %v871 = vsel %vm791, %v747, %v855
  %v872 = vsel %vm792, %v750, %v856
  %v873 = vsel %vm793, %v755, %v857
  %v874 = vsel %vm794, %v758, %v858
  %v875 = vsel %vm795, %v763, %v859
  %v876 = vsel %vm796, %v766, %v860
  %v877 = vsel %vm797, %v771, %v861
  %v878 = vsel %vm798, %v774, %v862
  %v879 = vsel %vm799, %v779, %v863
  %v880 = vsel %vm800, %v782, %v864
  %v881 = vrot.slane %v89, 1
  %882 = vrot.lane.b32.xlu0 %v160, 96
  %v883 = vpop.permute.xlu0 %882
  %884 = vrot.lane.b32.xlu0 %v163, 96
  %v885 = vpop.permute.xlu0 %884
  %886 = vrot.lane.b32.xlu0 %v168, 96
  %v887 = vpop.permute.xlu0 %886
  %888 = vrot.lane.b32.xlu0 %v171, 96
  %v889 = vpop.permute.xlu0 %888
  %890 = vrot.lane.b32.xlu0 %v176, 96
  %v891 = vpop.permute.xlu0 %890
  %892 = vrot.lane.b32.xlu0 %v179, 96
  %v893 = vpop.permute.xlu0 %892
  %894 = vrot.lane.b32.xlu0 %v184, 96
  %v895 = vpop.permute.xlu0 %894
  %896 = vrot.lane.b32.xlu0 %v187, 96
  %v897 = vpop.permute.xlu0 %896
  %898 = vrot.lane.b32.xlu0 %v192, 96
  %v899 = vpop.permute.xlu0 %898
  %900 = vrot.lane.b32.xlu0 %v195, 96
  %v901 = vpop.permute.xlu0 %900
  %902 = vrot.lane.b32.xlu0 %v200, 96
  %v903 = vpop.permute.xlu0 %902
  %904 = vrot.lane.b32.xlu0 %v203, 96
  %v905 = vpop.permute.xlu0 %904
  %906 = vrot.lane.b32.xlu0 %v208, 96
  %v907 = vpop.permute.xlu0 %906
  %908 = vrot.lane.b32.xlu0 %v211, 96
  %v909 = vpop.permute.xlu0 %908
  %910 = vrot.lane.b32.xlu0 %v216, 96
  %v911 = vpop.permute.xlu0 %910
  %912 = vrot.lane.b32.xlu0 %v219, 96
  %v913 = vpop.permute.xlu0 %912
  %v914 = vsel %vm222, %v881, 0
  %v916 = vsel %vm222, %v883, 0
  %v918 = vsel %vm222, %v885, 0
  %v920 = vsel %vm222, %v887, 0
  %v922 = vsel %vm222, %v889, 0
  %v924 = vsel %vm222, %v891, 0
  %v926 = vsel %vm222, %v893, 0
  %v928 = vsel %vm222, %v895, 0
  %v930 = vsel %vm222, %v897, 0
  %v932 = vsel %vm222, %v899, 0
  %v934 = vsel %vm222, %v901, 0
  %v936 = vsel %vm222, %v903, 0
  %v938 = vsel %vm222, %v905, 0
  %v940 = vsel %vm222, %v907, 0
  %v942 = vsel %vm222, %v909, 0
  %v944 = vsel %vm222, %v911, 0
  %v946 = vsel %vm222, %v913, 0
  %948 = vmatprep.subr.mxu0 0.0
  %949 = vmatpush1.xpose.msra.mxu0 %v946
  %950 = vmatprep.subr.mxu0 0.0
  %951 = vmatpush1.xpose.msra.mxu0 %v944
  %952 = vmatprep.subr.mxu0 0.0
  %953 = vmatpush1.xpose.msra.mxu0 %v942
  %954 = vmatprep.subr.mxu0 0.0
  %955 = vmatpush1.xpose.msra.mxu0 %v940
  %956 = vmatprep.subr.mxu0 0.0
  %957 = vmatpush1.xpose.msra.mxu0 %v938
  %958 = vmatprep.subr.mxu0 0.0
  %959 = vmatpush1.xpose.msra.mxu0 %v936
  %960 = vmatprep.subr.mxu0 0.0
  %961 = vmatpush1.xpose.msra.mxu0 %v934
  %962 = vmatprep.subr.mxu0 0.0
  %963 = vmatpush1.xpose.msra.mxu0 %v932
  %964 = vmatprep.subr.mxu0 0.0
  %965 = vmatpush1.xpose.msra.mxu0 %v930
  %966 = vmatprep.subr.mxu0 0.0
  %967 = vmatpush1.xpose.msra.mxu0 %v928
  %968 = vmatprep.subr.mxu0 0.0
  %969 = vmatpush1.xpose.msra.mxu0 %v926
  %970 = vmatprep.subr.mxu0 0.0
  %971 = vmatpush1.xpose.msra.mxu0 %v924
  %972 = vmatprep.subr.mxu0 0.0
  %973 = vmatpush1.xpose.msra.mxu0 %v922
  %974 = vmatprep.subr.mxu0 0.0
  %975 = vmatpush1.xpose.msra.mxu0 %v920
  %976 = vmatprep.subr.mxu0 0.0
  %977 = vmatpush1.xpose.msra.mxu0 %v918
  %978 = vmatprep.subr.mxu0 0.0
  %979 = vmatpush1.xpose.msra.mxu0 %v916
  %980 = vmatprep.subr.mxu0 0.0
  %981 = vmatpush2.xpose.msra.mxu0 0.0
  %982 = vmatprep.subr.mxu0 0.0
  %983 = vmatpush2.xpose.msra.mxu0 0.0
  %984 = vmatprep.subr.mxu0 0.0
  %985 = vmatpush2.xpose.msra.mxu0 0.0
  %986 = vmatprep.subr.mxu0 0.0
  %987 = vmatpush2.xpose.msra.mxu0 0.0
  %988 = vmatprep.subr.mxu0 0.0
  %989 = vmatpush2.xpose.msra.mxu0 0.0
  %990 = vmatprep.subr.mxu0 0.0
  %991 = vmatpush2.xpose.msra.mxu0 0.0
  %992 = vmatprep.subr.mxu0 0.0
  %993 = vmatpush2.xpose.msra.mxu0 0.0
  %994 = vmatprep.subr.mxu0 0.0
  %995 = vmatpush2.xpose.msra.mxu0 0.0
  %996 = vmatprep.subr.mxu0 0.0
  %997 = vmatpush2.xpose.msra.mxu0 0.0
  %998 = vmatprep.subr.mxu0 0.0
  %999 = vmatpush2.xpose.msra.mxu0 0.0
  %1000 = vmatprep.subr.mxu0 0.0
  %1001 = vmatpush2.xpose.msra.mxu0 0.0
  %1002 = vmatprep.subr.mxu0 0.0
  %1003 = vmatpush2.xpose.msra.mxu0 0.0
  %1004 = vmatprep.subr.mxu0 0.0
  %1005 = vmatpush2.xpose.msra.mxu0 0.0
  %1006 = vmatprep.subr.mxu0 0.0
  %1007 = vmatpush2.xpose.msra.mxu0 0.0
  %1008 = vmatprep.subr.mxu0 0.0
  %1009 = vmatpush2.xpose.msra.mxu0 0.0
  %1010 = vmatprep.subr.mxu0 0.0
  %1011 = vmatpush2.xpose.msra.mxu0 0.0
  %1012 = vmatprep.mubr.f32.mxu0 0.0
  %1013 = vmatmul.mubr.f32.gmra.mxu0 %v914
  %v1014 = vpop.f32.mrf.mxu0
  %v1015 = vadd.f32 0.0, %v1014
  %v1016 = vpop.f32.mrf.mxu0
  %1017 = vdwg.mxu0
  %v1018 = vlaneseq
  %v1019 = vshrl.u32 %v1018, 7
  %v1020 = vsub.s32 1, %v1019
  %v1021 = vrot.slane %v90, %v1020
  %1023 = vrot.lane.b32.xlu0 %v1021, 32
  %v1024 = vpop.permute.xlu0 %1023
  %v1026 = vmul.f32 %v160, %v1024
  %v1027 = vmul.f32 %v163, %v1024
  %v1028 = vmul.f32 %v168, %v1024
  %v1029 = vmul.f32 %v171, %v1024
  %v1030 = vmul.f32 %v176, %v1024
  %v1031 = vmul.f32 %v179, %v1024
  %v1032 = vmul.f32 %v184, %v1024
  %v1033 = vmul.f32 %v187, %v1024
  %v1034 = vmul.f32 %v192, %v1024
  %v1035 = vmul.f32 %v195, %v1024
  %v1036 = vmul.f32 %v200, %v1024
  %v1037 = vmul.f32 %v203, %v1024
  %v1038 = vmul.f32 %v208, %v1024
  %v1039 = vmul.f32 %v211, %v1024
  %v1040 = vmul.f32 %v216, %v1024
  %v1041 = vmul.f32 %v219, %v1024
  %1058 = vrot.lane.b32.xlu0 %v1026, 96
  %v1059 = vpop.permute.xlu0 %1058
  %1060 = vrot.lane.b32.xlu0 %v1027, 96
  %v1061 = vpop.permute.xlu0 %1060
  %1062 = vrot.lane.b32.xlu0 %v1028, 96
  %v1063 = vpop.permute.xlu0 %1062
  %1064 = vrot.lane.b32.xlu0 %v1029, 96
  %v1065 = vpop.permute.xlu0 %1064
  %1066 = vrot.lane.b32.xlu0 %v1030, 96
  %v1067 = vpop.permute.xlu0 %1066
  %1068 = vrot.lane.b32.xlu0 %v1031, 96
  %v1069 = vpop.permute.xlu0 %1068
  %1070 = vrot.lane.b32.xlu0 %v1032, 96
  %v1071 = vpop.permute.xlu0 %1070
  %1072 = vrot.lane.b32.xlu0 %v1033, 96
  %v1073 = vpop.permute.xlu0 %1072
  %1074 = vrot.lane.b32.xlu0 %v1034, 96
  %v1075 = vpop.permute.xlu0 %1074
  %1076 = vrot.lane.b32.xlu0 %v1035, 96
  %v1077 = vpop.permute.xlu0 %1076
  %1078 = vrot.lane.b32.xlu0 %v1036, 96
  %v1079 = vpop.permute.xlu0 %1078
  %1080 = vrot.lane.b32.xlu0 %v1037, 96
  %v1081 = vpop.permute.xlu0 %1080
  %1082 = vrot.lane.b32.xlu0 %v1038, 96
  %v1083 = vpop.permute.xlu0 %1082
  %1084 = vrot.lane.b32.xlu0 %v1039, 96
  %v1085 = vpop.permute.xlu0 %1084
  %1086 = vrot.lane.b32.xlu0 %v1040, 96
  %v1087 = vpop.permute.xlu0 %1086
  %1088 = vrot.lane.b32.xlu0 %v1041, 96
  %v1089 = vpop.permute.xlu0 %1088
  %v1106 = vsel %vm222, %v1059, 0.0
  %1107 = vadd.xlane.f32.xlu0 %v1106
  %v1108 = vpop.xlane.xlu0 %1107
  %v1109 = vsel %vm222, %v1061, 0.0
  %1110 = vadd.xlane.f32.xlu0 %v1109
  %v1111 = vpop.xlane.xlu0 %1110
  %v1112 = vsel %vm222, %v1063, 0.0
  %1113 = vadd.xlane.f32.xlu0 %v1112
  %v1114 = vpop.xlane.xlu0 %1113
  %v1115 = vsel %vm222, %v1065, 0.0
  %1116 = vadd.xlane.f32.xlu0 %v1115
  %v1117 = vpop.xlane.xlu0 %1116
  %v1118 = vsel %vm222, %v1067, 0.0
  %1119 = vadd.xlane.f32.xlu0 %v1118
  %v1120 = vpop.xlane.xlu0 %1119
  %v1121 = vsel %vm222, %v1069, 0.0
  %1122 = vadd.xlane.f32.xlu0 %v1121
  %v1123 = vpop.xlane.xlu0 %1122
  %v1124 = vsel %vm222, %v1071, 0.0
  %1125 = vadd.xlane.f32.xlu0 %v1124
  %v1126 = vpop.xlane.xlu0 %1125
  %v1127 = vsel %vm222, %v1073, 0.0
  %1128 = vadd.xlane.f32.xlu0 %v1127
  %v1129 = vpop.xlane.xlu0 %1128
  %v1130 = vsel %vm222, %v1075, 0.0
  %1131 = vadd.xlane.f32.xlu0 %v1130
  %v1132 = vpop.xlane.xlu0 %1131
  %v1133 = vsel %vm222, %v1077, 0.0
  %1134 = vadd.xlane.f32.xlu0 %v1133
  %v1135 = vpop.xlane.xlu0 %1134
  %v1136 = vsel %vm222, %v1079, 0.0
  %1137 = vadd.xlane.f32.xlu0 %v1136
  %v1138 = vpop.xlane.xlu0 %1137
  %v1139 = vsel %vm222, %v1081, 0.0
  %1140 = vadd.xlane.f32.xlu0 %v1139
  %v1141 = vpop.xlane.xlu0 %1140
  %v1142 = vsel %vm222, %v1083, 0.0
  %1143 = vadd.xlane.f32.xlu0 %v1142
  %v1144 = vpop.xlane.xlu0 %1143
  %v1145 = vsel %vm222, %v1085, 0.0
  %1146 = vadd.xlane.f32.xlu0 %v1145
  %v1147 = vpop.xlane.xlu0 %1146
  %v1148 = vsel %vm222, %v1087, 0.0
  %1149 = vadd.xlane.f32.xlu0 %v1148
  %v1150 = vpop.xlane.xlu0 %1149
  %v1151 = vsel %vm222, %v1089, 0.0
  %1152 = vadd.xlane.f32.xlu0 %v1151
  %v1153 = vpop.xlane.xlu0 %1152
  %v1154 = vlaneseq
  %v1155 = vshrl.u32 %v1154, 7
  %v1156 = vsub.s32 0, %v1155
  %v1157 = vrot.slane %v1015, %v1156
  %v1158 = vadd.f32 %v1108, %v1157
  %v1159 = vadd.f32 %v1111, %v1157
  %v1160 = vadd.f32 %v1114, %v1157
  %v1161 = vadd.f32 %v1117, %v1157
  %v1162 = vadd.f32 %v1120, %v1157
  %v1163 = vadd.f32 %v1123, %v1157
  %v1164 = vadd.f32 %v1126, %v1157
  %v1165 = vadd.f32 %v1129, %v1157
  %v1166 = vadd.f32 %v1132, %v1157
  %v1167 = vadd.f32 %v1135, %v1157
  %v1168 = vadd.f32 %v1138, %v1157
  %v1169 = vadd.f32 %v1141, %v1157
  %v1170 = vadd.f32 %v1144, %v1157
  %v1171 = vadd.f32 %v1147, %v1157
  %v1172 = vadd.f32 %v1150, %v1157
  %v1173 = vadd.f32 %v1153, %v1157
  %v1174 = vmul.f32 %v1158, 0.2
  %v1175 = vmul.f32 %v1159, 0.2
  %v1176 = vmul.f32 %v1160, 0.2
  %v1177 = vmul.f32 %v1161, 0.2
  %v1178 = vmul.f32 %v1162, 0.2
  %v1179 = vmul.f32 %v1163, 0.2
  %v1180 = vmul.f32 %v1164, 0.2
  %v1181 = vmul.f32 %v1165, 0.2
  %v1182 = vmul.f32 %v1166, 0.2
  %v1183 = vmul.f32 %v1167, 0.2
  %v1184 = vmul.f32 %v1168, 0.2
  %v1185 = vmul.f32 %v1169, 0.2
  %v1186 = vmul.f32 %v1170, 0.2
  %v1187 = vmul.f32 %v1171, 0.2
  %v1188 = vmul.f32 %v1172, 0.2
  %v1189 = vmul.f32 %v1173, 0.2
  %v1190 = vmax.f32 %v1158, %v1174
  %v1191 = vmax.f32 %v1159, %v1175
  %v1192 = vmax.f32 %v1160, %v1176
  %v1193 = vmax.f32 %v1161, %v1177
  %v1194 = vmax.f32 %v1162, %v1178
  %v1195 = vmax.f32 %v1163, %v1179
  %v1196 = vmax.f32 %v1164, %v1180
  %v1197 = vmax.f32 %v1165, %v1181
  %v1198 = vmax.f32 %v1166, %v1182
  %v1199 = vmax.f32 %v1167, %v1183
  %v1200 = vmax.f32 %v1168, %v1184
  %v1201 = vmax.f32 %v1169, %v1185
  %v1202 = vmax.f32 %v1170, %v1186
  %v1203 = vmax.f32 %v1171, %v1187
  %v1204 = vmax.f32 %v1172, %v1188
  %v1205 = vmax.f32 %v1173, %v1189
  %v1206 = vsel %vm55, %v1190, -1e+30
  %v1207 = vsel %vm56, %v1191, -1e+30
  %v1208 = vsel %vm57, %v1192, -1e+30
  %v1209 = vsel %vm58, %v1193, -1e+30
  %v1210 = vsel %vm59, %v1194, -1e+30
  %v1211 = vsel %vm60, %v1195, -1e+30
  %v1212 = vsel %vm61, %v1196, -1e+30
  %v1213 = vsel %vm62, %v1197, -1e+30
  %v1214 = vsel %vm63, %v1198, -1e+30
  %v1215 = vsel %vm64, %v1199, -1e+30
  %v1216 = vsel %vm65, %v1200, -1e+30
  %v1217 = vsel %vm66, %v1201, -1e+30
  %v1218 = vsel %vm67, %v1202, -1e+30
  %v1219 = vsel %vm68, %v1203, -1e+30
  %v1220 = vsel %vm69, %v1204, -1e+30
  %v1221 = vsel %vm70, %v1205, -1e+30
  %1222 = vmax.xlane.f32.xlu0 %v1206
  %v1223 = vpop.xlane.xlu0 %1222
  %1224 = vmax.xlane.f32.xlu0 %v1207
  %v1225 = vpop.xlane.xlu0 %1224
  %1226 = vmax.xlane.f32.xlu0 %v1208
  %v1227 = vpop.xlane.xlu0 %1226
  %1228 = vmax.xlane.f32.xlu0 %v1209
  %v1229 = vpop.xlane.xlu0 %1228
  %1230 = vmax.xlane.f32.xlu0 %v1210
  %v1231 = vpop.xlane.xlu0 %1230
  %1232 = vmax.xlane.f32.xlu0 %v1211
  %v1233 = vpop.xlane.xlu0 %1232
  %1234 = vmax.xlane.f32.xlu0 %v1212
  %v1235 = vpop.xlane.xlu0 %1234
  %1236 = vmax.xlane.f32.xlu0 %v1213
  %v1237 = vpop.xlane.xlu0 %1236
  %1238 = vmax.xlane.f32.xlu0 %v1214
  %v1239 = vpop.xlane.xlu0 %1238
  %1240 = vmax.xlane.f32.xlu0 %v1215
  %v1241 = vpop.xlane.xlu0 %1240
  %1242 = vmax.xlane.f32.xlu0 %v1216
  %v1243 = vpop.xlane.xlu0 %1242
  %1244 = vmax.xlane.f32.xlu0 %v1217
  %v1245 = vpop.xlane.xlu0 %1244
  %1246 = vmax.xlane.f32.xlu0 %v1218
  %v1247 = vpop.xlane.xlu0 %1246
  %1248 = vmax.xlane.f32.xlu0 %v1219
  %v1249 = vpop.xlane.xlu0 %1248
  %1250 = vmax.xlane.f32.xlu0 %v1220
  %v1251 = vpop.xlane.xlu0 %1250
  %1252 = vmax.xlane.f32.xlu0 %v1221
  %v1253 = vpop.xlane.xlu0 %1252
  %v1254 = vsub.f32 %v1206, %v1223
  %v1255 = vsub.f32 %v1207, %v1225
  %v1256 = vsub.f32 %v1208, %v1227
  %v1257 = vsub.f32 %v1209, %v1229
  %v1258 = vsub.f32 %v1210, %v1231
  %v1259 = vsub.f32 %v1211, %v1233
  %v1260 = vsub.f32 %v1212, %v1235
  %v1261 = vsub.f32 %v1213, %v1237
  %v1262 = vsub.f32 %v1214, %v1239
  %v1263 = vsub.f32 %v1215, %v1241
  %v1264 = vsub.f32 %v1216, %v1243
  %v1265 = vsub.f32 %v1217, %v1245
  %v1266 = vsub.f32 %v1218, %v1247
  %v1267 = vsub.f32 %v1219, %v1249
  %v1268 = vsub.f32 %v1220, %v1251
  %v1269 = vsub.f32 %v1221, %v1253
  %v1270 = vmul.f32 %v1254, 1.442695
  %v1271 = vpow.pop %v1270
  %v1272 = vmul.f32 %v1255, 1.442695
  %v1273 = vpow.pop %v1272
  %v1274 = vmul.f32 %v1256, 1.442695
  %v1275 = vpow.pop %v1274
  %v1276 = vmul.f32 %v1257, 1.442695
  %v1277 = vpow.pop %v1276
  %v1278 = vmul.f32 %v1258, 1.442695
  %v1279 = vpow.pop %v1278
  %v1280 = vmul.f32 %v1259, 1.442695
  %v1281 = vpow.pop %v1280
  %v1282 = vmul.f32 %v1260, 1.442695
  %v1283 = vpow.pop %v1282
  %v1284 = vmul.f32 %v1261, 1.442695
  %v1285 = vpow.pop %v1284
  %v1286 = vmul.f32 %v1262, 1.442695
  %v1287 = vpow.pop %v1286
  %v1288 = vmul.f32 %v1263, 1.442695
  %v1289 = vpow.pop %v1288
  %v1290 = vmul.f32 %v1264, 1.442695
  %v1291 = vpow.pop %v1290
  %v1292 = vmul.f32 %v1265, 1.442695
  %v1293 = vpow.pop %v1292
  %v1294 = vmul.f32 %v1266, 1.442695
  %v1295 = vpow.pop %v1294
  %v1296 = vmul.f32 %v1267, 1.442695
  %v1297 = vpow.pop %v1296
  %v1298 = vmul.f32 %v1268, 1.442695
  %v1299 = vpow.pop %v1298
  %v1300 = vmul.f32 %v1269, 1.442695
  %v1301 = vpow.pop %v1300
  %v1302 = vsel %vm55, %v1271, 0.0
  %v1303 = vsel %vm56, %v1273, 0.0
  %v1304 = vsel %vm57, %v1275, 0.0
  %v1305 = vsel %vm58, %v1277, 0.0
  %v1306 = vsel %vm59, %v1279, 0.0
  %v1307 = vsel %vm60, %v1281, 0.0
  %v1308 = vsel %vm61, %v1283, 0.0
  %v1309 = vsel %vm62, %v1285, 0.0
  %v1310 = vsel %vm63, %v1287, 0.0
  %v1311 = vsel %vm64, %v1289, 0.0
  %v1312 = vsel %vm65, %v1291, 0.0
  %v1313 = vsel %vm66, %v1293, 0.0
  %v1314 = vsel %vm67, %v1295, 0.0
  %v1315 = vsel %vm68, %v1297, 0.0
  %v1316 = vsel %vm69, %v1299, 0.0
  %v1317 = vsel %vm70, %v1301, 0.0
  %1318 = vadd.xlane.f32.xlu0 %v1302
  %v1319 = vpop.xlane.xlu0 %1318
  %1320 = vadd.xlane.f32.xlu0 %v1303
  %v1321 = vpop.xlane.xlu0 %1320
  %1322 = vadd.xlane.f32.xlu0 %v1304
  %v1323 = vpop.xlane.xlu0 %1322
  %1324 = vadd.xlane.f32.xlu0 %v1305
  %v1325 = vpop.xlane.xlu0 %1324
  %1326 = vadd.xlane.f32.xlu0 %v1306
  %v1327 = vpop.xlane.xlu0 %1326
  %1328 = vadd.xlane.f32.xlu0 %v1307
  %v1329 = vpop.xlane.xlu0 %1328
  %1330 = vadd.xlane.f32.xlu0 %v1308
  %v1331 = vpop.xlane.xlu0 %1330
  %1332 = vadd.xlane.f32.xlu0 %v1309
  %v1333 = vpop.xlane.xlu0 %1332
  %1334 = vadd.xlane.f32.xlu0 %v1310
  %v1335 = vpop.xlane.xlu0 %1334
  %1336 = vadd.xlane.f32.xlu0 %v1311
  %v1337 = vpop.xlane.xlu0 %1336
  %1338 = vadd.xlane.f32.xlu0 %v1312
  %v1339 = vpop.xlane.xlu0 %1338
  %1340 = vadd.xlane.f32.xlu0 %v1313
  %v1341 = vpop.xlane.xlu0 %1340
  %1342 = vadd.xlane.f32.xlu0 %v1314
  %v1343 = vpop.xlane.xlu0 %1342
  %1344 = vadd.xlane.f32.xlu0 %v1315
  %v1345 = vpop.xlane.xlu0 %1344
  %1346 = vadd.xlane.f32.xlu0 %v1316
  %v1347 = vpop.xlane.xlu0 %1346
  %1348 = vadd.xlane.f32.xlu0 %v1317
  %v1349 = vpop.xlane.xlu0 %1348
  %vm1350 = vcmp.le.f32.partialorder %v1319, 0.0
  %vm1351 = vcmp.le.f32.partialorder %v1321, 0.0
  %vm1352 = vcmp.le.f32.partialorder %v1323, 0.0
  %vm1353 = vcmp.le.f32.partialorder %v1325, 0.0
  %vm1354 = vcmp.le.f32.partialorder %v1327, 0.0
  %vm1355 = vcmp.le.f32.partialorder %v1329, 0.0
  %vm1356 = vcmp.le.f32.partialorder %v1331, 0.0
  %vm1357 = vcmp.le.f32.partialorder %v1333, 0.0
  %vm1358 = vcmp.le.f32.partialorder %v1335, 0.0
  %vm1359 = vcmp.le.f32.partialorder %v1337, 0.0
  %vm1360 = vcmp.le.f32.partialorder %v1339, 0.0
  %vm1361 = vcmp.le.f32.partialorder %v1341, 0.0
  %vm1362 = vcmp.le.f32.partialorder %v1343, 0.0
  %vm1363 = vcmp.le.f32.partialorder %v1345, 0.0
  %vm1364 = vcmp.le.f32.partialorder %v1347, 0.0
  %vm1365 = vcmp.le.f32.partialorder %v1349, 0.0
  %v1366 = vsel %vm1350, 1.0, %v1319
  %v1367 = vsel %vm1351, 1.0, %v1321
  %v1368 = vsel %vm1352, 1.0, %v1323
  %v1369 = vsel %vm1353, 1.0, %v1325
  %v1370 = vsel %vm1354, 1.0, %v1327
  %v1371 = vsel %vm1355, 1.0, %v1329
  %v1372 = vsel %vm1356, 1.0, %v1331
  %v1373 = vsel %vm1357, 1.0, %v1333
  %v1374 = vsel %vm1358, 1.0, %v1335
  %v1375 = vsel %vm1359, 1.0, %v1337
  %v1376 = vsel %vm1360, 1.0, %v1339
  %v1377 = vsel %vm1361, 1.0, %v1341
  %v1378 = vsel %vm1362, 1.0, %v1343
  %v1379 = vsel %vm1363, 1.0, %v1345
  %v1380 = vsel %vm1364, 1.0, %v1347
  %v1381 = vsel %vm1365, 1.0, %v1349
  %v1382 = vrcp.pop %v1366
  %v1383 = vrcp.pop %v1367
  %v1384 = vrcp.pop %v1368
  %v1385 = vrcp.pop %v1369
  %v1386 = vrcp.pop %v1370
  %v1387 = vrcp.pop %v1371
  %v1388 = vrcp.pop %v1372
  %v1389 = vrcp.pop %v1373
  %v1390 = vrcp.pop %v1374
  %v1391 = vrcp.pop %v1375
  %v1392 = vrcp.pop %v1376
  %v1393 = vrcp.pop %v1377
  %v1394 = vrcp.pop %v1378
  %v1395 = vrcp.pop %v1379
  %v1396 = vrcp.pop %v1380
  %v1397 = vrcp.pop %v1381
  %v1398 = vmul.f32 %v1302, %v1382
  %v1399 = vmul.f32 %v1303, %v1383
  %v1400 = vmul.f32 %v1304, %v1384
  %v1401 = vmul.f32 %v1305, %v1385
  %v1402 = vmul.f32 %v1306, %v1386
  %v1403 = vmul.f32 %v1307, %v1387
  %v1404 = vmul.f32 %v1308, %v1388
  %v1405 = vmul.f32 %v1309, %v1389
  %v1406 = vmul.f32 %v1310, %v1390
  %v1407 = vmul.f32 %v1311, %v1391
  %v1408 = vmul.f32 %v1312, %v1392
  %v1409 = vmul.f32 %v1313, %v1393
  %v1410 = vmul.f32 %v1314, %v1394
  %v1411 = vmul.f32 %v1315, %v1395
  %v1412 = vmul.f32 %v1316, %v1396
  %v1413 = vmul.f32 %v1317, %v1397
  %v1414 = vpack.c.bf16 %v1399, %v1398
  %v1415 = vpack.c.bf16 %v1401, %v1400
  %v1416 = vpack.c.bf16 %v1403, %v1402
  %v1417 = vpack.c.bf16 %v1405, %v1404
  %v1418 = vpack.c.bf16 %v1407, %v1406
  %v1419 = vpack.c.bf16 %v1409, %v1408
  %v1420 = vpack.c.bf16 %v1411, %v1410
  %v1421 = vpack.c.bf16 %v1413, %v1412
  %1430 = vrot.lane.b32.xlu0 %v680, 96
  %v1431 = vpop.permute.xlu0 %1430
  %1432 = vrot.lane.b32.xlu0 %v681, 96
  %v1433 = vpop.permute.xlu0 %1432
  %1434 = vrot.lane.b32.xlu0 %v682, 96
  %v1435 = vpop.permute.xlu0 %1434
  %1436 = vrot.lane.b32.xlu0 %v683, 96
  %v1437 = vpop.permute.xlu0 %1436
  %1438 = vrot.lane.b32.xlu0 %v684, 96
  %v1439 = vpop.permute.xlu0 %1438
  %1440 = vrot.lane.b32.xlu0 %v685, 96
  %v1441 = vpop.permute.xlu0 %1440
  %1442 = vrot.lane.b32.xlu0 %v686, 96
  %v1443 = vpop.permute.xlu0 %1442
  %1444 = vrot.lane.b32.xlu0 %v687, 96
  %v1445 = vpop.permute.xlu0 %1444
  %1454 = vmatprep.subr.bf16.mxu0 0
  %1455 = vmatpush1.bf16.msra.mxu0 %v1445
  %1456 = vmatprep.subr.bf16.mxu0 0
  %1457 = vmatpush1.bf16.msra.mxu0 %v1443
  %1458 = vmatprep.subr.bf16.mxu0 0
  %1459 = vmatpush1.bf16.msra.mxu0 %v1441
  %1460 = vmatprep.subr.bf16.mxu0 0
  %1461 = vmatpush1.bf16.msra.mxu0 %v1439
  %1462 = vmatprep.subr.bf16.mxu0 0
  %1463 = vmatpush1.bf16.msra.mxu0 %v1437
  %1464 = vmatprep.subr.bf16.mxu0 0
  %1465 = vmatpush1.bf16.msra.mxu0 %v1435
  %1466 = vmatprep.subr.bf16.mxu0 0
  %1467 = vmatpush1.bf16.msra.mxu0 %v1433
  %1468 = vmatprep.subr.bf16.mxu0 0
  %1469 = vmatpush1.bf16.msra.mxu0 %v1431
  %1470 = vmatprep.subr.bf16.mxu0 0
  %1471 = vmatpush2.bf16.msra.mxu0 0
  %1472 = vmatprep.subr.bf16.mxu0 0
  %1473 = vmatpush2.bf16.msra.mxu0 0
  %1474 = vmatprep.subr.bf16.mxu0 0
  %1475 = vmatpush2.bf16.msra.mxu0 0
  %1476 = vmatprep.subr.bf16.mxu0 0
  %1477 = vmatpush2.bf16.msra.mxu0 0
  %1478 = vmatprep.subr.bf16.mxu0 0
  %1479 = vmatpush2.bf16.msra.mxu0 0
  %1480 = vmatprep.subr.bf16.mxu0 0
  %1481 = vmatpush2.bf16.msra.mxu0 0
  %1482 = vmatprep.subr.bf16.mxu0 0
  %1483 = vmatpush2.bf16.msra.mxu0 0
  %1484 = vmatprep.subr.bf16.mxu0 0
  %1485 = vmatpush2.bf16.msra.mxu0 0
  %1486 = vmatprep.mubr.bf16.mxu0 0
  %1487 = vmatmul.mubr.bf16.gmra.mxu0 %v1414
  %v1488 = vpop.f32.mrf.mxu0
  %v1489 = vadd.f32 0.0, %v1488
  %v1490 = vpop.f32.mrf.mxu0
  %v1491 = vpop.f32.mrf.mxu0
  %v1492 = vadd.f32 0.0, %v1491
  %v1493 = vpop.f32.mrf.mxu0
  %1494 = vmatprep.mubr.bf16.mxu0 0
  %1495 = vmatmul.mubr.bf16.gmra.mxu0 %v1415
  %v1496 = vpop.f32.mrf.mxu0
  %v1497 = vadd.f32 0.0, %v1496
  %v1498 = vpop.f32.mrf.mxu0
  %v1499 = vpop.f32.mrf.mxu0
  %v1500 = vadd.f32 0.0, %v1499
  %v1501 = vpop.f32.mrf.mxu0
  %1502 = vmatprep.mubr.bf16.mxu0 0
  %1503 = vmatmul.mubr.bf16.gmra.mxu0 %v1416
  %v1504 = vpop.f32.mrf.mxu0
  %v1505 = vadd.f32 0.0, %v1504
  %v1506 = vpop.f32.mrf.mxu0
  %v1507 = vpop.f32.mrf.mxu0
  %v1508 = vadd.f32 0.0, %v1507
  %v1509 = vpop.f32.mrf.mxu0
  %1510 = vmatprep.mubr.bf16.mxu0 0
  %1511 = vmatmul.mubr.bf16.gmra.mxu0 %v1417
  %v1512 = vpop.f32.mrf.mxu0
  %v1513 = vadd.f32 0.0, %v1512
  %v1514 = vpop.f32.mrf.mxu0
  %v1515 = vpop.f32.mrf.mxu0
  %v1516 = vadd.f32 0.0, %v1515
  %v1517 = vpop.f32.mrf.mxu0
  %1518 = vmatprep.mubr.bf16.mxu0 0
  %1519 = vmatmul.mubr.bf16.gmra.mxu0 %v1418
  %v1520 = vpop.f32.mrf.mxu0
  %v1521 = vadd.f32 0.0, %v1520
  %v1522 = vpop.f32.mrf.mxu0
  %v1523 = vpop.f32.mrf.mxu0
  %v1524 = vadd.f32 0.0, %v1523
  %v1525 = vpop.f32.mrf.mxu0
  %1526 = vmatprep.mubr.bf16.mxu0 0
  %1527 = vmatmul.mubr.bf16.gmra.mxu0 %v1419
  %v1528 = vpop.f32.mrf.mxu0
  %v1529 = vadd.f32 0.0, %v1528
  %v1530 = vpop.f32.mrf.mxu0
  %v1531 = vpop.f32.mrf.mxu0
  %v1532 = vadd.f32 0.0, %v1531
  %v1533 = vpop.f32.mrf.mxu0
  %1534 = vmatprep.mubr.bf16.mxu0 0
  %1535 = vmatmul.mubr.bf16.gmra.mxu0 %v1420
  %v1536 = vpop.f32.mrf.mxu0
  %v1537 = vadd.f32 0.0, %v1536
  %v1538 = vpop.f32.mrf.mxu0
  %v1539 = vpop.f32.mrf.mxu0
  %v1540 = vadd.f32 0.0, %v1539
  %v1541 = vpop.f32.mrf.mxu0
  %1542 = vmatprep.mubr.bf16.mxu0 0
  %1543 = vmatmul.mubr.bf16.gmra.mxu0 %v1421
  %v1544 = vpop.f32.mrf.mxu0
  %v1545 = vadd.f32 0.0, %v1544
  %v1546 = vpop.f32.mrf.mxu0
  %v1547 = vpop.f32.mrf.mxu0
  %v1548 = vadd.f32 0.0, %v1547
  %v1549 = vpop.f32.mrf.mxu0
  %1550 = vdwg.mxu0
  %vm1551 = vcmp.gt.f32.partialorder %v1489, 0.0
  %vm1552 = vcmp.gt.f32.partialorder %v1492, 0.0
  %vm1553 = vcmp.gt.f32.partialorder %v1497, 0.0
  %vm1554 = vcmp.gt.f32.partialorder %v1500, 0.0
  %vm1555 = vcmp.gt.f32.partialorder %v1505, 0.0
  %vm1556 = vcmp.gt.f32.partialorder %v1508, 0.0
  %vm1557 = vcmp.gt.f32.partialorder %v1513, 0.0
  %vm1558 = vcmp.gt.f32.partialorder %v1516, 0.0
  %vm1559 = vcmp.gt.f32.partialorder %v1521, 0.0
  %vm1560 = vcmp.gt.f32.partialorder %v1524, 0.0
  %vm1561 = vcmp.gt.f32.partialorder %v1529, 0.0
  %vm1562 = vcmp.gt.f32.partialorder %v1532, 0.0
  %vm1563 = vcmp.gt.f32.partialorder %v1537, 0.0
  %vm1564 = vcmp.gt.f32.partialorder %v1540, 0.0
  %vm1565 = vcmp.gt.f32.partialorder %v1545, 0.0
  %vm1566 = vcmp.gt.f32.partialorder %v1548, 0.0
  %v1567 = vmin.f32 %v1489, 0.0
  %v1568 = vmin.f32 %v1492, 0.0
  %v1569 = vmin.f32 %v1497, 0.0
  %v1570 = vmin.f32 %v1500, 0.0
  %v1571 = vmin.f32 %v1505, 0.0
  %v1572 = vmin.f32 %v1508, 0.0
  %v1573 = vmin.f32 %v1513, 0.0
  %v1574 = vmin.f32 %v1516, 0.0
  %v1575 = vmin.f32 %v1521, 0.0
  %v1576 = vmin.f32 %v1524, 0.0
  %v1577 = vmin.f32 %v1529, 0.0
  %v1578 = vmin.f32 %v1532, 0.0
  %v1579 = vmin.f32 %v1537, 0.0
  %v1580 = vmin.f32 %v1540, 0.0
  %v1581 = vmin.f32 %v1545, 0.0
  %v1582 = vmin.f32 %v1548, 0.0
  %v1583 = vmul.f32 %v1567, 1.442695
  %v1584 = vpow.pop %v1583
  %v1585 = vmul.f32 %v1568, 1.442695
  %v1586 = vpow.pop %v1585
  %v1587 = vmul.f32 %v1569, 1.442695
  %v1588 = vpow.pop %v1587
  %v1589 = vmul.f32 %v1570, 1.442695
  %v1590 = vpow.pop %v1589
  %v1591 = vmul.f32 %v1571, 1.442695
  %v1592 = vpow.pop %v1591
  %v1593 = vmul.f32 %v1572, 1.442695
  %v1594 = vpow.pop %v1593
  %v1595 = vmul.f32 %v1573, 1.442695
  %v1596 = vpow.pop %v1595
  %v1597 = vmul.f32 %v1574, 1.442695
  %v1598 = vpow.pop %v1597
  %v1599 = vmul.f32 %v1575, 1.442695
  %v1600 = vpow.pop %v1599
  %v1601 = vmul.f32 %v1576, 1.442695
  %v1602 = vpow.pop %v1601
  %v1603 = vmul.f32 %v1577, 1.442695
  %v1604 = vpow.pop %v1603
  %v1605 = vmul.f32 %v1578, 1.442695
  %v1606 = vpow.pop %v1605
  %v1607 = vmul.f32 %v1579, 1.442695
  %v1608 = vpow.pop %v1607
  %v1609 = vmul.f32 %v1580, 1.442695
  %v1610 = vpow.pop %v1609
  %v1611 = vmul.f32 %v1581, 1.442695
  %v1612 = vpow.pop %v1611
  %v1613 = vmul.f32 %v1582, 1.442695
  %v1614 = vpow.pop %v1613
  %v1615 = vsub.f32 %v1584, 1.0
  %v1616 = vsub.f32 %v1586, 1.0
  %v1617 = vsub.f32 %v1588, 1.0
  %v1618 = vsub.f32 %v1590, 1.0
  %v1619 = vsub.f32 %v1592, 1.0
  %v1620 = vsub.f32 %v1594, 1.0
  %v1621 = vsub.f32 %v1596, 1.0
  %v1622 = vsub.f32 %v1598, 1.0
  %v1623 = vsub.f32 %v1600, 1.0
  %v1624 = vsub.f32 %v1602, 1.0
  %v1625 = vsub.f32 %v1604, 1.0
  %v1626 = vsub.f32 %v1606, 1.0
  %v1627 = vsub.f32 %v1608, 1.0
  %v1628 = vsub.f32 %v1610, 1.0
  %v1629 = vsub.f32 %v1612, 1.0
  %v1630 = vsub.f32 %v1614, 1.0
  %v1631 = vsel %vm1551, %v1489, %v1615
  %v1632 = vsel %vm1552, %v1492, %v1616
  %v1633 = vsel %vm1553, %v1497, %v1617
  %v1634 = vsel %vm1554, %v1500, %v1618
  %v1635 = vsel %vm1555, %v1505, %v1619
  %v1636 = vsel %vm1556, %v1508, %v1620
  %v1637 = vsel %vm1557, %v1513, %v1621
  %v1638 = vsel %vm1558, %v1516, %v1622
  %v1639 = vsel %vm1559, %v1521, %v1623
  %v1640 = vsel %vm1560, %v1524, %v1624
  %v1641 = vsel %vm1561, %v1529, %v1625
  %v1642 = vsel %vm1562, %v1532, %v1626
  %v1643 = vsel %vm1563, %v1537, %v1627
  %v1644 = vsel %vm1564, %v1540, %v1628
  %v1645 = vsel %vm1565, %v1545, %v1629
  %v1646 = vsel %vm1566, %v1548, %v1630
  %1663 = vrot.lane.b32.xlu0 %v1631, 32
  %v1664 = vpop.permute.xlu0 %1663
  %1665 = vrot.lane.b32.xlu0 %v1632, 32
  %v1666 = vpop.permute.xlu0 %1665
  %1667 = vrot.lane.b32.xlu0 %v1633, 32
  %v1668 = vpop.permute.xlu0 %1667
  %1669 = vrot.lane.b32.xlu0 %v1634, 32
  %v1670 = vpop.permute.xlu0 %1669
  %1671 = vrot.lane.b32.xlu0 %v1635, 32
  %v1672 = vpop.permute.xlu0 %1671
  %1673 = vrot.lane.b32.xlu0 %v1636, 32
  %v1674 = vpop.permute.xlu0 %1673
  %1675 = vrot.lane.b32.xlu0 %v1637, 32
  %v1676 = vpop.permute.xlu0 %1675
  %1677 = vrot.lane.b32.xlu0 %v1638, 32
  %v1678 = vpop.permute.xlu0 %1677
  %1679 = vrot.lane.b32.xlu0 %v1639, 32
  %v1680 = vpop.permute.xlu0 %1679
  %1681 = vrot.lane.b32.xlu0 %v1640, 32
  %v1682 = vpop.permute.xlu0 %1681
  %1683 = vrot.lane.b32.xlu0 %v1641, 32
  %v1684 = vpop.permute.xlu0 %1683
  %1685 = vrot.lane.b32.xlu0 %v1642, 32
  %v1686 = vpop.permute.xlu0 %1685
  %1687 = vrot.lane.b32.xlu0 %v1643, 32
  %v1688 = vpop.permute.xlu0 %1687
  %1689 = vrot.lane.b32.xlu0 %v1644, 32
  %v1690 = vpop.permute.xlu0 %1689
  %1691 = vrot.lane.b32.xlu0 %v1645, 32
  %v1692 = vpop.permute.xlu0 %1691
  %1693 = vrot.lane.b32.xlu0 %v1646, 32
  %v1694 = vpop.permute.xlu0 %1693
  %v1711 = vsel %vm222, %v865, %v1664
  %v1712 = vsel %vm222, %v866, %v1666
  %v1713 = vsel %vm222, %v867, %v1668
  %v1714 = vsel %vm222, %v868, %v1670
  %v1715 = vsel %vm222, %v869, %v1672
  %v1716 = vsel %vm222, %v870, %v1674
  %v1717 = vsel %vm222, %v871, %v1676
  %v1718 = vsel %vm222, %v872, %v1678
  %v1719 = vsel %vm222, %v873, %v1680
  %v1720 = vsel %vm222, %v874, %v1682
  %v1721 = vsel %vm222, %v875, %v1684
  %v1722 = vsel %vm222, %v876, %v1686
  %v1723 = vsel %vm222, %v877, %v1688
  %v1724 = vsel %vm222, %v878, %v1690
  %v1725 = vsel %vm222, %v879, %v1692
  %v1726 = vsel %vm222, %v880, %v1694
  %v1727 = vld [vmem:[%s5] sm:$0xff]
  %v1728 = vld [vmem:[%s5 + $0x8] sm:$0xff]
  %v1729 = vld [vmem:[%s5 + $0x10] sm:$0xff]
  %v1730 = vld [vmem:[%s5 + $0x18] sm:$0xff]
  %v1731 = vld [vmem:[%s5 + $0x20] sm:$0xff]
  %v1732 = vld [vmem:[%s5 + $0x28] sm:$0xff]
  %v1733 = vld [vmem:[%s5 + $0x30] sm:$0xff]
  %v1734 = vld [vmem:[%s5 + $0x38] sm:$0xff]
  %v1735 = vld [vmem:[%s6] sm:$0x3]
  %v1736 = vld [vmem:[%s7] sm:$0x3]
  %v1737 = vpack.c.bf16 %v1712, %v1711
  %v1738 = vpack.c.bf16 %v1714, %v1713
  %v1739 = vpack.c.bf16 %v1716, %v1715
  %v1740 = vpack.c.bf16 %v1718, %v1717
  %v1741 = vpack.c.bf16 %v1720, %v1719
  %v1742 = vpack.c.bf16 %v1722, %v1721
  %v1743 = vpack.c.bf16 %v1724, %v1723
  %v1744 = vpack.c.bf16 %v1726, %v1725
  %v1745 = vpack.c.bf16 %v1728, %v1727
  %v1746 = vpack.c.bf16 %v1730, %v1729
  %v1747 = vpack.c.bf16 %v1732, %v1731
  %v1748 = vpack.c.bf16 %v1734, %v1733
  %vm1749 = vcmask 523264
  %v1751 = vsel %vm1749, %v1737, 0
  %v1754 = vsel %vm1749, %v1738, 0
  %v1757 = vsel %vm1749, %v1739, 0
  %v1760 = vsel %vm1749, %v1740, 0
  %v1763 = vsel %vm1749, %v1741, 0
  %v1766 = vsel %vm1749, %v1742, 0
  %v1769 = vsel %vm1749, %v1743, 0
  %v1772 = vsel %vm1749, %v1744, 0
  %1774 = vmatprep.subr.bf16.mxu0 0
  %1775 = vmatpush1.bf16.msra.mxu0 0
  %1776 = vmatprep.subr.bf16.mxu0 0
  %1777 = vmatpush1.bf16.msra.mxu0 0
  %1778 = vmatprep.subr.bf16.mxu0 0
  %1779 = vmatpush1.bf16.msra.mxu0 0
  %1780 = vmatprep.subr.bf16.mxu0 0
  %1781 = vmatpush1.bf16.msra.mxu0 0
  %1782 = vmatprep.subr.bf16.mxu0 0
  %1783 = vmatpush1.bf16.msra.mxu0 %v1748
  %1784 = vmatprep.subr.bf16.mxu0 0
  %1785 = vmatpush1.bf16.msra.mxu0 %v1747
  %1786 = vmatprep.subr.bf16.mxu0 0
  %1787 = vmatpush1.bf16.msra.mxu0 %v1746
  %1788 = vmatprep.subr.bf16.mxu0 0
  %1789 = vmatpush1.bf16.msra.mxu0 %v1745
  %1790 = vmatprep.subr.bf16.mxu0 0
  %1791 = vmatpush2.bf16.msra.mxu0 0
  %1792 = vmatprep.subr.bf16.mxu0 0
  %1793 = vmatpush2.bf16.msra.mxu0 0
  %1794 = vmatprep.subr.bf16.mxu0 0
  %1795 = vmatpush2.bf16.msra.mxu0 0
  %1796 = vmatprep.subr.bf16.mxu0 0
  %1797 = vmatpush2.bf16.msra.mxu0 0
  %1798 = vmatprep.subr.bf16.mxu0 0
  %1799 = vmatpush2.bf16.msra.mxu0 0
  %1800 = vmatprep.subr.bf16.mxu0 0
  %1801 = vmatpush2.bf16.msra.mxu0 0
  %1802 = vmatprep.subr.bf16.mxu0 0
  %1803 = vmatpush2.bf16.msra.mxu0 0
  %1804 = vmatprep.subr.bf16.mxu0 0
  %1805 = vmatpush2.bf16.msra.mxu0 0
  %1806 = vmatprep.mubr.bf16.mxu0 0
  %1807 = vmatmul.mubr.bf16.gmra.mxu0 %v1751
  %v1808 = vpop.f32.mrf.mxu0
  %v1809 = vadd.f32 0.0, %v1808
  %v1810 = vpop.f32.mrf.mxu0
  %v1811 = vpop.f32.mrf.mxu0
  %v1812 = vadd.f32 0.0, %v1811
  %v1813 = vpop.f32.mrf.mxu0
  %1814 = vmatprep.mubr.bf16.mxu0 0
  %1815 = vmatmul.mubr.bf16.gmra.mxu0 %v1754
  %v1816 = vpop.f32.mrf.mxu0
  %v1817 = vadd.f32 0.0, %v1816
  %v1818 = vpop.f32.mrf.mxu0
  %v1819 = vpop.f32.mrf.mxu0
  %v1820 = vadd.f32 0.0, %v1819
  %v1821 = vpop.f32.mrf.mxu0
  %1822 = vmatprep.mubr.bf16.mxu0 0
  %1823 = vmatmul.mubr.bf16.gmra.mxu0 %v1757
  %v1824 = vpop.f32.mrf.mxu0
  %v1825 = vadd.f32 0.0, %v1824
  %v1826 = vpop.f32.mrf.mxu0
  %v1827 = vpop.f32.mrf.mxu0
  %v1828 = vadd.f32 0.0, %v1827
  %v1829 = vpop.f32.mrf.mxu0
  %1830 = vmatprep.mubr.bf16.mxu0 0
  %1831 = vmatmul.mubr.bf16.gmra.mxu0 %v1760
  %v1832 = vpop.f32.mrf.mxu0
  %v1833 = vadd.f32 0.0, %v1832
  %v1834 = vpop.f32.mrf.mxu0
  %v1835 = vpop.f32.mrf.mxu0
  %v1836 = vadd.f32 0.0, %v1835
  %v1837 = vpop.f32.mrf.mxu0
  %1838 = vmatprep.mubr.bf16.mxu0 0
  %1839 = vmatmul.mubr.bf16.gmra.mxu0 %v1763
  %v1840 = vpop.f32.mrf.mxu0
  %v1841 = vadd.f32 0.0, %v1840
  %v1842 = vpop.f32.mrf.mxu0
  %v1843 = vpop.f32.mrf.mxu0
  %v1844 = vadd.f32 0.0, %v1843
  %v1845 = vpop.f32.mrf.mxu0
  %1846 = vmatprep.mubr.bf16.mxu0 0
  %1847 = vmatmul.mubr.bf16.gmra.mxu0 %v1766
  %v1848 = vpop.f32.mrf.mxu0
  %v1849 = vadd.f32 0.0, %v1848
  %v1850 = vpop.f32.mrf.mxu0
  %v1851 = vpop.f32.mrf.mxu0
  %v1852 = vadd.f32 0.0, %v1851
  %v1853 = vpop.f32.mrf.mxu0
  %1854 = vmatprep.mubr.bf16.mxu0 0
  %1855 = vmatmul.mubr.bf16.gmra.mxu0 %v1769
  %v1856 = vpop.f32.mrf.mxu0
  %v1857 = vadd.f32 0.0, %v1856
  %v1858 = vpop.f32.mrf.mxu0
  %v1859 = vpop.f32.mrf.mxu0
  %v1860 = vadd.f32 0.0, %v1859
  %v1861 = vpop.f32.mrf.mxu0
  %1862 = vmatprep.mubr.bf16.mxu0 0
  %1863 = vmatmul.mubr.bf16.gmra.mxu0 %v1772
  %v1864 = vpop.f32.mrf.mxu0
  %v1865 = vadd.f32 0.0, %v1864
  %v1866 = vpop.f32.mrf.mxu0
  %v1867 = vpop.f32.mrf.mxu0
  %v1868 = vadd.f32 0.0, %v1867
  %v1869 = vpop.f32.mrf.mxu0
  %1870 = vdwg.mxu0
  %v1872 = vsel %vm222, %v1735, 0
  %v1875 = vsel %vm222, %v1809, 0
  %v1878 = vsel %vm222, %v1812, 0
  %v1881 = vsel %vm222, %v1817, 0
  %v1884 = vsel %vm222, %v1820, 0
  %v1887 = vsel %vm222, %v1825, 0
  %v1890 = vsel %vm222, %v1828, 0
  %v1893 = vsel %vm222, %v1833, 0
  %v1896 = vsel %vm222, %v1836, 0
  %v1899 = vsel %vm222, %v1841, 0
  %v1902 = vsel %vm222, %v1844, 0
  %v1905 = vsel %vm222, %v1849, 0
  %v1908 = vsel %vm222, %v1852, 0
  %v1911 = vsel %vm222, %v1857, 0
  %v1914 = vsel %vm222, %v1860, 0
  %v1917 = vsel %vm222, %v1865, 0
  %v1920 = vsel %vm222, %v1868, 0
  %1922 = vmatprep.subr.mxu0 0.0
  %1923 = vmatpush1.xpose.msra.mxu0 %v1920
  %1924 = vmatprep.subr.mxu0 0.0
  %1925 = vmatpush1.xpose.msra.mxu0 %v1917
  %1926 = vmatprep.subr.mxu0 0.0
  %1927 = vmatpush1.xpose.msra.mxu0 %v1914
  %1928 = vmatprep.subr.mxu0 0.0
  %1929 = vmatpush1.xpose.msra.mxu0 %v1911
  %1930 = vmatprep.subr.mxu0 0.0
  %1931 = vmatpush1.xpose.msra.mxu0 %v1908
  %1932 = vmatprep.subr.mxu0 0.0
  %1933 = vmatpush1.xpose.msra.mxu0 %v1905
  %1934 = vmatprep.subr.mxu0 0.0
  %1935 = vmatpush1.xpose.msra.mxu0 %v1902
  %1936 = vmatprep.subr.mxu0 0.0
  %1937 = vmatpush1.xpose.msra.mxu0 %v1899
  %1938 = vmatprep.subr.mxu0 0.0
  %1939 = vmatpush1.xpose.msra.mxu0 %v1896
  %1940 = vmatprep.subr.mxu0 0.0
  %1941 = vmatpush1.xpose.msra.mxu0 %v1893
  %1942 = vmatprep.subr.mxu0 0.0
  %1943 = vmatpush1.xpose.msra.mxu0 %v1890
  %1944 = vmatprep.subr.mxu0 0.0
  %1945 = vmatpush1.xpose.msra.mxu0 %v1887
  %1946 = vmatprep.subr.mxu0 0.0
  %1947 = vmatpush1.xpose.msra.mxu0 %v1884
  %1948 = vmatprep.subr.mxu0 0.0
  %1949 = vmatpush1.xpose.msra.mxu0 %v1881
  %1950 = vmatprep.subr.mxu0 0.0
  %1951 = vmatpush1.xpose.msra.mxu0 %v1878
  %1952 = vmatprep.subr.mxu0 0.0
  %1953 = vmatpush1.xpose.msra.mxu0 %v1875
  %1954 = vmatprep.subr.mxu0 0.0
  %1955 = vmatpush2.xpose.msra.mxu0 0.0
  %1956 = vmatprep.subr.mxu0 0.0
  %1957 = vmatpush2.xpose.msra.mxu0 0.0
  %1958 = vmatprep.subr.mxu0 0.0
  %1959 = vmatpush2.xpose.msra.mxu0 0.0
  %1960 = vmatprep.subr.mxu0 0.0
  %1961 = vmatpush2.xpose.msra.mxu0 0.0
  %1962 = vmatprep.subr.mxu0 0.0
  %1963 = vmatpush2.xpose.msra.mxu0 0.0
  %1964 = vmatprep.subr.mxu0 0.0
  %1965 = vmatpush2.xpose.msra.mxu0 0.0
  %1966 = vmatprep.subr.mxu0 0.0
  %1967 = vmatpush2.xpose.msra.mxu0 0.0
  %1968 = vmatprep.subr.mxu0 0.0
  %1969 = vmatpush2.xpose.msra.mxu0 0.0
  %1970 = vmatprep.subr.mxu0 0.0
  %1971 = vmatpush2.xpose.msra.mxu0 0.0
  %1972 = vmatprep.subr.mxu0 0.0
  %1973 = vmatpush2.xpose.msra.mxu0 0.0
  %1974 = vmatprep.subr.mxu0 0.0
  %1975 = vmatpush2.xpose.msra.mxu0 0.0
  %1976 = vmatprep.subr.mxu0 0.0
  %1977 = vmatpush2.xpose.msra.mxu0 0.0
  %1978 = vmatprep.subr.mxu0 0.0
  %1979 = vmatpush2.xpose.msra.mxu0 0.0
  %1980 = vmatprep.subr.mxu0 0.0
  %1981 = vmatpush2.xpose.msra.mxu0 0.0
  %1982 = vmatprep.subr.mxu0 0.0
  %1983 = vmatpush2.xpose.msra.mxu0 0.0
  %1984 = vmatprep.subr.mxu0 0.0
  %1985 = vmatpush2.xpose.msra.mxu0 0.0
  %1986 = vmatprep.mubr.f32.mxu0 0.0
  %1987 = vmatmul.mubr.f32.gmra.mxu0 %v1872
  %v1988 = vpop.f32.mrf.mxu0
  %v1989 = vadd.f32 0.0, %v1988
  %v1990 = vpop.f32.mrf.mxu0
  %1991 = vdwg.mxu0
  %v1992 = vlaneseq
  %v1993 = vshrl.u32 %v1992, 7
  %v1994 = vsub.s32 0, %v1993
  %v1995 = vrot.slane %v1736, %v1994
  %v1996 = vmul.f32 %v1809, %v1995
  %v1997 = vmul.f32 %v1812, %v1995
  %v1998 = vmul.f32 %v1817, %v1995
  %v1999 = vmul.f32 %v1820, %v1995
  %v2000 = vmul.f32 %v1825, %v1995
  %v2001 = vmul.f32 %v1828, %v1995
  %v2002 = vmul.f32 %v1833, %v1995
  %v2003 = vmul.f32 %v1836, %v1995
  %v2004 = vmul.f32 %v1841, %v1995
  %v2005 = vmul.f32 %v1844, %v1995
  %v2006 = vmul.f32 %v1849, %v1995
  %v2007 = vmul.f32 %v1852, %v1995
  %v2008 = vmul.f32 %v1857, %v1995
  %v2009 = vmul.f32 %v1860, %v1995
  %v2010 = vmul.f32 %v1865, %v1995
  %v2011 = vmul.f32 %v1868, %v1995
  %v2012 = vsel %vm222, %v1996, 0.0
  %2013 = vadd.xlane.f32.xlu0 %v2012
  %v2014 = vpop.xlane.xlu0 %2013
  %v2015 = vsel %vm222, %v1997, 0.0
  %2016 = vadd.xlane.f32.xlu0 %v2015
  %v2017 = vpop.xlane.xlu0 %2016
  %v2018 = vsel %vm222, %v1998, 0.0
  %2019 = vadd.xlane.f32.xlu0 %v2018
  %v2020 = vpop.xlane.xlu0 %2019
  %v2021 = vsel %vm222, %v1999, 0.0
  %2022 = vadd.xlane.f32.xlu0 %v2021
  %v2023 = vpop.xlane.xlu0 %2022
  %v2024 = vsel %vm222, %v2000, 0.0
  %2025 = vadd.xlane.f32.xlu0 %v2024
  %v2026 = vpop.xlane.xlu0 %2025
  %v2027 = vsel %vm222, %v2001, 0.0
  %2028 = vadd.xlane.f32.xlu0 %v2027
  %v2029 = vpop.xlane.xlu0 %2028
  %v2030 = vsel %vm222, %v2002, 0.0
  %2031 = vadd.xlane.f32.xlu0 %v2030
  %v2032 = vpop.xlane.xlu0 %2031
  %v2033 = vsel %vm222, %v2003, 0.0
  %2034 = vadd.xlane.f32.xlu0 %v2033
  %v2035 = vpop.xlane.xlu0 %2034
  %v2036 = vsel %vm222, %v2004, 0.0
  %2037 = vadd.xlane.f32.xlu0 %v2036
  %v2038 = vpop.xlane.xlu0 %2037
  %v2039 = vsel %vm222, %v2005, 0.0
  %2040 = vadd.xlane.f32.xlu0 %v2039
  %v2041 = vpop.xlane.xlu0 %2040
  %v2042 = vsel %vm222, %v2006, 0.0
  %2043 = vadd.xlane.f32.xlu0 %v2042
  %v2044 = vpop.xlane.xlu0 %2043
  %v2045 = vsel %vm222, %v2007, 0.0
  %2046 = vadd.xlane.f32.xlu0 %v2045
  %v2047 = vpop.xlane.xlu0 %2046
  %v2048 = vsel %vm222, %v2008, 0.0
  %2049 = vadd.xlane.f32.xlu0 %v2048
  %v2050 = vpop.xlane.xlu0 %2049
  %v2051 = vsel %vm222, %v2009, 0.0
  %2052 = vadd.xlane.f32.xlu0 %v2051
  %v2053 = vpop.xlane.xlu0 %2052
  %v2054 = vsel %vm222, %v2010, 0.0
  %2055 = vadd.xlane.f32.xlu0 %v2054
  %v2056 = vpop.xlane.xlu0 %2055
  %v2057 = vsel %vm222, %v2011, 0.0
  %2058 = vadd.xlane.f32.xlu0 %v2057
  %v2059 = vpop.xlane.xlu0 %2058
  %v2060 = vlaneseq
  %v2061 = vshrl.u32 %v2060, 7
  %v2062 = vsub.s32 0, %v2061
  %v2063 = vrot.slane %v1989, %v2062
  %v2064 = vadd.f32 %v2014, %v2063
  %v2065 = vadd.f32 %v2017, %v2063
  %v2066 = vadd.f32 %v2020, %v2063
  %v2067 = vadd.f32 %v2023, %v2063
  %v2068 = vadd.f32 %v2026, %v2063
  %v2069 = vadd.f32 %v2029, %v2063
  %v2070 = vadd.f32 %v2032, %v2063
  %v2071 = vadd.f32 %v2035, %v2063
  %v2072 = vadd.f32 %v2038, %v2063
  %v2073 = vadd.f32 %v2041, %v2063
  %v2074 = vadd.f32 %v2044, %v2063
  %v2075 = vadd.f32 %v2047, %v2063
  %v2076 = vadd.f32 %v2050, %v2063
  %v2077 = vadd.f32 %v2053, %v2063
  %v2078 = vadd.f32 %v2056, %v2063
  %v2079 = vadd.f32 %v2059, %v2063
  %v2080 = vmul.f32 %v2064, 0.2
  %v2081 = vmul.f32 %v2065, 0.2
  %v2082 = vmul.f32 %v2066, 0.2
  %v2083 = vmul.f32 %v2067, 0.2
  %v2084 = vmul.f32 %v2068, 0.2
  %v2085 = vmul.f32 %v2069, 0.2
  %v2086 = vmul.f32 %v2070, 0.2
  %v2087 = vmul.f32 %v2071, 0.2
  %v2088 = vmul.f32 %v2072, 0.2
  %v2089 = vmul.f32 %v2073, 0.2
  %v2090 = vmul.f32 %v2074, 0.2
  %v2091 = vmul.f32 %v2075, 0.2
  %v2092 = vmul.f32 %v2076, 0.2
  %v2093 = vmul.f32 %v2077, 0.2
  %v2094 = vmul.f32 %v2078, 0.2
  %v2095 = vmul.f32 %v2079, 0.2
  %v2096 = vmax.f32 %v2064, %v2080
  %v2097 = vmax.f32 %v2065, %v2081
  %v2098 = vmax.f32 %v2066, %v2082
  %v2099 = vmax.f32 %v2067, %v2083
  %v2100 = vmax.f32 %v2068, %v2084
  %v2101 = vmax.f32 %v2069, %v2085
  %v2102 = vmax.f32 %v2070, %v2086
  %v2103 = vmax.f32 %v2071, %v2087
  %v2104 = vmax.f32 %v2072, %v2088
  %v2105 = vmax.f32 %v2073, %v2089
  %v2106 = vmax.f32 %v2074, %v2090
  %v2107 = vmax.f32 %v2075, %v2091
  %v2108 = vmax.f32 %v2076, %v2092
  %v2109 = vmax.f32 %v2077, %v2093
  %v2110 = vmax.f32 %v2078, %v2094
  %v2111 = vmax.f32 %v2079, %v2095
  %v2112 = vsel %vm55, %v2096, -1e+30
  %v2113 = vsel %vm56, %v2097, -1e+30
  %v2114 = vsel %vm57, %v2098, -1e+30
  %v2115 = vsel %vm58, %v2099, -1e+30
  %v2116 = vsel %vm59, %v2100, -1e+30
  %v2117 = vsel %vm60, %v2101, -1e+30
  %v2118 = vsel %vm61, %v2102, -1e+30
  %v2119 = vsel %vm62, %v2103, -1e+30
  %v2120 = vsel %vm63, %v2104, -1e+30
  %v2121 = vsel %vm64, %v2105, -1e+30
  %v2122 = vsel %vm65, %v2106, -1e+30
  %v2123 = vsel %vm66, %v2107, -1e+30
  %v2124 = vsel %vm67, %v2108, -1e+30
  %v2125 = vsel %vm68, %v2109, -1e+30
  %v2126 = vsel %vm69, %v2110, -1e+30
  %v2127 = vsel %vm70, %v2111, -1e+30
  %2128 = vmax.xlane.f32.xlu0 %v2112
  %v2129 = vpop.xlane.xlu0 %2128
  %2130 = vmax.xlane.f32.xlu0 %v2113
  %v2131 = vpop.xlane.xlu0 %2130
  %2132 = vmax.xlane.f32.xlu0 %v2114
  %v2133 = vpop.xlane.xlu0 %2132
  %2134 = vmax.xlane.f32.xlu0 %v2115
  %v2135 = vpop.xlane.xlu0 %2134
  %2136 = vmax.xlane.f32.xlu0 %v2116
  %v2137 = vpop.xlane.xlu0 %2136
  %2138 = vmax.xlane.f32.xlu0 %v2117
  %v2139 = vpop.xlane.xlu0 %2138
  %2140 = vmax.xlane.f32.xlu0 %v2118
  %v2141 = vpop.xlane.xlu0 %2140
  %2142 = vmax.xlane.f32.xlu0 %v2119
  %v2143 = vpop.xlane.xlu0 %2142
  %2144 = vmax.xlane.f32.xlu0 %v2120
  %v2145 = vpop.xlane.xlu0 %2144
  %2146 = vmax.xlane.f32.xlu0 %v2121
  %v2147 = vpop.xlane.xlu0 %2146
  %2148 = vmax.xlane.f32.xlu0 %v2122
  %v2149 = vpop.xlane.xlu0 %2148
  %2150 = vmax.xlane.f32.xlu0 %v2123
  %v2151 = vpop.xlane.xlu0 %2150
  %2152 = vmax.xlane.f32.xlu0 %v2124
  %v2153 = vpop.xlane.xlu0 %2152
  %2154 = vmax.xlane.f32.xlu0 %v2125
  %v2155 = vpop.xlane.xlu0 %2154
  %2156 = vmax.xlane.f32.xlu0 %v2126
  %v2157 = vpop.xlane.xlu0 %2156
  %2158 = vmax.xlane.f32.xlu0 %v2127
  %v2159 = vpop.xlane.xlu0 %2158
  %v2160 = vsub.f32 %v2112, %v2129
  %v2161 = vsub.f32 %v2113, %v2131
  %v2162 = vsub.f32 %v2114, %v2133
  %v2163 = vsub.f32 %v2115, %v2135
  %v2164 = vsub.f32 %v2116, %v2137
  %v2165 = vsub.f32 %v2117, %v2139
  %v2166 = vsub.f32 %v2118, %v2141
  %v2167 = vsub.f32 %v2119, %v2143
  %v2168 = vsub.f32 %v2120, %v2145
  %v2169 = vsub.f32 %v2121, %v2147
  %v2170 = vsub.f32 %v2122, %v2149
  %v2171 = vsub.f32 %v2123, %v2151
  %v2172 = vsub.f32 %v2124, %v2153
  %v2173 = vsub.f32 %v2125, %v2155
  %v2174 = vsub.f32 %v2126, %v2157
  %v2175 = vsub.f32 %v2127, %v2159
  %v2176 = vmul.f32 %v2160, 1.442695
  %v2177 = vpow.pop %v2176
  %v2178 = vmul.f32 %v2161, 1.442695
  %v2179 = vpow.pop %v2178
  %v2180 = vmul.f32 %v2162, 1.442695
  %v2181 = vpow.pop %v2180
  %v2182 = vmul.f32 %v2163, 1.442695
  %v2183 = vpow.pop %v2182
  %v2184 = vmul.f32 %v2164, 1.442695
  %v2185 = vpow.pop %v2184
  %v2186 = vmul.f32 %v2165, 1.442695
  %v2187 = vpow.pop %v2186
  %v2188 = vmul.f32 %v2166, 1.442695
  %v2189 = vpow.pop %v2188
  %v2190 = vmul.f32 %v2167, 1.442695
  %v2191 = vpow.pop %v2190
  %v2192 = vmul.f32 %v2168, 1.442695
  %v2193 = vpow.pop %v2192
  %v2194 = vmul.f32 %v2169, 1.442695
  %v2195 = vpow.pop %v2194
  %v2196 = vmul.f32 %v2170, 1.442695
  %v2197 = vpow.pop %v2196
  %v2198 = vmul.f32 %v2171, 1.442695
  %v2199 = vpow.pop %v2198
  %v2200 = vmul.f32 %v2172, 1.442695
  %v2201 = vpow.pop %v2200
  %v2202 = vmul.f32 %v2173, 1.442695
  %v2203 = vpow.pop %v2202
  %v2204 = vmul.f32 %v2174, 1.442695
  %v2205 = vpow.pop %v2204
  %v2206 = vmul.f32 %v2175, 1.442695
  %v2207 = vpow.pop %v2206
  %v2208 = vsel %vm55, %v2177, 0.0
  %v2209 = vsel %vm56, %v2179, 0.0
  %v2210 = vsel %vm57, %v2181, 0.0
  %v2211 = vsel %vm58, %v2183, 0.0
  %v2212 = vsel %vm59, %v2185, 0.0
  %v2213 = vsel %vm60, %v2187, 0.0
  %v2214 = vsel %vm61, %v2189, 0.0
  %v2215 = vsel %vm62, %v2191, 0.0
  %v2216 = vsel %vm63, %v2193, 0.0
  %v2217 = vsel %vm64, %v2195, 0.0
  %v2218 = vsel %vm65, %v2197, 0.0
  %v2219 = vsel %vm66, %v2199, 0.0
  %v2220 = vsel %vm67, %v2201, 0.0
  %v2221 = vsel %vm68, %v2203, 0.0
  %v2222 = vsel %vm69, %v2205, 0.0
  %v2223 = vsel %vm70, %v2207, 0.0
  %2224 = vadd.xlane.f32.xlu0 %v2208
  %v2225 = vpop.xlane.xlu0 %2224
  %2226 = vadd.xlane.f32.xlu0 %v2209
  %v2227 = vpop.xlane.xlu0 %2226
  %2228 = vadd.xlane.f32.xlu0 %v2210
  %v2229 = vpop.xlane.xlu0 %2228
  %2230 = vadd.xlane.f32.xlu0 %v2211
  %v2231 = vpop.xlane.xlu0 %2230
  %2232 = vadd.xlane.f32.xlu0 %v2212
  %v2233 = vpop.xlane.xlu0 %2232
  %2234 = vadd.xlane.f32.xlu0 %v2213
  %v2235 = vpop.xlane.xlu0 %2234
  %2236 = vadd.xlane.f32.xlu0 %v2214
  %v2237 = vpop.xlane.xlu0 %2236
  %2238 = vadd.xlane.f32.xlu0 %v2215
  %v2239 = vpop.xlane.xlu0 %2238
  %2240 = vadd.xlane.f32.xlu0 %v2216
  %v2241 = vpop.xlane.xlu0 %2240
  %2242 = vadd.xlane.f32.xlu0 %v2217
  %v2243 = vpop.xlane.xlu0 %2242
  %2244 = vadd.xlane.f32.xlu0 %v2218
  %v2245 = vpop.xlane.xlu0 %2244
  %2246 = vadd.xlane.f32.xlu0 %v2219
  %v2247 = vpop.xlane.xlu0 %2246
  %2248 = vadd.xlane.f32.xlu0 %v2220
  %v2249 = vpop.xlane.xlu0 %2248
  %2250 = vadd.xlane.f32.xlu0 %v2221
  %v2251 = vpop.xlane.xlu0 %2250
  %2252 = vadd.xlane.f32.xlu0 %v2222
  %v2253 = vpop.xlane.xlu0 %2252
  %2254 = vadd.xlane.f32.xlu0 %v2223
  %v2255 = vpop.xlane.xlu0 %2254
  %vm2256 = vcmp.le.f32.partialorder %v2225, 0.0
  %vm2257 = vcmp.le.f32.partialorder %v2227, 0.0
  %vm2258 = vcmp.le.f32.partialorder %v2229, 0.0
  %vm2259 = vcmp.le.f32.partialorder %v2231, 0.0
  %vm2260 = vcmp.le.f32.partialorder %v2233, 0.0
  %vm2261 = vcmp.le.f32.partialorder %v2235, 0.0
  %vm2262 = vcmp.le.f32.partialorder %v2237, 0.0
  %vm2263 = vcmp.le.f32.partialorder %v2239, 0.0
  %vm2264 = vcmp.le.f32.partialorder %v2241, 0.0
  %vm2265 = vcmp.le.f32.partialorder %v2243, 0.0
  %vm2266 = vcmp.le.f32.partialorder %v2245, 0.0
  %vm2267 = vcmp.le.f32.partialorder %v2247, 0.0
  %vm2268 = vcmp.le.f32.partialorder %v2249, 0.0
  %vm2269 = vcmp.le.f32.partialorder %v2251, 0.0
  %vm2270 = vcmp.le.f32.partialorder %v2253, 0.0
  %vm2271 = vcmp.le.f32.partialorder %v2255, 0.0
  %v2272 = vsel %vm2256, 1.0, %v2225
  %v2273 = vsel %vm2257, 1.0, %v2227
  %v2274 = vsel %vm2258, 1.0, %v2229
  %v2275 = vsel %vm2259, 1.0, %v2231
  %v2276 = vsel %vm2260, 1.0, %v2233
  %v2277 = vsel %vm2261, 1.0, %v2235
  %v2278 = vsel %vm2262, 1.0, %v2237
  %v2279 = vsel %vm2263, 1.0, %v2239
  %v2280 = vsel %vm2264, 1.0, %v2241
  %v2281 = vsel %vm2265, 1.0, %v2243
  %v2282 = vsel %vm2266, 1.0, %v2245
  %v2283 = vsel %vm2267, 1.0, %v2247
  %v2284 = vsel %vm2268, 1.0, %v2249
  %v2285 = vsel %vm2269, 1.0, %v2251
  %v2286 = vsel %vm2270, 1.0, %v2253
  %v2287 = vsel %vm2271, 1.0, %v2255
  %v2288 = vrcp.pop %v2272
  %v2289 = vrcp.pop %v2273
  %v2290 = vrcp.pop %v2274
  %v2291 = vrcp.pop %v2275
  %v2292 = vrcp.pop %v2276
  %v2293 = vrcp.pop %v2277
  %v2294 = vrcp.pop %v2278
  %v2295 = vrcp.pop %v2279
  %v2296 = vrcp.pop %v2280
  %v2297 = vrcp.pop %v2281
  %v2298 = vrcp.pop %v2282
  %v2299 = vrcp.pop %v2283
  %v2300 = vrcp.pop %v2284
  %v2301 = vrcp.pop %v2285
  %v2302 = vrcp.pop %v2286
  %v2303 = vrcp.pop %v2287
  %v2304 = vmul.f32 %v2208, %v2288
  %v2305 = vmul.f32 %v2209, %v2289
  %v2306 = vmul.f32 %v2210, %v2290
  %v2307 = vmul.f32 %v2211, %v2291
  %v2308 = vmul.f32 %v2212, %v2292
  %v2309 = vmul.f32 %v2213, %v2293
  %v2310 = vmul.f32 %v2214, %v2294
  %v2311 = vmul.f32 %v2215, %v2295
  %v2312 = vmul.f32 %v2216, %v2296
  %v2313 = vmul.f32 %v2217, %v2297
  %v2314 = vmul.f32 %v2218, %v2298
  %v2315 = vmul.f32 %v2219, %v2299
  %v2316 = vmul.f32 %v2220, %v2300
  %v2317 = vmul.f32 %v2221, %v2301
  %v2318 = vmul.f32 %v2222, %v2302
  %v2319 = vmul.f32 %v2223, %v2303
  %v2320 = vpack.c.bf16 %v2305, %v2304
  %v2321 = vpack.c.bf16 %v2307, %v2306
  %v2322 = vpack.c.bf16 %v2309, %v2308
  %v2323 = vpack.c.bf16 %v2311, %v2310
  %v2324 = vpack.c.bf16 %v2313, %v2312
  %v2325 = vpack.c.bf16 %v2315, %v2314
  %v2326 = vpack.c.bf16 %v2317, %v2316
  %v2327 = vpack.c.bf16 %v2319, %v2318
  %v2328 = vpack.c.bf16 %v1812, %v1809
  %v2329 = vpack.c.bf16 %v1820, %v1817
  %v2330 = vpack.c.bf16 %v1828, %v1825
  %v2331 = vpack.c.bf16 %v1836, %v1833
  %v2332 = vpack.c.bf16 %v1844, %v1841
  %v2333 = vpack.c.bf16 %v1852, %v1849
  %v2334 = vpack.c.bf16 %v1860, %v1857
  %v2335 = vpack.c.bf16 %v1868, %v1865
  %2336 = vmatprep.subr.bf16.mxu0 0
  %2337 = vmatpush1.bf16.msra.mxu0 %v2335
  %2338 = vmatprep.subr.bf16.mxu0 0
  %2339 = vmatpush1.bf16.msra.mxu0 %v2334
  %2340 = vmatprep.subr.bf16.mxu0 0
  %2341 = vmatpush1.bf16.msra.mxu0 %v2333
  %2342 = vmatprep.subr.bf16.mxu0 0
  %2343 = vmatpush1.bf16.msra.mxu0 %v2332
  %2344 = vmatprep.subr.bf16.mxu0 0
  %2345 = vmatpush1.bf16.msra.mxu0 %v2331
  %2346 = vmatprep.subr.bf16.mxu0 0
  %2347 = vmatpush1.bf16.msra.mxu0 %v2330
  %2348 = vmatprep.subr.bf16.mxu0 0
  %2349 = vmatpush1.bf16.msra.mxu0 %v2329
  %2350 = vmatprep.subr.bf16.mxu0 0
  %2351 = vmatpush1.bf16.msra.mxu0 %v2328
  %2352 = vmatprep.subr.bf16.mxu0 0
  %2353 = vmatpush2.bf16.msra.mxu0 0
  %2354 = vmatprep.subr.bf16.mxu0 0
  %2355 = vmatpush2.bf16.msra.mxu0 0
  %2356 = vmatprep.subr.bf16.mxu0 0
  %2357 = vmatpush2.bf16.msra.mxu0 0
  %2358 = vmatprep.subr.bf16.mxu0 0
  %2359 = vmatpush2.bf16.msra.mxu0 0
  %2360 = vmatprep.subr.bf16.mxu0 0
  %2361 = vmatpush2.bf16.msra.mxu0 0
  %2362 = vmatprep.subr.bf16.mxu0 0
  %2363 = vmatpush2.bf16.msra.mxu0 0
  %2364 = vmatprep.subr.bf16.mxu0 0
  %2365 = vmatpush2.bf16.msra.mxu0 0
  %2366 = vmatprep.subr.bf16.mxu0 0
  %2367 = vmatpush2.bf16.msra.mxu0 0
  %2368 = vmatprep.mubr.bf16.mxu0 0
  %2369 = vmatmul.mubr.bf16.gmra.mxu0 %v2320
  %v2370 = vpop.f32.mrf.mxu0
  %v2371 = vadd.f32 0.0, %v2370
  %v2372 = vpop.f32.mrf.mxu0
  %v2373 = vpop.f32.mrf.mxu0
  %v2374 = vadd.f32 0.0, %v2373
  %v2375 = vpop.f32.mrf.mxu0
  %2376 = vmatprep.mubr.bf16.mxu0 0
  %2377 = vmatmul.mubr.bf16.gmra.mxu0 %v2321
  %v2378 = vpop.f32.mrf.mxu0
  %v2379 = vadd.f32 0.0, %v2378
  %v2380 = vpop.f32.mrf.mxu0
  %v2381 = vpop.f32.mrf.mxu0
  %v2382 = vadd.f32 0.0, %v2381
  %v2383 = vpop.f32.mrf.mxu0
  %2384 = vmatprep.mubr.bf16.mxu0 0
  %2385 = vmatmul.mubr.bf16.gmra.mxu0 %v2322
  %v2386 = vpop.f32.mrf.mxu0
  %v2387 = vadd.f32 0.0, %v2386
  %v2388 = vpop.f32.mrf.mxu0
  %v2389 = vpop.f32.mrf.mxu0
  %v2390 = vadd.f32 0.0, %v2389
  %v2391 = vpop.f32.mrf.mxu0
  %2392 = vmatprep.mubr.bf16.mxu0 0
  %2393 = vmatmul.mubr.bf16.gmra.mxu0 %v2323
  %v2394 = vpop.f32.mrf.mxu0
  %v2395 = vadd.f32 0.0, %v2394
  %v2396 = vpop.f32.mrf.mxu0
  %v2397 = vpop.f32.mrf.mxu0
  %v2398 = vadd.f32 0.0, %v2397
  %v2399 = vpop.f32.mrf.mxu0
  %2400 = vmatprep.mubr.bf16.mxu0 0
  %2401 = vmatmul.mubr.bf16.gmra.mxu0 %v2324
  %v2402 = vpop.f32.mrf.mxu0
  %v2403 = vadd.f32 0.0, %v2402
  %v2404 = vpop.f32.mrf.mxu0
  %v2405 = vpop.f32.mrf.mxu0
  %v2406 = vadd.f32 0.0, %v2405
  %v2407 = vpop.f32.mrf.mxu0
  %2408 = vmatprep.mubr.bf16.mxu0 0
  %2409 = vmatmul.mubr.bf16.gmra.mxu0 %v2325
  %v2410 = vpop.f32.mrf.mxu0
  %v2411 = vadd.f32 0.0, %v2410
  %v2412 = vpop.f32.mrf.mxu0
  %v2413 = vpop.f32.mrf.mxu0
  %v2414 = vadd.f32 0.0, %v2413
  %v2415 = vpop.f32.mrf.mxu0
  %2416 = vmatprep.mubr.bf16.mxu0 0
  %2417 = vmatmul.mubr.bf16.gmra.mxu0 %v2326
  %v2418 = vpop.f32.mrf.mxu0
  %v2419 = vadd.f32 0.0, %v2418
  %v2420 = vpop.f32.mrf.mxu0
  %v2421 = vpop.f32.mrf.mxu0
  %v2422 = vadd.f32 0.0, %v2421
  %v2423 = vpop.f32.mrf.mxu0
  %2424 = vmatprep.mubr.bf16.mxu0 0
  %2425 = vmatmul.mubr.bf16.gmra.mxu0 %v2327
  %v2426 = vpop.f32.mrf.mxu0
  %v2427 = vadd.f32 0.0, %v2426
  %v2428 = vpop.f32.mrf.mxu0
  %v2429 = vpop.f32.mrf.mxu0
  %v2430 = vadd.f32 0.0, %v2429
  %v2431 = vpop.f32.mrf.mxu0
  %2432 = vdwg.mxu0
  %vm2433 = vcmp.gt.f32.partialorder %v2371, 0.0
  %vm2434 = vcmp.gt.f32.partialorder %v2374, 0.0
  %vm2435 = vcmp.gt.f32.partialorder %v2379, 0.0
  %vm2436 = vcmp.gt.f32.partialorder %v2382, 0.0
  %vm2437 = vcmp.gt.f32.partialorder %v2387, 0.0
  %vm2438 = vcmp.gt.f32.partialorder %v2390, 0.0
  %vm2439 = vcmp.gt.f32.partialorder %v2395, 0.0
  %vm2440 = vcmp.gt.f32.partialorder %v2398, 0.0
  %vm2441 = vcmp.gt.f32.partialorder %v2403, 0.0
  %vm2442 = vcmp.gt.f32.partialorder %v2406, 0.0
  %vm2443 = vcmp.gt.f32.partialorder %v2411, 0.0
  %vm2444 = vcmp.gt.f32.partialorder %v2414, 0.0
  %vm2445 = vcmp.gt.f32.partialorder %v2419, 0.0
  %vm2446 = vcmp.gt.f32.partialorder %v2422, 0.0
  %vm2447 = vcmp.gt.f32.partialorder %v2427, 0.0
  %vm2448 = vcmp.gt.f32.partialorder %v2430, 0.0
  %v2449 = vmin.f32 %v2371, 0.0
  %v2450 = vmin.f32 %v2374, 0.0
  %v2451 = vmin.f32 %v2379, 0.0
  %v2452 = vmin.f32 %v2382, 0.0
  %v2453 = vmin.f32 %v2387, 0.0
  %v2454 = vmin.f32 %v2390, 0.0
  %v2455 = vmin.f32 %v2395, 0.0
  %v2456 = vmin.f32 %v2398, 0.0
  %v2457 = vmin.f32 %v2403, 0.0
  %v2458 = vmin.f32 %v2406, 0.0
  %v2459 = vmin.f32 %v2411, 0.0
  %v2460 = vmin.f32 %v2414, 0.0
  %v2461 = vmin.f32 %v2419, 0.0
  %v2462 = vmin.f32 %v2422, 0.0
  %v2463 = vmin.f32 %v2427, 0.0
  %v2464 = vmin.f32 %v2430, 0.0
  %v2465 = vmul.f32 %v2449, 1.442695
  %v2466 = vpow.pop %v2465
  %v2467 = vmul.f32 %v2450, 1.442695
  %v2468 = vpow.pop %v2467
  %v2469 = vmul.f32 %v2451, 1.442695
  %v2470 = vpow.pop %v2469
  %v2471 = vmul.f32 %v2452, 1.442695
  %v2472 = vpow.pop %v2471
  %v2473 = vmul.f32 %v2453, 1.442695
  %v2474 = vpow.pop %v2473
  %v2475 = vmul.f32 %v2454, 1.442695
  %v2476 = vpow.pop %v2475
  %v2477 = vmul.f32 %v2455, 1.442695
  %v2478 = vpow.pop %v2477
  %v2479 = vmul.f32 %v2456, 1.442695
  %v2480 = vpow.pop %v2479
  %v2481 = vmul.f32 %v2457, 1.442695
  %v2482 = vpow.pop %v2481
  %v2483 = vmul.f32 %v2458, 1.442695
  %v2484 = vpow.pop %v2483
  %v2485 = vmul.f32 %v2459, 1.442695
  %v2486 = vpow.pop %v2485
  %v2487 = vmul.f32 %v2460, 1.442695
  %v2488 = vpow.pop %v2487
  %v2489 = vmul.f32 %v2461, 1.442695
  %v2490 = vpow.pop %v2489
  %v2491 = vmul.f32 %v2462, 1.442695
  %v2492 = vpow.pop %v2491
  %v2493 = vmul.f32 %v2463, 1.442695
  %v2494 = vpow.pop %v2493
  %v2495 = vmul.f32 %v2464, 1.442695
  %v2496 = vpow.pop %v2495
  %v2497 = vsub.f32 %v2466, 1.0
  %v2498 = vsub.f32 %v2468, 1.0
  %v2499 = vsub.f32 %v2470, 1.0
  %v2500 = vsub.f32 %v2472, 1.0
  %v2501 = vsub.f32 %v2474, 1.0
  %v2502 = vsub.f32 %v2476, 1.0
  %v2503 = vsub.f32 %v2478, 1.0
  %v2504 = vsub.f32 %v2480, 1.0
  %v2505 = vsub.f32 %v2482, 1.0
  %v2506 = vsub.f32 %v2484, 1.0
  %v2507 = vsub.f32 %v2486, 1.0
  %v2508 = vsub.f32 %v2488, 1.0
  %v2509 = vsub.f32 %v2490, 1.0
  %v2510 = vsub.f32 %v2492, 1.0
  %v2511 = vsub.f32 %v2494, 1.0
  %v2512 = vsub.f32 %v2496, 1.0
  %v2513 = vsel %vm2433, %v2371, %v2497
  %v2514 = vsel %vm2434, %v2374, %v2498
  %v2515 = vsel %vm2435, %v2379, %v2499
  %v2516 = vsel %vm2436, %v2382, %v2500
  %v2517 = vsel %vm2437, %v2387, %v2501
  %v2518 = vsel %vm2438, %v2390, %v2502
  %v2519 = vsel %vm2439, %v2395, %v2503
  %v2520 = vsel %vm2440, %v2398, %v2504
  %v2521 = vsel %vm2441, %v2403, %v2505
  %v2522 = vsel %vm2442, %v2406, %v2506
  %v2523 = vsel %vm2443, %v2411, %v2507
  %v2524 = vsel %vm2444, %v2414, %v2508
  %v2525 = vsel %vm2445, %v2419, %v2509
  %v2526 = vsel %vm2446, %v2422, %v2510
  %v2527 = vsel %vm2447, %v2427, %v2511
  %v2528 = vsel %vm2448, %v2430, %v2512
  %v2529 = vrot.slane %v1735, 1
  %2530 = vrot.lane.b32.xlu0 %v1809, 96
  %v2531 = vpop.permute.xlu0 %2530
  %2532 = vrot.lane.b32.xlu0 %v1812, 96
  %v2533 = vpop.permute.xlu0 %2532
  %2534 = vrot.lane.b32.xlu0 %v1817, 96
  %v2535 = vpop.permute.xlu0 %2534
  %2536 = vrot.lane.b32.xlu0 %v1820, 96
  %v2537 = vpop.permute.xlu0 %2536
  %2538 = vrot.lane.b32.xlu0 %v1825, 96
  %v2539 = vpop.permute.xlu0 %2538
  %2540 = vrot.lane.b32.xlu0 %v1828, 96
  %v2541 = vpop.permute.xlu0 %2540
  %2542 = vrot.lane.b32.xlu0 %v1833, 96
  %v2543 = vpop.permute.xlu0 %2542
  %2544 = vrot.lane.b32.xlu0 %v1836, 96
  %v2545 = vpop.permute.xlu0 %2544
  %2546 = vrot.lane.b32.xlu0 %v1841, 96
  %v2547 = vpop.permute.xlu0 %2546
  %2548 = vrot.lane.b32.xlu0 %v1844, 96
  %v2549 = vpop.permute.xlu0 %2548
  %2550 = vrot.lane.b32.xlu0 %v1849, 96
  %v2551 = vpop.permute.xlu0 %2550
  %2552 = vrot.lane.b32.xlu0 %v1852, 96
  %v2553 = vpop.permute.xlu0 %2552
  %2554 = vrot.lane.b32.xlu0 %v1857, 96
  %v2555 = vpop.permute.xlu0 %2554
  %2556 = vrot.lane.b32.xlu0 %v1860, 96
  %v2557 = vpop.permute.xlu0 %2556
  %2558 = vrot.lane.b32.xlu0 %v1865, 96
  %v2559 = vpop.permute.xlu0 %2558
  %2560 = vrot.lane.b32.xlu0 %v1868, 96
  %v2561 = vpop.permute.xlu0 %2560
  %v2562 = vsel %vm222, %v2529, 0
  %v2564 = vsel %vm222, %v2531, 0
  %v2566 = vsel %vm222, %v2533, 0
  %v2568 = vsel %vm222, %v2535, 0
  %v2570 = vsel %vm222, %v2537, 0
  %v2572 = vsel %vm222, %v2539, 0
  %v2574 = vsel %vm222, %v2541, 0
  %v2576 = vsel %vm222, %v2543, 0
  %v2578 = vsel %vm222, %v2545, 0
  %v2580 = vsel %vm222, %v2547, 0
  %v2582 = vsel %vm222, %v2549, 0
  %v2584 = vsel %vm222, %v2551, 0
  %v2586 = vsel %vm222, %v2553, 0
  %v2588 = vsel %vm222, %v2555, 0
  %v2590 = vsel %vm222, %v2557, 0
  %v2592 = vsel %vm222, %v2559, 0
  %v2594 = vsel %vm222, %v2561, 0
  %2596 = vmatprep.subr.mxu0 0.0
  %2597 = vmatpush1.xpose.msra.mxu0 %v2594
  %2598 = vmatprep.subr.mxu0 0.0
  %2599 = vmatpush1.xpose.msra.mxu0 %v2592
  %2600 = vmatprep.subr.mxu0 0.0
  %2601 = vmatpush1.xpose.msra.mxu0 %v2590
  %2602 = vmatprep.subr.mxu0 0.0
  %2603 = vmatpush1.xpose.msra.mxu0 %v2588
  %2604 = vmatprep.subr.mxu0 0.0
  %2605 = vmatpush1.xpose.msra.mxu0 %v2586
  %2606 = vmatprep.subr.mxu0 0.0
  %2607 = vmatpush1.xpose.msra.mxu0 %v2584
  %2608 = vmatprep.subr.mxu0 0.0
  %2609 = vmatpush1.xpose.msra.mxu0 %v2582
  %2610 = vmatprep.subr.mxu0 0.0
  %2611 = vmatpush1.xpose.msra.mxu0 %v2580
  %2612 = vmatprep.subr.mxu0 0.0
  %2613 = vmatpush1.xpose.msra.mxu0 %v2578
  %2614 = vmatprep.subr.mxu0 0.0
  %2615 = vmatpush1.xpose.msra.mxu0 %v2576
  %2616 = vmatprep.subr.mxu0 0.0
  %2617 = vmatpush1.xpose.msra.mxu0 %v2574
  %2618 = vmatprep.subr.mxu0 0.0
  %2619 = vmatpush1.xpose.msra.mxu0 %v2572
  %2620 = vmatprep.subr.mxu0 0.0
  %2621 = vmatpush1.xpose.msra.mxu0 %v2570
  %2622 = vmatprep.subr.mxu0 0.0
  %2623 = vmatpush1.xpose.msra.mxu0 %v2568
  %2624 = vmatprep.subr.mxu0 0.0
  %2625 = vmatpush1.xpose.msra.mxu0 %v2566
  %2626 = vmatprep.subr.mxu0 0.0
  %2627 = vmatpush1.xpose.msra.mxu0 %v2564
  %2628 = vmatprep.subr.mxu0 0.0
  %2629 = vmatpush2.xpose.msra.mxu0 0.0
  %2630 = vmatprep.subr.mxu0 0.0
  %2631 = vmatpush2.xpose.msra.mxu0 0.0
  %2632 = vmatprep.subr.mxu0 0.0
  %2633 = vmatpush2.xpose.msra.mxu0 0.0
  %2634 = vmatprep.subr.mxu0 0.0
  %2635 = vmatpush2.xpose.msra.mxu0 0.0
  %2636 = vmatprep.subr.mxu0 0.0
  %2637 = vmatpush2.xpose.msra.mxu0 0.0
  %2638 = vmatprep.subr.mxu0 0.0
  %2639 = vmatpush2.xpose.msra.mxu0 0.0
  %2640 = vmatprep.subr.mxu0 0.0
  %2641 = vmatpush2.xpose.msra.mxu0 0.0
  %2642 = vmatprep.subr.mxu0 0.0
  %2643 = vmatpush2.xpose.msra.mxu0 0.0
  %2644 = vmatprep.subr.mxu0 0.0
  %2645 = vmatpush2.xpose.msra.mxu0 0.0
  %2646 = vmatprep.subr.mxu0 0.0
  %2647 = vmatpush2.xpose.msra.mxu0 0.0
  %2648 = vmatprep.subr.mxu0 0.0
  %2649 = vmatpush2.xpose.msra.mxu0 0.0
  %2650 = vmatprep.subr.mxu0 0.0
  %2651 = vmatpush2.xpose.msra.mxu0 0.0
  %2652 = vmatprep.subr.mxu0 0.0
  %2653 = vmatpush2.xpose.msra.mxu0 0.0
  %2654 = vmatprep.subr.mxu0 0.0
  %2655 = vmatpush2.xpose.msra.mxu0 0.0
  %2656 = vmatprep.subr.mxu0 0.0
  %2657 = vmatpush2.xpose.msra.mxu0 0.0
  %2658 = vmatprep.subr.mxu0 0.0
  %2659 = vmatpush2.xpose.msra.mxu0 0.0
  %2660 = vmatprep.mubr.f32.mxu0 0.0
  %2661 = vmatmul.mubr.f32.gmra.mxu0 %v2562
  %v2662 = vpop.f32.mrf.mxu0
  %v2663 = vadd.f32 0.0, %v2662
  %v2664 = vpop.f32.mrf.mxu0
  %2665 = vdwg.mxu0
  %v2666 = vlaneseq
  %v2667 = vshrl.u32 %v2666, 7
  %v2668 = vsub.s32 1, %v2667
  %v2669 = vrot.slane %v1736, %v2668
  %2671 = vrot.lane.b32.xlu0 %v2669, 32
  %v2672 = vpop.permute.xlu0 %2671
  %v2674 = vmul.f32 %v1809, %v2672
  %v2675 = vmul.f32 %v1812, %v2672
  %v2676 = vmul.f32 %v1817, %v2672
  %v2677 = vmul.f32 %v1820, %v2672
  %v2678 = vmul.f32 %v1825, %v2672
  %v2679 = vmul.f32 %v1828, %v2672
  %v2680 = vmul.f32 %v1833, %v2672
  %v2681 = vmul.f32 %v1836, %v2672
  %v2682 = vmul.f32 %v1841, %v2672
  %v2683 = vmul.f32 %v1844, %v2672
  %v2684 = vmul.f32 %v1849, %v2672
  %v2685 = vmul.f32 %v1852, %v2672
  %v2686 = vmul.f32 %v1857, %v2672
  %v2687 = vmul.f32 %v1860, %v2672
  %v2688 = vmul.f32 %v1865, %v2672
  %v2689 = vmul.f32 %v1868, %v2672
  %2706 = vrot.lane.b32.xlu0 %v2674, 96
  %v2707 = vpop.permute.xlu0 %2706
  %2708 = vrot.lane.b32.xlu0 %v2675, 96
  %v2709 = vpop.permute.xlu0 %2708
  %2710 = vrot.lane.b32.xlu0 %v2676, 96
  %v2711 = vpop.permute.xlu0 %2710
  %2712 = vrot.lane.b32.xlu0 %v2677, 96
  %v2713 = vpop.permute.xlu0 %2712
  %2714 = vrot.lane.b32.xlu0 %v2678, 96
  %v2715 = vpop.permute.xlu0 %2714
  %2716 = vrot.lane.b32.xlu0 %v2679, 96
  %v2717 = vpop.permute.xlu0 %2716
  %2718 = vrot.lane.b32.xlu0 %v2680, 96
  %v2719 = vpop.permute.xlu0 %2718
  %2720 = vrot.lane.b32.xlu0 %v2681, 96
  %v2721 = vpop.permute.xlu0 %2720
  %2722 = vrot.lane.b32.xlu0 %v2682, 96
  %v2723 = vpop.permute.xlu0 %2722
  %2724 = vrot.lane.b32.xlu0 %v2683, 96
  %v2725 = vpop.permute.xlu0 %2724
  %2726 = vrot.lane.b32.xlu0 %v2684, 96
  %v2727 = vpop.permute.xlu0 %2726
  %2728 = vrot.lane.b32.xlu0 %v2685, 96
  %v2729 = vpop.permute.xlu0 %2728
  %2730 = vrot.lane.b32.xlu0 %v2686, 96
  %v2731 = vpop.permute.xlu0 %2730
  %2732 = vrot.lane.b32.xlu0 %v2687, 96
  %v2733 = vpop.permute.xlu0 %2732
  %2734 = vrot.lane.b32.xlu0 %v2688, 96
  %v2735 = vpop.permute.xlu0 %2734
  %2736 = vrot.lane.b32.xlu0 %v2689, 96
  %v2737 = vpop.permute.xlu0 %2736
  %v2754 = vsel %vm222, %v2707, 0.0
  %2755 = vadd.xlane.f32.xlu0 %v2754
  %v2756 = vpop.xlane.xlu0 %2755
  %v2757 = vsel %vm222, %v2709, 0.0
  %2758 = vadd.xlane.f32.xlu0 %v2757
  %v2759 = vpop.xlane.xlu0 %2758
  %v2760 = vsel %vm222, %v2711, 0.0
  %2761 = vadd.xlane.f32.xlu0 %v2760
  %v2762 = vpop.xlane.xlu0 %2761
  %v2763 = vsel %vm222, %v2713, 0.0
  %2764 = vadd.xlane.f32.xlu0 %v2763
  %v2765 = vpop.xlane.xlu0 %2764
  %v2766 = vsel %vm222, %v2715, 0.0
  %2767 = vadd.xlane.f32.xlu0 %v2766
  %v2768 = vpop.xlane.xlu0 %2767
  %v2769 = vsel %vm222, %v2717, 0.0
  %2770 = vadd.xlane.f32.xlu0 %v2769
  %v2771 = vpop.xlane.xlu0 %2770
  %v2772 = vsel %vm222, %v2719, 0.0
  %2773 = vadd.xlane.f32.xlu0 %v2772
  %v2774 = vpop.xlane.xlu0 %2773
  %v2775 = vsel %vm222, %v2721, 0.0
  %2776 = vadd.xlane.f32.xlu0 %v2775
  %v2777 = vpop.xlane.xlu0 %2776
  %v2778 = vsel %vm222, %v2723, 0.0
  %2779 = vadd.xlane.f32.xlu0 %v2778
  %v2780 = vpop.xlane.xlu0 %2779
  %v2781 = vsel %vm222, %v2725, 0.0
  %2782 = vadd.xlane.f32.xlu0 %v2781
  %v2783 = vpop.xlane.xlu0 %2782
  %v2784 = vsel %vm222, %v2727, 0.0
  %2785 = vadd.xlane.f32.xlu0 %v2784
  %v2786 = vpop.xlane.xlu0 %2785
  %v2787 = vsel %vm222, %v2729, 0.0
  %2788 = vadd.xlane.f32.xlu0 %v2787
  %v2789 = vpop.xlane.xlu0 %2788
  %v2790 = vsel %vm222, %v2731, 0.0
  %2791 = vadd.xlane.f32.xlu0 %v2790
  %v2792 = vpop.xlane.xlu0 %2791
  %v2793 = vsel %vm222, %v2733, 0.0
  %2794 = vadd.xlane.f32.xlu0 %v2793
  %v2795 = vpop.xlane.xlu0 %2794
  %v2796 = vsel %vm222, %v2735, 0.0
  %2797 = vadd.xlane.f32.xlu0 %v2796
  %v2798 = vpop.xlane.xlu0 %2797
  %v2799 = vsel %vm222, %v2737, 0.0
  %2800 = vadd.xlane.f32.xlu0 %v2799
  %v2801 = vpop.xlane.xlu0 %2800
  %v2802 = vlaneseq
  %v2803 = vshrl.u32 %v2802, 7
  %v2804 = vsub.s32 0, %v2803
  %v2805 = vrot.slane %v2663, %v2804
  %v2806 = vadd.f32 %v2756, %v2805
  %v2807 = vadd.f32 %v2759, %v2805
  %v2808 = vadd.f32 %v2762, %v2805
  %v2809 = vadd.f32 %v2765, %v2805
  %v2810 = vadd.f32 %v2768, %v2805
  %v2811 = vadd.f32 %v2771, %v2805
  %v2812 = vadd.f32 %v2774, %v2805
  %v2813 = vadd.f32 %v2777, %v2805
  %v2814 = vadd.f32 %v2780, %v2805
  %v2815 = vadd.f32 %v2783, %v2805
  %v2816 = vadd.f32 %v2786, %v2805
  %v2817 = vadd.f32 %v2789, %v2805
  %v2818 = vadd.f32 %v2792, %v2805
  %v2819 = vadd.f32 %v2795, %v2805
  %v2820 = vadd.f32 %v2798, %v2805
  %v2821 = vadd.f32 %v2801, %v2805
  %v2822 = vmul.f32 %v2806, 0.2
  %v2823 = vmul.f32 %v2807, 0.2
  %v2824 = vmul.f32 %v2808, 0.2
  %v2825 = vmul.f32 %v2809, 0.2
  %v2826 = vmul.f32 %v2810, 0.2
  %v2827 = vmul.f32 %v2811, 0.2
  %v2828 = vmul.f32 %v2812, 0.2
  %v2829 = vmul.f32 %v2813, 0.2
  %v2830 = vmul.f32 %v2814, 0.2
  %v2831 = vmul.f32 %v2815, 0.2
  %v2832 = vmul.f32 %v2816, 0.2
  %v2833 = vmul.f32 %v2817, 0.2
  %v2834 = vmul.f32 %v2818, 0.2
  %v2835 = vmul.f32 %v2819, 0.2
  %v2836 = vmul.f32 %v2820, 0.2
  %v2837 = vmul.f32 %v2821, 0.2
  %v2838 = vmax.f32 %v2806, %v2822
  %v2839 = vmax.f32 %v2807, %v2823
  %v2840 = vmax.f32 %v2808, %v2824
  %v2841 = vmax.f32 %v2809, %v2825
  %v2842 = vmax.f32 %v2810, %v2826
  %v2843 = vmax.f32 %v2811, %v2827
  %v2844 = vmax.f32 %v2812, %v2828
  %v2845 = vmax.f32 %v2813, %v2829
  %v2846 = vmax.f32 %v2814, %v2830
  %v2847 = vmax.f32 %v2815, %v2831
  %v2848 = vmax.f32 %v2816, %v2832
  %v2849 = vmax.f32 %v2817, %v2833
  %v2850 = vmax.f32 %v2818, %v2834
  %v2851 = vmax.f32 %v2819, %v2835
  %v2852 = vmax.f32 %v2820, %v2836
  %v2853 = vmax.f32 %v2821, %v2837
  %v2854 = vsel %vm55, %v2838, -1e+30
  %v2855 = vsel %vm56, %v2839, -1e+30
  %v2856 = vsel %vm57, %v2840, -1e+30
  %v2857 = vsel %vm58, %v2841, -1e+30
  %v2858 = vsel %vm59, %v2842, -1e+30
  %v2859 = vsel %vm60, %v2843, -1e+30
  %v2860 = vsel %vm61, %v2844, -1e+30
  %v2861 = vsel %vm62, %v2845, -1e+30
  %v2862 = vsel %vm63, %v2846, -1e+30
  %v2863 = vsel %vm64, %v2847, -1e+30
  %v2864 = vsel %vm65, %v2848, -1e+30
  %v2865 = vsel %vm66, %v2849, -1e+30
  %v2866 = vsel %vm67, %v2850, -1e+30
  %v2867 = vsel %vm68, %v2851, -1e+30
  %v2868 = vsel %vm69, %v2852, -1e+30
  %v2869 = vsel %vm70, %v2853, -1e+30
  %2870 = vmax.xlane.f32.xlu0 %v2854
  %v2871 = vpop.xlane.xlu0 %2870
  %2872 = vmax.xlane.f32.xlu0 %v2855
  %v2873 = vpop.xlane.xlu0 %2872
  %2874 = vmax.xlane.f32.xlu0 %v2856
  %v2875 = vpop.xlane.xlu0 %2874
  %2876 = vmax.xlane.f32.xlu0 %v2857
  %v2877 = vpop.xlane.xlu0 %2876
  %2878 = vmax.xlane.f32.xlu0 %v2858
  %v2879 = vpop.xlane.xlu0 %2878
  %2880 = vmax.xlane.f32.xlu0 %v2859
  %v2881 = vpop.xlane.xlu0 %2880
  %2882 = vmax.xlane.f32.xlu0 %v2860
  %v2883 = vpop.xlane.xlu0 %2882
  %2884 = vmax.xlane.f32.xlu0 %v2861
  %v2885 = vpop.xlane.xlu0 %2884
  %2886 = vmax.xlane.f32.xlu0 %v2862
  %v2887 = vpop.xlane.xlu0 %2886
  %2888 = vmax.xlane.f32.xlu0 %v2863
  %v2889 = vpop.xlane.xlu0 %2888
  %2890 = vmax.xlane.f32.xlu0 %v2864
  %v2891 = vpop.xlane.xlu0 %2890
  %2892 = vmax.xlane.f32.xlu0 %v2865
  %v2893 = vpop.xlane.xlu0 %2892
  %2894 = vmax.xlane.f32.xlu0 %v2866
  %v2895 = vpop.xlane.xlu0 %2894
  %2896 = vmax.xlane.f32.xlu0 %v2867
  %v2897 = vpop.xlane.xlu0 %2896
  %2898 = vmax.xlane.f32.xlu0 %v2868
  %v2899 = vpop.xlane.xlu0 %2898
  %2900 = vmax.xlane.f32.xlu0 %v2869
  %v2901 = vpop.xlane.xlu0 %2900
  %v2902 = vsub.f32 %v2854, %v2871
  %v2903 = vsub.f32 %v2855, %v2873
  %v2904 = vsub.f32 %v2856, %v2875
  %v2905 = vsub.f32 %v2857, %v2877
  %v2906 = vsub.f32 %v2858, %v2879
  %v2907 = vsub.f32 %v2859, %v2881
  %v2908 = vsub.f32 %v2860, %v2883
  %v2909 = vsub.f32 %v2861, %v2885
  %v2910 = vsub.f32 %v2862, %v2887
  %v2911 = vsub.f32 %v2863, %v2889
  %v2912 = vsub.f32 %v2864, %v2891
  %v2913 = vsub.f32 %v2865, %v2893
  %v2914 = vsub.f32 %v2866, %v2895
  %v2915 = vsub.f32 %v2867, %v2897
  %v2916 = vsub.f32 %v2868, %v2899
  %v2917 = vsub.f32 %v2869, %v2901
  %v2918 = vmul.f32 %v2902, 1.442695
  %v2919 = vpow.pop %v2918
  %v2920 = vmul.f32 %v2903, 1.442695
  %v2921 = vpow.pop %v2920
  %v2922 = vmul.f32 %v2904, 1.442695
  %v2923 = vpow.pop %v2922
  %v2924 = vmul.f32 %v2905, 1.442695
  %v2925 = vpow.pop %v2924
  %v2926 = vmul.f32 %v2906, 1.442695
  %v2927 = vpow.pop %v2926
  %v2928 = vmul.f32 %v2907, 1.442695
  %v2929 = vpow.pop %v2928
  %v2930 = vmul.f32 %v2908, 1.442695
  %v2931 = vpow.pop %v2930
  %v2932 = vmul.f32 %v2909, 1.442695
  %v2933 = vpow.pop %v2932
  %v2934 = vmul.f32 %v2910, 1.442695
  %v2935 = vpow.pop %v2934
  %v2936 = vmul.f32 %v2911, 1.442695
  %v2937 = vpow.pop %v2936
  %v2938 = vmul.f32 %v2912, 1.442695
  %v2939 = vpow.pop %v2938
  %v2940 = vmul.f32 %v2913, 1.442695
  %v2941 = vpow.pop %v2940
  %v2942 = vmul.f32 %v2914, 1.442695
  %v2943 = vpow.pop %v2942
  %v2944 = vmul.f32 %v2915, 1.442695
  %v2945 = vpow.pop %v2944
  %v2946 = vmul.f32 %v2916, 1.442695
  %v2947 = vpow.pop %v2946
  %v2948 = vmul.f32 %v2917, 1.442695
  %v2949 = vpow.pop %v2948
  %v2950 = vsel %vm55, %v2919, 0.0
  %v2951 = vsel %vm56, %v2921, 0.0
  %v2952 = vsel %vm57, %v2923, 0.0
  %v2953 = vsel %vm58, %v2925, 0.0
  %v2954 = vsel %vm59, %v2927, 0.0
  %v2955 = vsel %vm60, %v2929, 0.0
  %v2956 = vsel %vm61, %v2931, 0.0
  %v2957 = vsel %vm62, %v2933, 0.0
  %v2958 = vsel %vm63, %v2935, 0.0
  %v2959 = vsel %vm64, %v2937, 0.0
  %v2960 = vsel %vm65, %v2939, 0.0
  %v2961 = vsel %vm66, %v2941, 0.0
  %v2962 = vsel %vm67, %v2943, 0.0
  %v2963 = vsel %vm68, %v2945, 0.0
  %v2964 = vsel %vm69, %v2947, 0.0
  %v2965 = vsel %vm70, %v2949, 0.0
  %2966 = vadd.xlane.f32.xlu0 %v2950
  %v2967 = vpop.xlane.xlu0 %2966
  %2968 = vadd.xlane.f32.xlu0 %v2951
  %v2969 = vpop.xlane.xlu0 %2968
  %2970 = vadd.xlane.f32.xlu0 %v2952
  %v2971 = vpop.xlane.xlu0 %2970
  %2972 = vadd.xlane.f32.xlu0 %v2953
  %v2973 = vpop.xlane.xlu0 %2972
  %2974 = vadd.xlane.f32.xlu0 %v2954
  %v2975 = vpop.xlane.xlu0 %2974
  %2976 = vadd.xlane.f32.xlu0 %v2955
  %v2977 = vpop.xlane.xlu0 %2976
  %2978 = vadd.xlane.f32.xlu0 %v2956
  %v2979 = vpop.xlane.xlu0 %2978
  %2980 = vadd.xlane.f32.xlu0 %v2957
  %v2981 = vpop.xlane.xlu0 %2980
  %2982 = vadd.xlane.f32.xlu0 %v2958
  %v2983 = vpop.xlane.xlu0 %2982
  %2984 = vadd.xlane.f32.xlu0 %v2959
  %v2985 = vpop.xlane.xlu0 %2984
  %2986 = vadd.xlane.f32.xlu0 %v2960
  %v2987 = vpop.xlane.xlu0 %2986
  %2988 = vadd.xlane.f32.xlu0 %v2961
  %v2989 = vpop.xlane.xlu0 %2988
  %2990 = vadd.xlane.f32.xlu0 %v2962
  %v2991 = vpop.xlane.xlu0 %2990
  %2992 = vadd.xlane.f32.xlu0 %v2963
  %v2993 = vpop.xlane.xlu0 %2992
  %2994 = vadd.xlane.f32.xlu0 %v2964
  %v2995 = vpop.xlane.xlu0 %2994
  %2996 = vadd.xlane.f32.xlu0 %v2965
  %v2997 = vpop.xlane.xlu0 %2996
  %vm2998 = vcmp.le.f32.partialorder %v2967, 0.0
  %vm2999 = vcmp.le.f32.partialorder %v2969, 0.0
  %vm3000 = vcmp.le.f32.partialorder %v2971, 0.0
  %vm3001 = vcmp.le.f32.partialorder %v2973, 0.0
  %vm3002 = vcmp.le.f32.partialorder %v2975, 0.0
  %vm3003 = vcmp.le.f32.partialorder %v2977, 0.0
  %vm3004 = vcmp.le.f32.partialorder %v2979, 0.0
  %vm3005 = vcmp.le.f32.partialorder %v2981, 0.0
  %vm3006 = vcmp.le.f32.partialorder %v2983, 0.0
  %vm3007 = vcmp.le.f32.partialorder %v2985, 0.0
  %vm3008 = vcmp.le.f32.partialorder %v2987, 0.0
  %vm3009 = vcmp.le.f32.partialorder %v2989, 0.0
  %vm3010 = vcmp.le.f32.partialorder %v2991, 0.0
  %vm3011 = vcmp.le.f32.partialorder %v2993, 0.0
  %vm3012 = vcmp.le.f32.partialorder %v2995, 0.0
  %vm3013 = vcmp.le.f32.partialorder %v2997, 0.0
  %v3014 = vsel %vm2998, 1.0, %v2967
  %v3015 = vsel %vm2999, 1.0, %v2969
  %v3016 = vsel %vm3000, 1.0, %v2971
  %v3017 = vsel %vm3001, 1.0, %v2973
  %v3018 = vsel %vm3002, 1.0, %v2975
  %v3019 = vsel %vm3003, 1.0, %v2977
  %v3020 = vsel %vm3004, 1.0, %v2979
  %v3021 = vsel %vm3005, 1.0, %v2981
  %v3022 = vsel %vm3006, 1.0, %v2983
  %v3023 = vsel %vm3007, 1.0, %v2985
  %v3024 = vsel %vm3008, 1.0, %v2987
  %v3025 = vsel %vm3009, 1.0, %v2989
  %v3026 = vsel %vm3010, 1.0, %v2991
  %v3027 = vsel %vm3011, 1.0, %v2993
  %v3028 = vsel %vm3012, 1.0, %v2995
  %v3029 = vsel %vm3013, 1.0, %v2997
  %v3030 = vrcp.pop %v3014
  %v3031 = vrcp.pop %v3015
  %v3032 = vrcp.pop %v3016
  %v3033 = vrcp.pop %v3017
  %v3034 = vrcp.pop %v3018
  %v3035 = vrcp.pop %v3019
  %v3036 = vrcp.pop %v3020
  %v3037 = vrcp.pop %v3021
  %v3038 = vrcp.pop %v3022
  %v3039 = vrcp.pop %v3023
  %v3040 = vrcp.pop %v3024
  %v3041 = vrcp.pop %v3025
  %v3042 = vrcp.pop %v3026
  %v3043 = vrcp.pop %v3027
  %v3044 = vrcp.pop %v3028
  %v3045 = vrcp.pop %v3029
  %v3046 = vmul.f32 %v2950, %v3030
  %v3047 = vmul.f32 %v2951, %v3031
  %v3048 = vmul.f32 %v2952, %v3032
  %v3049 = vmul.f32 %v2953, %v3033
  %v3050 = vmul.f32 %v2954, %v3034
  %v3051 = vmul.f32 %v2955, %v3035
  %v3052 = vmul.f32 %v2956, %v3036
  %v3053 = vmul.f32 %v2957, %v3037
  %v3054 = vmul.f32 %v2958, %v3038
  %v3055 = vmul.f32 %v2959, %v3039
  %v3056 = vmul.f32 %v2960, %v3040
  %v3057 = vmul.f32 %v2961, %v3041
  %v3058 = vmul.f32 %v2962, %v3042
  %v3059 = vmul.f32 %v2963, %v3043
  %v3060 = vmul.f32 %v2964, %v3044
  %v3061 = vmul.f32 %v2965, %v3045
  %v3062 = vpack.c.bf16 %v3047, %v3046
  %v3063 = vpack.c.bf16 %v3049, %v3048
  %v3064 = vpack.c.bf16 %v3051, %v3050
  %v3065 = vpack.c.bf16 %v3053, %v3052
  %v3066 = vpack.c.bf16 %v3055, %v3054
  %v3067 = vpack.c.bf16 %v3057, %v3056
  %v3068 = vpack.c.bf16 %v3059, %v3058
  %v3069 = vpack.c.bf16 %v3061, %v3060
  %3078 = vrot.lane.b32.xlu0 %v2328, 96
  %v3079 = vpop.permute.xlu0 %3078
  %3080 = vrot.lane.b32.xlu0 %v2329, 96
  %v3081 = vpop.permute.xlu0 %3080
  %3082 = vrot.lane.b32.xlu0 %v2330, 96
  %v3083 = vpop.permute.xlu0 %3082
  %3084 = vrot.lane.b32.xlu0 %v2331, 96
  %v3085 = vpop.permute.xlu0 %3084
  %3086 = vrot.lane.b32.xlu0 %v2332, 96
  %v3087 = vpop.permute.xlu0 %3086
  %3088 = vrot.lane.b32.xlu0 %v2333, 96
  %v3089 = vpop.permute.xlu0 %3088
  %3090 = vrot.lane.b32.xlu0 %v2334, 96
  %v3091 = vpop.permute.xlu0 %3090
  %3092 = vrot.lane.b32.xlu0 %v2335, 96
  %v3093 = vpop.permute.xlu0 %3092
  %3102 = vmatprep.subr.bf16.mxu0 0
  %3103 = vmatpush1.bf16.msra.mxu0 %v3093
  %3104 = vmatprep.subr.bf16.mxu0 0
  %3105 = vmatpush1.bf16.msra.mxu0 %v3091
  %3106 = vmatprep.subr.bf16.mxu0 0
  %3107 = vmatpush1.bf16.msra.mxu0 %v3089
  %3108 = vmatprep.subr.bf16.mxu0 0
  %3109 = vmatpush1.bf16.msra.mxu0 %v3087
  %3110 = vmatprep.subr.bf16.mxu0 0
  %3111 = vmatpush1.bf16.msra.mxu0 %v3085
  %3112 = vmatprep.subr.bf16.mxu0 0
  %3113 = vmatpush1.bf16.msra.mxu0 %v3083
  %3114 = vmatprep.subr.bf16.mxu0 0
  %3115 = vmatpush1.bf16.msra.mxu0 %v3081
  %3116 = vmatprep.subr.bf16.mxu0 0
  %3117 = vmatpush1.bf16.msra.mxu0 %v3079
  %3118 = vmatprep.subr.bf16.mxu0 0
  %3119 = vmatpush2.bf16.msra.mxu0 0
  %3120 = vmatprep.subr.bf16.mxu0 0
  %3121 = vmatpush2.bf16.msra.mxu0 0
  %3122 = vmatprep.subr.bf16.mxu0 0
  %3123 = vmatpush2.bf16.msra.mxu0 0
  %3124 = vmatprep.subr.bf16.mxu0 0
  %3125 = vmatpush2.bf16.msra.mxu0 0
  %3126 = vmatprep.subr.bf16.mxu0 0
  %3127 = vmatpush2.bf16.msra.mxu0 0
  %3128 = vmatprep.subr.bf16.mxu0 0
  %3129 = vmatpush2.bf16.msra.mxu0 0
  %3130 = vmatprep.subr.bf16.mxu0 0
  %3131 = vmatpush2.bf16.msra.mxu0 0
  %3132 = vmatprep.subr.bf16.mxu0 0
  %3133 = vmatpush2.bf16.msra.mxu0 0
  %3134 = vmatprep.mubr.bf16.mxu0 0
  %3135 = vmatmul.mubr.bf16.gmra.mxu0 %v3062
  %v3136 = vpop.f32.mrf.mxu0
  %v3137 = vadd.f32 0.0, %v3136
  %v3138 = vpop.f32.mrf.mxu0
  %v3139 = vpop.f32.mrf.mxu0
  %v3140 = vadd.f32 0.0, %v3139
  %v3141 = vpop.f32.mrf.mxu0
  %3142 = vmatprep.mubr.bf16.mxu0 0
  %3143 = vmatmul.mubr.bf16.gmra.mxu0 %v3063
  %v3144 = vpop.f32.mrf.mxu0
  %v3145 = vadd.f32 0.0, %v3144
  %v3146 = vpop.f32.mrf.mxu0
  %v3147 = vpop.f32.mrf.mxu0
  %v3148 = vadd.f32 0.0, %v3147
  %v3149 = vpop.f32.mrf.mxu0
  %3150 = vmatprep.mubr.bf16.mxu0 0
  %3151 = vmatmul.mubr.bf16.gmra.mxu0 %v3064
  %v3152 = vpop.f32.mrf.mxu0
  %v3153 = vadd.f32 0.0, %v3152
  %v3154 = vpop.f32.mrf.mxu0
  %v3155 = vpop.f32.mrf.mxu0
  %v3156 = vadd.f32 0.0, %v3155
  %v3157 = vpop.f32.mrf.mxu0
  %3158 = vmatprep.mubr.bf16.mxu0 0
  %3159 = vmatmul.mubr.bf16.gmra.mxu0 %v3065
  %v3160 = vpop.f32.mrf.mxu0
  %v3161 = vadd.f32 0.0, %v3160
  %v3162 = vpop.f32.mrf.mxu0
  %v3163 = vpop.f32.mrf.mxu0
  %v3164 = vadd.f32 0.0, %v3163
  %v3165 = vpop.f32.mrf.mxu0
  %3166 = vmatprep.mubr.bf16.mxu0 0
  %3167 = vmatmul.mubr.bf16.gmra.mxu0 %v3066
  %v3168 = vpop.f32.mrf.mxu0
  %v3169 = vadd.f32 0.0, %v3168
  %v3170 = vpop.f32.mrf.mxu0
  %v3171 = vpop.f32.mrf.mxu0
  %v3172 = vadd.f32 0.0, %v3171
  %v3173 = vpop.f32.mrf.mxu0
  %3174 = vmatprep.mubr.bf16.mxu0 0
  %3175 = vmatmul.mubr.bf16.gmra.mxu0 %v3067
  %v3176 = vpop.f32.mrf.mxu0
  %v3177 = vadd.f32 0.0, %v3176
  %v3178 = vpop.f32.mrf.mxu0
  %v3179 = vpop.f32.mrf.mxu0
  %v3180 = vadd.f32 0.0, %v3179
  %v3181 = vpop.f32.mrf.mxu0
  %3182 = vmatprep.mubr.bf16.mxu0 0
  %3183 = vmatmul.mubr.bf16.gmra.mxu0 %v3068
  %v3184 = vpop.f32.mrf.mxu0
  %v3185 = vadd.f32 0.0, %v3184
  %v3186 = vpop.f32.mrf.mxu0
  %v3187 = vpop.f32.mrf.mxu0
  %v3188 = vadd.f32 0.0, %v3187
  %v3189 = vpop.f32.mrf.mxu0
  %3190 = vmatprep.mubr.bf16.mxu0 0
  %3191 = vmatmul.mubr.bf16.gmra.mxu0 %v3069
  %v3192 = vpop.f32.mrf.mxu0
  %v3193 = vadd.f32 0.0, %v3192
  %v3194 = vpop.f32.mrf.mxu0
  %v3195 = vpop.f32.mrf.mxu0
  %v3196 = vadd.f32 0.0, %v3195
  %v3197 = vpop.f32.mrf.mxu0
  %3198 = vdwg.mxu0
  %vm3199 = vcmp.gt.f32.partialorder %v3137, 0.0
  %vm3200 = vcmp.gt.f32.partialorder %v3140, 0.0
  %vm3201 = vcmp.gt.f32.partialorder %v3145, 0.0
  %vm3202 = vcmp.gt.f32.partialorder %v3148, 0.0
  %vm3203 = vcmp.gt.f32.partialorder %v3153, 0.0
  %vm3204 = vcmp.gt.f32.partialorder %v3156, 0.0
  %vm3205 = vcmp.gt.f32.partialorder %v3161, 0.0
  %vm3206 = vcmp.gt.f32.partialorder %v3164, 0.0
  %vm3207 = vcmp.gt.f32.partialorder %v3169, 0.0
  %vm3208 = vcmp.gt.f32.partialorder %v3172, 0.0
  %vm3209 = vcmp.gt.f32.partialorder %v3177, 0.0
  %vm3210 = vcmp.gt.f32.partialorder %v3180, 0.0
  %vm3211 = vcmp.gt.f32.partialorder %v3185, 0.0
  %vm3212 = vcmp.gt.f32.partialorder %v3188, 0.0
  %vm3213 = vcmp.gt.f32.partialorder %v3193, 0.0
  %vm3214 = vcmp.gt.f32.partialorder %v3196, 0.0
  %v3215 = vmin.f32 %v3137, 0.0
  %v3216 = vmin.f32 %v3140, 0.0
  %v3217 = vmin.f32 %v3145, 0.0
  %v3218 = vmin.f32 %v3148, 0.0
  %v3219 = vmin.f32 %v3153, 0.0
  %v3220 = vmin.f32 %v3156, 0.0
  %v3221 = vmin.f32 %v3161, 0.0
  %v3222 = vmin.f32 %v3164, 0.0
  %v3223 = vmin.f32 %v3169, 0.0
  %v3224 = vmin.f32 %v3172, 0.0
  %v3225 = vmin.f32 %v3177, 0.0
  %v3226 = vmin.f32 %v3180, 0.0
  %v3227 = vmin.f32 %v3185, 0.0
  %v3228 = vmin.f32 %v3188, 0.0
  %v3229 = vmin.f32 %v3193, 0.0
  %v3230 = vmin.f32 %v3196, 0.0
  %v3231 = vmul.f32 %v3215, 1.442695
  %v3232 = vpow.pop %v3231
  %v3233 = vmul.f32 %v3216, 1.442695
  %v3234 = vpow.pop %v3233
  %v3235 = vmul.f32 %v3217, 1.442695
  %v3236 = vpow.pop %v3235
  %v3237 = vmul.f32 %v3218, 1.442695
  %v3238 = vpow.pop %v3237
  %v3239 = vmul.f32 %v3219, 1.442695
  %v3240 = vpow.pop %v3239
  %v3241 = vmul.f32 %v3220, 1.442695
  %v3242 = vpow.pop %v3241
  %v3243 = vmul.f32 %v3221, 1.442695
  %v3244 = vpow.pop %v3243
  %v3245 = vmul.f32 %v3222, 1.442695
  %v3246 = vpow.pop %v3245
  %v3247 = vmul.f32 %v3223, 1.442695
  %v3248 = vpow.pop %v3247
  %v3249 = vmul.f32 %v3224, 1.442695
  %v3250 = vpow.pop %v3249
  %v3251 = vmul.f32 %v3225, 1.442695
  %v3252 = vpow.pop %v3251
  %v3253 = vmul.f32 %v3226, 1.442695
  %v3254 = vpow.pop %v3253
  %v3255 = vmul.f32 %v3227, 1.442695
  %v3256 = vpow.pop %v3255
  %v3257 = vmul.f32 %v3228, 1.442695
  %v3258 = vpow.pop %v3257
  %v3259 = vmul.f32 %v3229, 1.442695
  %v3260 = vpow.pop %v3259
  %v3261 = vmul.f32 %v3230, 1.442695
  %v3262 = vpow.pop %v3261
  %v3263 = vsub.f32 %v3232, 1.0
  %v3264 = vsub.f32 %v3234, 1.0
  %v3265 = vsub.f32 %v3236, 1.0
  %v3266 = vsub.f32 %v3238, 1.0
  %v3267 = vsub.f32 %v3240, 1.0
  %v3268 = vsub.f32 %v3242, 1.0
  %v3269 = vsub.f32 %v3244, 1.0
  %v3270 = vsub.f32 %v3246, 1.0
  %v3271 = vsub.f32 %v3248, 1.0
  %v3272 = vsub.f32 %v3250, 1.0
  %v3273 = vsub.f32 %v3252, 1.0
  %v3274 = vsub.f32 %v3254, 1.0
  %v3275 = vsub.f32 %v3256, 1.0
  %v3276 = vsub.f32 %v3258, 1.0
  %v3277 = vsub.f32 %v3260, 1.0
  %v3278 = vsub.f32 %v3262, 1.0
  %v3279 = vsel %vm3199, %v3137, %v3263
  %v3280 = vsel %vm3200, %v3140, %v3264
  %v3281 = vsel %vm3201, %v3145, %v3265
  %v3282 = vsel %vm3202, %v3148, %v3266
  %v3283 = vsel %vm3203, %v3153, %v3267
  %v3284 = vsel %vm3204, %v3156, %v3268
  %v3285 = vsel %vm3205, %v3161, %v3269
  %v3286 = vsel %vm3206, %v3164, %v3270
  %v3287 = vsel %vm3207, %v3169, %v3271
  %v3288 = vsel %vm3208, %v3172, %v3272
  %v3289 = vsel %vm3209, %v3177, %v3273
  %v3290 = vsel %vm3210, %v3180, %v3274
  %v3291 = vsel %vm3211, %v3185, %v3275
  %v3292 = vsel %vm3212, %v3188, %v3276
  %v3293 = vsel %vm3213, %v3193, %v3277
  %v3294 = vsel %vm3214, %v3196, %v3278
  %3311 = vrot.lane.b32.xlu0 %v3279, 32
  %v3312 = vpop.permute.xlu0 %3311
  %3313 = vrot.lane.b32.xlu0 %v3280, 32
  %v3314 = vpop.permute.xlu0 %3313
  %3315 = vrot.lane.b32.xlu0 %v3281, 32
  %v3316 = vpop.permute.xlu0 %3315
  %3317 = vrot.lane.b32.xlu0 %v3282, 32
  %v3318 = vpop.permute.xlu0 %3317
  %3319 = vrot.lane.b32.xlu0 %v3283, 32
  %v3320 = vpop.permute.xlu0 %3319
  %3321 = vrot.lane.b32.xlu0 %v3284, 32
  %v3322 = vpop.permute.xlu0 %3321
  %3323 = vrot.lane.b32.xlu0 %v3285, 32
  %v3324 = vpop.permute.xlu0 %3323
  %3325 = vrot.lane.b32.xlu0 %v3286, 32
  %v3326 = vpop.permute.xlu0 %3325
  %3327 = vrot.lane.b32.xlu0 %v3287, 32
  %v3328 = vpop.permute.xlu0 %3327
  %3329 = vrot.lane.b32.xlu0 %v3288, 32
  %v3330 = vpop.permute.xlu0 %3329
  %3331 = vrot.lane.b32.xlu0 %v3289, 32
  %v3332 = vpop.permute.xlu0 %3331
  %3333 = vrot.lane.b32.xlu0 %v3290, 32
  %v3334 = vpop.permute.xlu0 %3333
  %3335 = vrot.lane.b32.xlu0 %v3291, 32
  %v3336 = vpop.permute.xlu0 %3335
  %3337 = vrot.lane.b32.xlu0 %v3292, 32
  %v3338 = vpop.permute.xlu0 %3337
  %3339 = vrot.lane.b32.xlu0 %v3293, 32
  %v3340 = vpop.permute.xlu0 %3339
  %3341 = vrot.lane.b32.xlu0 %v3294, 32
  %v3342 = vpop.permute.xlu0 %3341
  %v3359 = vsel %vm222, %v2513, %v3312
  %v3360 = vsel %vm222, %v2514, %v3314
  %v3361 = vsel %vm222, %v2515, %v3316
  %v3362 = vsel %vm222, %v2516, %v3318
  %v3363 = vsel %vm222, %v2517, %v3320
  %v3364 = vsel %vm222, %v2518, %v3322
  %v3365 = vsel %vm222, %v2519, %v3324
  %v3366 = vsel %vm222, %v2520, %v3326
  %v3367 = vsel %vm222, %v2521, %v3328
  %v3368 = vsel %vm222, %v2522, %v3330
  %v3369 = vsel %vm222, %v2523, %v3332
  %v3370 = vsel %vm222, %v2524, %v3334
  %v3371 = vsel %vm222, %v2525, %v3336
  %v3372 = vsel %vm222, %v2526, %v3338
  %v3373 = vsel %vm222, %v2527, %v3340
  %v3374 = vsel %vm222, %v2528, %v3342
  %v3375 = vld [vmem:[%s8] sm:$0xff]
  %v3376 = vld [vmem:[%s8 + $0x8] sm:$0xff]
  %v3377 = vld [vmem:[%s8 + $0x10] sm:$0xff]
  %v3378 = vld [vmem:[%s8 + $0x18] sm:$0xff]
  %v3379 = vld [vmem:[%s8 + $0x20] sm:$0xff]
  %v3380 = vld [vmem:[%s8 + $0x28] sm:$0xff]
  %v3381 = vld [vmem:[%s8 + $0x30] sm:$0xff]
  %v3382 = vld [vmem:[%s8 + $0x38] sm:$0xff]
  %v3383 = vld [vmem:[%s9] sm:$0x1]
  %v3384 = vld [vmem:[%s10] sm:$0x1]
  %v3385 = vpack.c.bf16 %v3360, %v3359
  %v3386 = vpack.c.bf16 %v3362, %v3361
  %v3387 = vpack.c.bf16 %v3364, %v3363
  %v3388 = vpack.c.bf16 %v3366, %v3365
  %v3389 = vpack.c.bf16 %v3368, %v3367
  %v3390 = vpack.c.bf16 %v3370, %v3369
  %v3391 = vpack.c.bf16 %v3372, %v3371
  %v3392 = vpack.c.bf16 %v3374, %v3373
  %v3393 = vpack.c.bf16 %v3376, %v3375
  %v3394 = vpack.c.bf16 %v3378, %v3377
  %v3395 = vpack.c.bf16 %v3380, %v3379
  %v3396 = vpack.c.bf16 %v3382, %v3381
  %v3398 = vsel %vm1749, %v3385, 0
  %v3401 = vsel %vm1749, %v3386, 0
  %v3404 = vsel %vm1749, %v3387, 0
  %v3407 = vsel %vm1749, %v3388, 0
  %v3410 = vsel %vm1749, %v3389, 0
  %v3413 = vsel %vm1749, %v3390, 0
  %v3416 = vsel %vm1749, %v3391, 0
  %v3419 = vsel %vm1749, %v3392, 0
  %3421 = vmatprep.subr.bf16.mxu0 0
  %3422 = vmatpush1.bf16.msra.mxu0 0
  %3423 = vmatprep.subr.bf16.mxu0 0
  %3424 = vmatpush1.bf16.msra.mxu0 0
  %3425 = vmatprep.subr.bf16.mxu0 0
  %3426 = vmatpush1.bf16.msra.mxu0 0
  %3427 = vmatprep.subr.bf16.mxu0 0
  %3428 = vmatpush1.bf16.msra.mxu0 0
  %3429 = vmatprep.subr.bf16.mxu0 0
  %3430 = vmatpush1.bf16.msra.mxu0 %v3396
  %3431 = vmatprep.subr.bf16.mxu0 0
  %3432 = vmatpush1.bf16.msra.mxu0 %v3395
  %3433 = vmatprep.subr.bf16.mxu0 0
  %3434 = vmatpush1.bf16.msra.mxu0 %v3394
  %3435 = vmatprep.subr.bf16.mxu0 0
  %3436 = vmatpush1.bf16.msra.mxu0 %v3393
  %3437 = vmatprep.subr.bf16.mxu0 0
  %3438 = vmatpush2.bf16.msra.mxu0 0
  %3439 = vmatprep.subr.bf16.mxu0 0
  %3440 = vmatpush2.bf16.msra.mxu0 0
  %3441 = vmatprep.subr.bf16.mxu0 0
  %3442 = vmatpush2.bf16.msra.mxu0 0
  %3443 = vmatprep.subr.bf16.mxu0 0
  %3444 = vmatpush2.bf16.msra.mxu0 0
  %3445 = vmatprep.subr.bf16.mxu0 0
  %3446 = vmatpush2.bf16.msra.mxu0 0
  %3447 = vmatprep.subr.bf16.mxu0 0
  %3448 = vmatpush2.bf16.msra.mxu0 0
  %3449 = vmatprep.subr.bf16.mxu0 0
  %3450 = vmatpush2.bf16.msra.mxu0 0
  %3451 = vmatprep.subr.bf16.mxu0 0
  %3452 = vmatpush2.bf16.msra.mxu0 0
  %3453 = vmatprep.mubr.bf16.mxu0 0
  %3454 = vmatmul.mubr.bf16.gmra.mxu0 %v3398
  %v3455 = vpop.f32.mrf.mxu0
  %v3456 = vadd.f32 0.0, %v3455
  %v3457 = vpop.f32.mrf.mxu0
  %v3458 = vpop.f32.mrf.mxu0
  %v3459 = vadd.f32 0.0, %v3458
  %v3460 = vpop.f32.mrf.mxu0
  %3461 = vmatprep.mubr.bf16.mxu0 0
  %3462 = vmatmul.mubr.bf16.gmra.mxu0 %v3401
  %v3463 = vpop.f32.mrf.mxu0
  %v3464 = vadd.f32 0.0, %v3463
  %v3465 = vpop.f32.mrf.mxu0
  %v3466 = vpop.f32.mrf.mxu0
  %v3467 = vadd.f32 0.0, %v3466
  %v3468 = vpop.f32.mrf.mxu0
  %3469 = vmatprep.mubr.bf16.mxu0 0
  %3470 = vmatmul.mubr.bf16.gmra.mxu0 %v3404
  %v3471 = vpop.f32.mrf.mxu0
  %v3472 = vadd.f32 0.0, %v3471
  %v3473 = vpop.f32.mrf.mxu0
  %v3474 = vpop.f32.mrf.mxu0
  %v3475 = vadd.f32 0.0, %v3474
  %v3476 = vpop.f32.mrf.mxu0
  %3477 = vmatprep.mubr.bf16.mxu0 0
  %3478 = vmatmul.mubr.bf16.gmra.mxu0 %v3407
  %v3479 = vpop.f32.mrf.mxu0
  %v3480 = vadd.f32 0.0, %v3479
  %v3481 = vpop.f32.mrf.mxu0
  %v3482 = vpop.f32.mrf.mxu0
  %v3483 = vadd.f32 0.0, %v3482
  %v3484 = vpop.f32.mrf.mxu0
  %3485 = vmatprep.mubr.bf16.mxu0 0
  %3486 = vmatmul.mubr.bf16.gmra.mxu0 %v3410
  %v3487 = vpop.f32.mrf.mxu0
  %v3488 = vadd.f32 0.0, %v3487
  %v3489 = vpop.f32.mrf.mxu0
  %v3490 = vpop.f32.mrf.mxu0
  %v3491 = vadd.f32 0.0, %v3490
  %v3492 = vpop.f32.mrf.mxu0
  %3493 = vmatprep.mubr.bf16.mxu0 0
  %3494 = vmatmul.mubr.bf16.gmra.mxu0 %v3413
  %v3495 = vpop.f32.mrf.mxu0
  %v3496 = vadd.f32 0.0, %v3495
  %v3497 = vpop.f32.mrf.mxu0
  %v3498 = vpop.f32.mrf.mxu0
  %v3499 = vadd.f32 0.0, %v3498
  %v3500 = vpop.f32.mrf.mxu0
  %3501 = vmatprep.mubr.bf16.mxu0 0
  %3502 = vmatmul.mubr.bf16.gmra.mxu0 %v3416
  %v3503 = vpop.f32.mrf.mxu0
  %v3504 = vadd.f32 0.0, %v3503
  %v3505 = vpop.f32.mrf.mxu0
  %v3506 = vpop.f32.mrf.mxu0
  %v3507 = vadd.f32 0.0, %v3506
  %v3508 = vpop.f32.mrf.mxu0
  %3509 = vmatprep.mubr.bf16.mxu0 0
  %3510 = vmatmul.mubr.bf16.gmra.mxu0 %v3419
  %v3511 = vpop.f32.mrf.mxu0
  %v3512 = vadd.f32 0.0, %v3511
  %v3513 = vpop.f32.mrf.mxu0
  %v3514 = vpop.f32.mrf.mxu0
  %v3515 = vadd.f32 0.0, %v3514
  %v3516 = vpop.f32.mrf.mxu0
  %3517 = vdwg.mxu0
  %vm3518 = vcmask 64512
  %v3520 = vsel %vm3518, %v3383, 0
  %v3523 = vsel %vm3518, %v3456, 0
  %v3526 = vsel %vm3518, %v3459, 0
  %v3529 = vsel %vm3518, %v3464, 0
  %v3532 = vsel %vm3518, %v3467, 0
  %v3535 = vsel %vm3518, %v3472, 0
  %v3538 = vsel %vm3518, %v3475, 0
  %v3541 = vsel %vm3518, %v3480, 0
  %v3544 = vsel %vm3518, %v3483, 0
  %v3547 = vsel %vm3518, %v3488, 0
  %v3550 = vsel %vm3518, %v3491, 0
  %v3553 = vsel %vm3518, %v3496, 0
  %v3556 = vsel %vm3518, %v3499, 0
  %v3559 = vsel %vm3518, %v3504, 0
  %v3562 = vsel %vm3518, %v3507, 0
  %v3565 = vsel %vm3518, %v3512, 0
  %v3568 = vsel %vm3518, %v3515, 0
  %3570 = vmatprep.subr.mxu0 0.0
  %3571 = vmatpush1.xpose.msra.mxu0 %v3568
  %3572 = vmatprep.subr.mxu0 0.0
  %3573 = vmatpush1.xpose.msra.mxu0 %v3565
  %3574 = vmatprep.subr.mxu0 0.0
  %3575 = vmatpush1.xpose.msra.mxu0 %v3562
  %3576 = vmatprep.subr.mxu0 0.0
  %3577 = vmatpush1.xpose.msra.mxu0 %v3559
  %3578 = vmatprep.subr.mxu0 0.0
  %3579 = vmatpush1.xpose.msra.mxu0 %v3556
  %3580 = vmatprep.subr.mxu0 0.0
  %3581 = vmatpush1.xpose.msra.mxu0 %v3553
  %3582 = vmatprep.subr.mxu0 0.0
  %3583 = vmatpush1.xpose.msra.mxu0 %v3550
  %3584 = vmatprep.subr.mxu0 0.0
  %3585 = vmatpush1.xpose.msra.mxu0 %v3547
  %3586 = vmatprep.subr.mxu0 0.0
  %3587 = vmatpush1.xpose.msra.mxu0 %v3544
  %3588 = vmatprep.subr.mxu0 0.0
  %3589 = vmatpush1.xpose.msra.mxu0 %v3541
  %3590 = vmatprep.subr.mxu0 0.0
  %3591 = vmatpush1.xpose.msra.mxu0 %v3538
  %3592 = vmatprep.subr.mxu0 0.0
  %3593 = vmatpush1.xpose.msra.mxu0 %v3535
  %3594 = vmatprep.subr.mxu0 0.0
  %3595 = vmatpush1.xpose.msra.mxu0 %v3532
  %3596 = vmatprep.subr.mxu0 0.0
  %3597 = vmatpush1.xpose.msra.mxu0 %v3529
  %3598 = vmatprep.subr.mxu0 0.0
  %3599 = vmatpush1.xpose.msra.mxu0 %v3526
  %3600 = vmatprep.subr.mxu0 0.0
  %3601 = vmatpush1.xpose.msra.mxu0 %v3523
  %3602 = vmatprep.subr.mxu0 0.0
  %3603 = vmatpush2.xpose.msra.mxu0 0.0
  %3604 = vmatprep.subr.mxu0 0.0
  %3605 = vmatpush2.xpose.msra.mxu0 0.0
  %3606 = vmatprep.subr.mxu0 0.0
  %3607 = vmatpush2.xpose.msra.mxu0 0.0
  %3608 = vmatprep.subr.mxu0 0.0
  %3609 = vmatpush2.xpose.msra.mxu0 0.0
  %3610 = vmatprep.subr.mxu0 0.0
  %3611 = vmatpush2.xpose.msra.mxu0 0.0
  %3612 = vmatprep.subr.mxu0 0.0
  %3613 = vmatpush2.xpose.msra.mxu0 0.0
  %3614 = vmatprep.subr.mxu0 0.0
  %3615 = vmatpush2.xpose.msra.mxu0 0.0
  %3616 = vmatprep.subr.mxu0 0.0
  %3617 = vmatpush2.xpose.msra.mxu0 0.0
  %3618 = vmatprep.subr.mxu0 0.0
  %3619 = vmatpush2.xpose.msra.mxu0 0.0
  %3620 = vmatprep.subr.mxu0 0.0
  %3621 = vmatpush2.xpose.msra.mxu0 0.0
  %3622 = vmatprep.subr.mxu0 0.0
  %3623 = vmatpush2.xpose.msra.mxu0 0.0
  %3624 = vmatprep.subr.mxu0 0.0
  %3625 = vmatpush2.xpose.msra.mxu0 0.0
  %3626 = vmatprep.subr.mxu0 0.0
  %3627 = vmatpush2.xpose.msra.mxu0 0.0
  %3628 = vmatprep.subr.mxu0 0.0
  %3629 = vmatpush2.xpose.msra.mxu0 0.0
  %3630 = vmatprep.subr.mxu0 0.0
  %3631 = vmatpush2.xpose.msra.mxu0 0.0
  %3632 = vmatprep.subr.mxu0 0.0
  %3633 = vmatpush2.xpose.msra.mxu0 0.0
  %3634 = vmatprep.mubr.f32.mxu0 0.0
  %3635 = vmatmul.mubr.f32.gmra.mxu0 %v3520
  %v3636 = vpop.f32.mrf.mxu0
  %v3637 = vadd.f32 0.0, %v3636
  %v3638 = vpop.f32.mrf.mxu0
  %3639 = vdwg.mxu0
  %v3641 = vlaneseq
  %v3642 = vshrl.u32 %v3641, 7
  %v3643 = vsub.s32 0, %v3642
  %v3644 = vrot.slane %v3384, %v3643
  %v3646 = vmul.f32 %v3456, %v3644
  %v3647 = vmul.f32 %v3459, %v3644
  %v3648 = vmul.f32 %v3464, %v3644
  %v3649 = vmul.f32 %v3467, %v3644
  %v3650 = vmul.f32 %v3472, %v3644
  %v3651 = vmul.f32 %v3475, %v3644
  %v3652 = vmul.f32 %v3480, %v3644
  %v3653 = vmul.f32 %v3483, %v3644
  %v3654 = vmul.f32 %v3488, %v3644
  %v3655 = vmul.f32 %v3491, %v3644
  %v3656 = vmul.f32 %v3496, %v3644
  %v3657 = vmul.f32 %v3499, %v3644
  %v3658 = vmul.f32 %v3504, %v3644
  %v3659 = vmul.f32 %v3507, %v3644
  %v3660 = vmul.f32 %v3512, %v3644
  %v3661 = vmul.f32 %v3515, %v3644
  %v3662 = vsel %vm3518, %v3646, 0.0
  %3663 = vadd.xlane.f32.xlu0 %v3662
  %v3664 = vpop.xlane.xlu0 %3663
  %v3665 = vsel %vm3518, %v3647, 0.0
  %3666 = vadd.xlane.f32.xlu0 %v3665
  %v3667 = vpop.xlane.xlu0 %3666
  %v3668 = vsel %vm3518, %v3648, 0.0
  %3669 = vadd.xlane.f32.xlu0 %v3668
  %v3670 = vpop.xlane.xlu0 %3669
  %v3671 = vsel %vm3518, %v3649, 0.0
  %3672 = vadd.xlane.f32.xlu0 %v3671
  %v3673 = vpop.xlane.xlu0 %3672
  %v3674 = vsel %vm3518, %v3650, 0.0
  %3675 = vadd.xlane.f32.xlu0 %v3674
  %v3676 = vpop.xlane.xlu0 %3675
  %v3677 = vsel %vm3518, %v3651, 0.0
  %3678 = vadd.xlane.f32.xlu0 %v3677
  %v3679 = vpop.xlane.xlu0 %3678
  %v3680 = vsel %vm3518, %v3652, 0.0
  %3681 = vadd.xlane.f32.xlu0 %v3680
  %v3682 = vpop.xlane.xlu0 %3681
  %v3683 = vsel %vm3518, %v3653, 0.0
  %3684 = vadd.xlane.f32.xlu0 %v3683
  %v3685 = vpop.xlane.xlu0 %3684
  %v3686 = vsel %vm3518, %v3654, 0.0
  %3687 = vadd.xlane.f32.xlu0 %v3686
  %v3688 = vpop.xlane.xlu0 %3687
  %v3689 = vsel %vm3518, %v3655, 0.0
  %3690 = vadd.xlane.f32.xlu0 %v3689
  %v3691 = vpop.xlane.xlu0 %3690
  %v3692 = vsel %vm3518, %v3656, 0.0
  %3693 = vadd.xlane.f32.xlu0 %v3692
  %v3694 = vpop.xlane.xlu0 %3693
  %v3695 = vsel %vm3518, %v3657, 0.0
  %3696 = vadd.xlane.f32.xlu0 %v3695
  %v3697 = vpop.xlane.xlu0 %3696
  %v3698 = vsel %vm3518, %v3658, 0.0
  %3699 = vadd.xlane.f32.xlu0 %v3698
  %v3700 = vpop.xlane.xlu0 %3699
  %v3701 = vsel %vm3518, %v3659, 0.0
  %3702 = vadd.xlane.f32.xlu0 %v3701
  %v3703 = vpop.xlane.xlu0 %3702
  %v3704 = vsel %vm3518, %v3660, 0.0
  %3705 = vadd.xlane.f32.xlu0 %v3704
  %v3706 = vpop.xlane.xlu0 %3705
  %v3707 = vsel %vm3518, %v3661, 0.0
  %3708 = vadd.xlane.f32.xlu0 %v3707
  %v3709 = vpop.xlane.xlu0 %3708
  %v3710 = vlaneseq
  %v3711 = vshrl.u32 %v3710, 7
  %v3712 = vsub.s32 0, %v3711
  %v3713 = vrot.slane %v3637, %v3712
  %v3714 = vadd.f32 %v3664, %v3713
  %v3715 = vadd.f32 %v3667, %v3713
  %v3716 = vadd.f32 %v3670, %v3713
  %v3717 = vadd.f32 %v3673, %v3713
  %v3718 = vadd.f32 %v3676, %v3713
  %v3719 = vadd.f32 %v3679, %v3713
  %v3720 = vadd.f32 %v3682, %v3713
  %v3721 = vadd.f32 %v3685, %v3713
  %v3722 = vadd.f32 %v3688, %v3713
  %v3723 = vadd.f32 %v3691, %v3713
  %v3724 = vadd.f32 %v3694, %v3713
  %v3725 = vadd.f32 %v3697, %v3713
  %v3726 = vadd.f32 %v3700, %v3713
  %v3727 = vadd.f32 %v3703, %v3713
  %v3728 = vadd.f32 %v3706, %v3713
  %v3729 = vadd.f32 %v3709, %v3713
  %v3730 = vmul.f32 %v3714, 0.2
  %v3731 = vmul.f32 %v3715, 0.2
  %v3732 = vmul.f32 %v3716, 0.2
  %v3733 = vmul.f32 %v3717, 0.2
  %v3734 = vmul.f32 %v3718, 0.2
  %v3735 = vmul.f32 %v3719, 0.2
  %v3736 = vmul.f32 %v3720, 0.2
  %v3737 = vmul.f32 %v3721, 0.2
  %v3738 = vmul.f32 %v3722, 0.2
  %v3739 = vmul.f32 %v3723, 0.2
  %v3740 = vmul.f32 %v3724, 0.2
  %v3741 = vmul.f32 %v3725, 0.2
  %v3742 = vmul.f32 %v3726, 0.2
  %v3743 = vmul.f32 %v3727, 0.2
  %v3744 = vmul.f32 %v3728, 0.2
  %v3745 = vmul.f32 %v3729, 0.2
  %v3746 = vmax.f32 %v3714, %v3730
  %v3747 = vmax.f32 %v3715, %v3731
  %v3748 = vmax.f32 %v3716, %v3732
  %v3749 = vmax.f32 %v3717, %v3733
  %v3750 = vmax.f32 %v3718, %v3734
  %v3751 = vmax.f32 %v3719, %v3735
  %v3752 = vmax.f32 %v3720, %v3736
  %v3753 = vmax.f32 %v3721, %v3737
  %v3754 = vmax.f32 %v3722, %v3738
  %v3755 = vmax.f32 %v3723, %v3739
  %v3756 = vmax.f32 %v3724, %v3740
  %v3757 = vmax.f32 %v3725, %v3741
  %v3758 = vmax.f32 %v3726, %v3742
  %v3759 = vmax.f32 %v3727, %v3743
  %v3760 = vmax.f32 %v3728, %v3744
  %v3761 = vmax.f32 %v3729, %v3745
  %v3762 = vsel %vm55, %v3746, -1e+30
  %v3763 = vsel %vm56, %v3747, -1e+30
  %v3764 = vsel %vm57, %v3748, -1e+30
  %v3765 = vsel %vm58, %v3749, -1e+30
  %v3766 = vsel %vm59, %v3750, -1e+30
  %v3767 = vsel %vm60, %v3751, -1e+30
  %v3768 = vsel %vm61, %v3752, -1e+30
  %v3769 = vsel %vm62, %v3753, -1e+30
  %v3770 = vsel %vm63, %v3754, -1e+30
  %v3771 = vsel %vm64, %v3755, -1e+30
  %v3772 = vsel %vm65, %v3756, -1e+30
  %v3773 = vsel %vm66, %v3757, -1e+30
  %v3774 = vsel %vm67, %v3758, -1e+30
  %v3775 = vsel %vm68, %v3759, -1e+30
  %v3776 = vsel %vm69, %v3760, -1e+30
  %v3777 = vsel %vm70, %v3761, -1e+30
  %3778 = vmax.xlane.f32.xlu0 %v3762
  %v3779 = vpop.xlane.xlu0 %3778
  %3780 = vmax.xlane.f32.xlu0 %v3763
  %v3781 = vpop.xlane.xlu0 %3780
  %3782 = vmax.xlane.f32.xlu0 %v3764
  %v3783 = vpop.xlane.xlu0 %3782
  %3784 = vmax.xlane.f32.xlu0 %v3765
  %v3785 = vpop.xlane.xlu0 %3784
  %3786 = vmax.xlane.f32.xlu0 %v3766
  %v3787 = vpop.xlane.xlu0 %3786
  %3788 = vmax.xlane.f32.xlu0 %v3767
  %v3789 = vpop.xlane.xlu0 %3788
  %3790 = vmax.xlane.f32.xlu0 %v3768
  %v3791 = vpop.xlane.xlu0 %3790
  %3792 = vmax.xlane.f32.xlu0 %v3769
  %v3793 = vpop.xlane.xlu0 %3792
  %3794 = vmax.xlane.f32.xlu0 %v3770
  %v3795 = vpop.xlane.xlu0 %3794
  %3796 = vmax.xlane.f32.xlu0 %v3771
  %v3797 = vpop.xlane.xlu0 %3796
  %3798 = vmax.xlane.f32.xlu0 %v3772
  %v3799 = vpop.xlane.xlu0 %3798
  %3800 = vmax.xlane.f32.xlu0 %v3773
  %v3801 = vpop.xlane.xlu0 %3800
  %3802 = vmax.xlane.f32.xlu0 %v3774
  %v3803 = vpop.xlane.xlu0 %3802
  %3804 = vmax.xlane.f32.xlu0 %v3775
  %v3805 = vpop.xlane.xlu0 %3804
  %3806 = vmax.xlane.f32.xlu0 %v3776
  %v3807 = vpop.xlane.xlu0 %3806
  %3808 = vmax.xlane.f32.xlu0 %v3777
  %v3809 = vpop.xlane.xlu0 %3808
  %v3810 = vsub.f32 %v3762, %v3779
  %v3811 = vsub.f32 %v3763, %v3781
  %v3812 = vsub.f32 %v3764, %v3783
  %v3813 = vsub.f32 %v3765, %v3785
  %v3814 = vsub.f32 %v3766, %v3787
  %v3815 = vsub.f32 %v3767, %v3789
  %v3816 = vsub.f32 %v3768, %v3791
  %v3817 = vsub.f32 %v3769, %v3793
  %v3818 = vsub.f32 %v3770, %v3795
  %v3819 = vsub.f32 %v3771, %v3797
  %v3820 = vsub.f32 %v3772, %v3799
  %v3821 = vsub.f32 %v3773, %v3801
  %v3822 = vsub.f32 %v3774, %v3803
  %v3823 = vsub.f32 %v3775, %v3805
  %v3824 = vsub.f32 %v3776, %v3807
  %v3825 = vsub.f32 %v3777, %v3809
  %v3826 = vmul.f32 %v3810, 1.442695
  %v3827 = vpow.pop %v3826
  %v3828 = vmul.f32 %v3811, 1.442695
  %v3829 = vpow.pop %v3828
  %v3830 = vmul.f32 %v3812, 1.442695
  %v3831 = vpow.pop %v3830
  %v3832 = vmul.f32 %v3813, 1.442695
  %v3833 = vpow.pop %v3832
  %v3834 = vmul.f32 %v3814, 1.442695
  %v3835 = vpow.pop %v3834
  %v3836 = vmul.f32 %v3815, 1.442695
  %v3837 = vpow.pop %v3836
  %v3838 = vmul.f32 %v3816, 1.442695
  %v3839 = vpow.pop %v3838
  %v3840 = vmul.f32 %v3817, 1.442695
  %v3841 = vpow.pop %v3840
  %v3842 = vmul.f32 %v3818, 1.442695
  %v3843 = vpow.pop %v3842
  %v3844 = vmul.f32 %v3819, 1.442695
  %v3845 = vpow.pop %v3844
  %v3846 = vmul.f32 %v3820, 1.442695
  %v3847 = vpow.pop %v3846
  %v3848 = vmul.f32 %v3821, 1.442695
  %v3849 = vpow.pop %v3848
  %v3850 = vmul.f32 %v3822, 1.442695
  %v3851 = vpow.pop %v3850
  %v3852 = vmul.f32 %v3823, 1.442695
  %v3853 = vpow.pop %v3852
  %v3854 = vmul.f32 %v3824, 1.442695
  %v3855 = vpow.pop %v3854
  %v3856 = vmul.f32 %v3825, 1.442695
  %v3857 = vpow.pop %v3856
  %v3858 = vsel %vm55, %v3827, 0.0
  %v3859 = vsel %vm56, %v3829, 0.0
  %v3860 = vsel %vm57, %v3831, 0.0
  %v3861 = vsel %vm58, %v3833, 0.0
  %v3862 = vsel %vm59, %v3835, 0.0
  %v3863 = vsel %vm60, %v3837, 0.0
  %v3864 = vsel %vm61, %v3839, 0.0
  %v3865 = vsel %vm62, %v3841, 0.0
  %v3866 = vsel %vm63, %v3843, 0.0
  %v3867 = vsel %vm64, %v3845, 0.0
  %v3868 = vsel %vm65, %v3847, 0.0
  %v3869 = vsel %vm66, %v3849, 0.0
  %v3870 = vsel %vm67, %v3851, 0.0
  %v3871 = vsel %vm68, %v3853, 0.0
  %v3872 = vsel %vm69, %v3855, 0.0
  %v3873 = vsel %vm70, %v3857, 0.0
  %3874 = vadd.xlane.f32.xlu0 %v3858
  %v3875 = vpop.xlane.xlu0 %3874
  %3876 = vadd.xlane.f32.xlu0 %v3859
  %v3877 = vpop.xlane.xlu0 %3876
  %3878 = vadd.xlane.f32.xlu0 %v3860
  %v3879 = vpop.xlane.xlu0 %3878
  %3880 = vadd.xlane.f32.xlu0 %v3861
  %v3881 = vpop.xlane.xlu0 %3880
  %3882 = vadd.xlane.f32.xlu0 %v3862
  %v3883 = vpop.xlane.xlu0 %3882
  %3884 = vadd.xlane.f32.xlu0 %v3863
  %v3885 = vpop.xlane.xlu0 %3884
  %3886 = vadd.xlane.f32.xlu0 %v3864
  %v3887 = vpop.xlane.xlu0 %3886
  %3888 = vadd.xlane.f32.xlu0 %v3865
  %v3889 = vpop.xlane.xlu0 %3888
  %3890 = vadd.xlane.f32.xlu0 %v3866
  %v3891 = vpop.xlane.xlu0 %3890
  %3892 = vadd.xlane.f32.xlu0 %v3867
  %v3893 = vpop.xlane.xlu0 %3892
  %3894 = vadd.xlane.f32.xlu0 %v3868
  %v3895 = vpop.xlane.xlu0 %3894
  %3896 = vadd.xlane.f32.xlu0 %v3869
  %v3897 = vpop.xlane.xlu0 %3896
  %3898 = vadd.xlane.f32.xlu0 %v3870
  %v3899 = vpop.xlane.xlu0 %3898
  %3900 = vadd.xlane.f32.xlu0 %v3871
  %v3901 = vpop.xlane.xlu0 %3900
  %3902 = vadd.xlane.f32.xlu0 %v3872
  %v3903 = vpop.xlane.xlu0 %3902
  %3904 = vadd.xlane.f32.xlu0 %v3873
  %v3905 = vpop.xlane.xlu0 %3904
  %vm3906 = vcmp.le.f32.partialorder %v3875, 0.0
  %vm3907 = vcmp.le.f32.partialorder %v3877, 0.0
  %vm3908 = vcmp.le.f32.partialorder %v3879, 0.0
  %vm3909 = vcmp.le.f32.partialorder %v3881, 0.0
  %vm3910 = vcmp.le.f32.partialorder %v3883, 0.0
  %vm3911 = vcmp.le.f32.partialorder %v3885, 0.0
  %vm3912 = vcmp.le.f32.partialorder %v3887, 0.0
  %vm3913 = vcmp.le.f32.partialorder %v3889, 0.0
  %vm3914 = vcmp.le.f32.partialorder %v3891, 0.0
  %vm3915 = vcmp.le.f32.partialorder %v3893, 0.0
  %vm3916 = vcmp.le.f32.partialorder %v3895, 0.0
  %vm3917 = vcmp.le.f32.partialorder %v3897, 0.0
  %vm3918 = vcmp.le.f32.partialorder %v3899, 0.0
  %vm3919 = vcmp.le.f32.partialorder %v3901, 0.0
  %vm3920 = vcmp.le.f32.partialorder %v3903, 0.0
  %vm3921 = vcmp.le.f32.partialorder %v3905, 0.0
  %v3922 = vsel %vm3906, 1.0, %v3875
  %v3923 = vsel %vm3907, 1.0, %v3877
  %v3924 = vsel %vm3908, 1.0, %v3879
  %v3925 = vsel %vm3909, 1.0, %v3881
  %v3926 = vsel %vm3910, 1.0, %v3883
  %v3927 = vsel %vm3911, 1.0, %v3885
  %v3928 = vsel %vm3912, 1.0, %v3887
  %v3929 = vsel %vm3913, 1.0, %v3889
  %v3930 = vsel %vm3914, 1.0, %v3891
  %v3931 = vsel %vm3915, 1.0, %v3893
  %v3932 = vsel %vm3916, 1.0, %v3895
  %v3933 = vsel %vm3917, 1.0, %v3897
  %v3934 = vsel %vm3918, 1.0, %v3899
  %v3935 = vsel %vm3919, 1.0, %v3901
  %v3936 = vsel %vm3920, 1.0, %v3903
  %v3937 = vsel %vm3921, 1.0, %v3905
  %v3938 = vrcp.pop %v3922
  %v3939 = vrcp.pop %v3923
  %v3940 = vrcp.pop %v3924
  %v3941 = vrcp.pop %v3925
  %v3942 = vrcp.pop %v3926
  %v3943 = vrcp.pop %v3927
  %v3944 = vrcp.pop %v3928
  %v3945 = vrcp.pop %v3929
  %v3946 = vrcp.pop %v3930
  %v3947 = vrcp.pop %v3931
  %v3948 = vrcp.pop %v3932
  %v3949 = vrcp.pop %v3933
  %v3950 = vrcp.pop %v3934
  %v3951 = vrcp.pop %v3935
  %v3952 = vrcp.pop %v3936
  %v3953 = vrcp.pop %v3937
  %v3954 = vmul.f32 %v3858, %v3938
  %v3955 = vmul.f32 %v3859, %v3939
  %v3956 = vmul.f32 %v3860, %v3940
  %v3957 = vmul.f32 %v3861, %v3941
  %v3958 = vmul.f32 %v3862, %v3942
  %v3959 = vmul.f32 %v3863, %v3943
  %v3960 = vmul.f32 %v3864, %v3944
  %v3961 = vmul.f32 %v3865, %v3945
  %v3962 = vmul.f32 %v3866, %v3946
  %v3963 = vmul.f32 %v3867, %v3947
  %v3964 = vmul.f32 %v3868, %v3948
  %v3965 = vmul.f32 %v3869, %v3949
  %v3966 = vmul.f32 %v3870, %v3950
  %v3967 = vmul.f32 %v3871, %v3951
  %v3968 = vmul.f32 %v3872, %v3952
  %v3969 = vmul.f32 %v3873, %v3953
  %v3970 = vpack.c.bf16 %v3955, %v3954
  %v3971 = vpack.c.bf16 %v3957, %v3956
  %v3972 = vpack.c.bf16 %v3959, %v3958
  %v3973 = vpack.c.bf16 %v3961, %v3960
  %v3974 = vpack.c.bf16 %v3963, %v3962
  %v3975 = vpack.c.bf16 %v3965, %v3964
  %v3976 = vpack.c.bf16 %v3967, %v3966
  %v3977 = vpack.c.bf16 %v3969, %v3968
  %v3978 = vpack.c.bf16 %v3459, %v3456
  %v3979 = vpack.c.bf16 %v3467, %v3464
  %v3980 = vpack.c.bf16 %v3475, %v3472
  %v3981 = vpack.c.bf16 %v3483, %v3480
  %v3982 = vpack.c.bf16 %v3491, %v3488
  %v3983 = vpack.c.bf16 %v3499, %v3496
  %v3984 = vpack.c.bf16 %v3507, %v3504
  %v3985 = vpack.c.bf16 %v3515, %v3512
  %3986 = vmatprep.subr.bf16.mxu0 0
  %3987 = vmatpush1.bf16.msra.mxu0 %v3985
  %3988 = vmatprep.subr.bf16.mxu0 0
  %3989 = vmatpush1.bf16.msra.mxu0 %v3984
  %3990 = vmatprep.subr.bf16.mxu0 0
  %3991 = vmatpush1.bf16.msra.mxu0 %v3983
  %3992 = vmatprep.subr.bf16.mxu0 0
  %3993 = vmatpush1.bf16.msra.mxu0 %v3982
  %3994 = vmatprep.subr.bf16.mxu0 0
  %3995 = vmatpush1.bf16.msra.mxu0 %v3981
  %3996 = vmatprep.subr.bf16.mxu0 0
  %3997 = vmatpush1.bf16.msra.mxu0 %v3980
  %3998 = vmatprep.subr.bf16.mxu0 0
  %3999 = vmatpush1.bf16.msra.mxu0 %v3979
  %4000 = vmatprep.subr.bf16.mxu0 0
  %4001 = vmatpush1.bf16.msra.mxu0 %v3978
  %4002 = vmatprep.subr.bf16.mxu0 0
  %4003 = vmatpush2.bf16.msra.mxu0 0
  %4004 = vmatprep.subr.bf16.mxu0 0
  %4005 = vmatpush2.bf16.msra.mxu0 0
  %4006 = vmatprep.subr.bf16.mxu0 0
  %4007 = vmatpush2.bf16.msra.mxu0 0
  %4008 = vmatprep.subr.bf16.mxu0 0
  %4009 = vmatpush2.bf16.msra.mxu0 0
  %4010 = vmatprep.subr.bf16.mxu0 0
  %4011 = vmatpush2.bf16.msra.mxu0 0
  %4012 = vmatprep.subr.bf16.mxu0 0
  %4013 = vmatpush2.bf16.msra.mxu0 0
  %4014 = vmatprep.subr.bf16.mxu0 0
  %4015 = vmatpush2.bf16.msra.mxu0 0
  %4016 = vmatprep.subr.bf16.mxu0 0
  %4017 = vmatpush2.bf16.msra.mxu0 0
  %4018 = vmatprep.mubr.bf16.mxu0 0
  %4019 = vmatmul.mubr.bf16.gmra.mxu0 %v3970
  %v4020 = vpop.f32.mrf.mxu0
  %v4021 = vadd.f32 0.0, %v4020
  %v4022 = vpop.f32.mrf.mxu0
  %v4023 = vpop.f32.mrf.mxu0
  %v4024 = vadd.f32 0.0, %v4023
  %v4025 = vpop.f32.mrf.mxu0
  %4026 = vmatprep.mubr.bf16.mxu0 0
  %4027 = vmatmul.mubr.bf16.gmra.mxu0 %v3971
  %v4028 = vpop.f32.mrf.mxu0
  %v4029 = vadd.f32 0.0, %v4028
  %v4030 = vpop.f32.mrf.mxu0
  %v4031 = vpop.f32.mrf.mxu0
  %v4032 = vadd.f32 0.0, %v4031
  %v4033 = vpop.f32.mrf.mxu0
  %4034 = vmatprep.mubr.bf16.mxu0 0
  %4035 = vmatmul.mubr.bf16.gmra.mxu0 %v3972
  %v4036 = vpop.f32.mrf.mxu0
  %v4037 = vadd.f32 0.0, %v4036
  %v4038 = vpop.f32.mrf.mxu0
  %v4039 = vpop.f32.mrf.mxu0
  %v4040 = vadd.f32 0.0, %v4039
  %v4041 = vpop.f32.mrf.mxu0
  %4042 = vmatprep.mubr.bf16.mxu0 0
  %4043 = vmatmul.mubr.bf16.gmra.mxu0 %v3973
  %v4044 = vpop.f32.mrf.mxu0
  %v4045 = vadd.f32 0.0, %v4044
  %v4046 = vpop.f32.mrf.mxu0
  %v4047 = vpop.f32.mrf.mxu0
  %v4048 = vadd.f32 0.0, %v4047
  %v4049 = vpop.f32.mrf.mxu0
  %4050 = vmatprep.mubr.bf16.mxu0 0
  %4051 = vmatmul.mubr.bf16.gmra.mxu0 %v3974
  %v4052 = vpop.f32.mrf.mxu0
  %v4053 = vadd.f32 0.0, %v4052
  %v4054 = vpop.f32.mrf.mxu0
  %v4055 = vpop.f32.mrf.mxu0
  %v4056 = vadd.f32 0.0, %v4055
  %v4057 = vpop.f32.mrf.mxu0
  %4058 = vmatprep.mubr.bf16.mxu0 0
  %4059 = vmatmul.mubr.bf16.gmra.mxu0 %v3975
  %v4060 = vpop.f32.mrf.mxu0
  %v4061 = vadd.f32 0.0, %v4060
  %v4062 = vpop.f32.mrf.mxu0
  %v4063 = vpop.f32.mrf.mxu0
  %v4064 = vadd.f32 0.0, %v4063
  %v4065 = vpop.f32.mrf.mxu0
  %4066 = vmatprep.mubr.bf16.mxu0 0
  %4067 = vmatmul.mubr.bf16.gmra.mxu0 %v3976
  %v4068 = vpop.f32.mrf.mxu0
  %v4069 = vadd.f32 0.0, %v4068
  %v4070 = vpop.f32.mrf.mxu0
  %v4071 = vpop.f32.mrf.mxu0
  %v4072 = vadd.f32 0.0, %v4071
  %v4073 = vpop.f32.mrf.mxu0
  %4074 = vmatprep.mubr.bf16.mxu0 0
  %4075 = vmatmul.mubr.bf16.gmra.mxu0 %v3977
  %v4076 = vpop.f32.mrf.mxu0
  %v4077 = vadd.f32 0.0, %v4076
  %v4078 = vpop.f32.mrf.mxu0
  %v4079 = vpop.f32.mrf.mxu0
  %v4080 = vadd.f32 0.0, %v4079
  %v4081 = vpop.f32.mrf.mxu0
  %4082 = vdwg.mxu0
  %vm4083 = vcmp.gt.f32.partialorder %v4021, 0.0
  %vm4084 = vcmp.gt.f32.partialorder %v4024, 0.0
  %vm4085 = vcmp.gt.f32.partialorder %v4029, 0.0
  %vm4086 = vcmp.gt.f32.partialorder %v4032, 0.0
  %vm4087 = vcmp.gt.f32.partialorder %v4037, 0.0
  %vm4088 = vcmp.gt.f32.partialorder %v4040, 0.0
  %vm4089 = vcmp.gt.f32.partialorder %v4045, 0.0
  %vm4090 = vcmp.gt.f32.partialorder %v4048, 0.0
  %vm4091 = vcmp.gt.f32.partialorder %v4053, 0.0
  %vm4092 = vcmp.gt.f32.partialorder %v4056, 0.0
  %vm4093 = vcmp.gt.f32.partialorder %v4061, 0.0
  %vm4094 = vcmp.gt.f32.partialorder %v4064, 0.0
  %vm4095 = vcmp.gt.f32.partialorder %v4069, 0.0
  %vm4096 = vcmp.gt.f32.partialorder %v4072, 0.0
  %vm4097 = vcmp.gt.f32.partialorder %v4077, 0.0
  %vm4098 = vcmp.gt.f32.partialorder %v4080, 0.0
  %v4099 = vmin.f32 %v4021, 0.0
  %v4100 = vmin.f32 %v4024, 0.0
  %v4101 = vmin.f32 %v4029, 0.0
  %v4102 = vmin.f32 %v4032, 0.0
  %v4103 = vmin.f32 %v4037, 0.0
  %v4104 = vmin.f32 %v4040, 0.0
  %v4105 = vmin.f32 %v4045, 0.0
  %v4106 = vmin.f32 %v4048, 0.0
  %v4107 = vmin.f32 %v4053, 0.0
  %v4108 = vmin.f32 %v4056, 0.0
  %v4109 = vmin.f32 %v4061, 0.0
  %v4110 = vmin.f32 %v4064, 0.0
  %v4111 = vmin.f32 %v4069, 0.0
  %v4112 = vmin.f32 %v4072, 0.0
  %v4113 = vmin.f32 %v4077, 0.0
  %v4114 = vmin.f32 %v4080, 0.0
  %v4115 = vmul.f32 %v4099, 1.442695
  %v4116 = vpow.pop %v4115
  %v4117 = vmul.f32 %v4100, 1.442695
  %v4118 = vpow.pop %v4117
  %v4119 = vmul.f32 %v4101, 1.442695
  %v4120 = vpow.pop %v4119
  %v4121 = vmul.f32 %v4102, 1.442695
  %v4122 = vpow.pop %v4121
  %v4123 = vmul.f32 %v4103, 1.442695
  %v4124 = vpow.pop %v4123
  %v4125 = vmul.f32 %v4104, 1.442695
  %v4126 = vpow.pop %v4125
  %v4127 = vmul.f32 %v4105, 1.442695
  %v4128 = vpow.pop %v4127
  %v4129 = vmul.f32 %v4106, 1.442695
  %v4130 = vpow.pop %v4129
  %v4131 = vmul.f32 %v4107, 1.442695
  %v4132 = vpow.pop %v4131
  %v4133 = vmul.f32 %v4108, 1.442695
  %v4134 = vpow.pop %v4133
  %v4135 = vmul.f32 %v4109, 1.442695
  %v4136 = vpow.pop %v4135
  %v4137 = vmul.f32 %v4110, 1.442695
  %v4138 = vpow.pop %v4137
  %v4139 = vmul.f32 %v4111, 1.442695
  %v4140 = vpow.pop %v4139
  %v4141 = vmul.f32 %v4112, 1.442695
  %v4142 = vpow.pop %v4141
  %v4143 = vmul.f32 %v4113, 1.442695
  %v4144 = vpow.pop %v4143
  %v4145 = vmul.f32 %v4114, 1.442695
  %v4146 = vpow.pop %v4145
  %v4147 = vsub.f32 %v4116, 1.0
  %v4148 = vsub.f32 %v4118, 1.0
  %v4149 = vsub.f32 %v4120, 1.0
  %v4150 = vsub.f32 %v4122, 1.0
  %v4151 = vsub.f32 %v4124, 1.0
  %v4152 = vsub.f32 %v4126, 1.0
  %v4153 = vsub.f32 %v4128, 1.0
  %v4154 = vsub.f32 %v4130, 1.0
  %v4155 = vsub.f32 %v4132, 1.0
  %v4156 = vsub.f32 %v4134, 1.0
  %v4157 = vsub.f32 %v4136, 1.0
  %v4158 = vsub.f32 %v4138, 1.0
  %v4159 = vsub.f32 %v4140, 1.0
  %v4160 = vsub.f32 %v4142, 1.0
  %v4161 = vsub.f32 %v4144, 1.0
  %v4162 = vsub.f32 %v4146, 1.0
  %v4163 = vsel %vm4083, %v4021, %v4147
  %v4164 = vsel %vm4084, %v4024, %v4148
  %v4165 = vsel %vm4085, %v4029, %v4149
  %v4166 = vsel %vm4086, %v4032, %v4150
  %v4167 = vsel %vm4087, %v4037, %v4151
  %v4168 = vsel %vm4088, %v4040, %v4152
  %v4169 = vsel %vm4089, %v4045, %v4153
  %v4170 = vsel %vm4090, %v4048, %v4154
  %v4171 = vsel %vm4091, %v4053, %v4155
  %v4172 = vsel %vm4092, %v4056, %v4156
  %v4173 = vsel %vm4093, %v4061, %v4157
  %v4174 = vsel %vm4094, %v4064, %v4158
  %v4175 = vsel %vm4095, %v4069, %v4159
  %v4176 = vsel %vm4096, %v4072, %v4160
  %v4177 = vsel %vm4097, %v4077, %v4161
  %v4178 = vsel %vm4098, %v4080, %v4162
  %v4179 = vsel %vm3518, %v4163, -inf
  %4180 = vmax.xlane.f32.xlu0 %v4179
  %v4181 = vpop.xlane.xlu0 %4180
  %v4182 = vsel %vm3518, %v4164, -inf
  %4183 = vmax.xlane.f32.xlu0 %v4182
  %v4184 = vpop.xlane.xlu0 %4183
  %v4185 = vsel %vm3518, %v4165, -inf
  %4186 = vmax.xlane.f32.xlu0 %v4185
  %v4187 = vpop.xlane.xlu0 %4186
  %v4188 = vsel %vm3518, %v4166, -inf
  %4189 = vmax.xlane.f32.xlu0 %v4188
  %v4190 = vpop.xlane.xlu0 %4189
  %v4191 = vsel %vm3518, %v4167, -inf
  %4192 = vmax.xlane.f32.xlu0 %v4191
  %v4193 = vpop.xlane.xlu0 %4192
  %v4194 = vsel %vm3518, %v4168, -inf
  %4195 = vmax.xlane.f32.xlu0 %v4194
  %v4196 = vpop.xlane.xlu0 %4195
  %v4197 = vsel %vm3518, %v4169, -inf
  %4198 = vmax.xlane.f32.xlu0 %v4197
  %v4199 = vpop.xlane.xlu0 %4198
  %v4200 = vsel %vm3518, %v4170, -inf
  %4201 = vmax.xlane.f32.xlu0 %v4200
  %v4202 = vpop.xlane.xlu0 %4201
  %v4203 = vsel %vm3518, %v4171, -inf
  %4204 = vmax.xlane.f32.xlu0 %v4203
  %v4205 = vpop.xlane.xlu0 %4204
  %v4206 = vsel %vm3518, %v4172, -inf
  %4207 = vmax.xlane.f32.xlu0 %v4206
  %v4208 = vpop.xlane.xlu0 %4207
  %v4209 = vsel %vm3518, %v4173, -inf
  %4210 = vmax.xlane.f32.xlu0 %v4209
  %v4211 = vpop.xlane.xlu0 %4210
  %v4212 = vsel %vm3518, %v4174, -inf
  %4213 = vmax.xlane.f32.xlu0 %v4212
  %v4214 = vpop.xlane.xlu0 %4213
  %v4215 = vsel %vm3518, %v4175, -inf
  %4216 = vmax.xlane.f32.xlu0 %v4215
  %v4217 = vpop.xlane.xlu0 %4216
  %v4218 = vsel %vm3518, %v4176, -inf
  %4219 = vmax.xlane.f32.xlu0 %v4218
  %v4220 = vpop.xlane.xlu0 %4219
  %v4221 = vsel %vm3518, %v4177, -inf
  %4222 = vmax.xlane.f32.xlu0 %v4221
  %v4223 = vpop.xlane.xlu0 %4222
  %v4224 = vsel %vm3518, %v4178, -inf
  %4225 = vmax.xlane.f32.xlu0 %v4224
  %v4226 = vpop.xlane.xlu0 %4225
  %v4227 = vsub.f32 %v4163, %v4181
  %v4228 = vsub.f32 %v4164, %v4184
  %v4229 = vsub.f32 %v4165, %v4187
  %v4230 = vsub.f32 %v4166, %v4190
  %v4231 = vsub.f32 %v4167, %v4193
  %v4232 = vsub.f32 %v4168, %v4196
  %v4233 = vsub.f32 %v4169, %v4199
  %v4234 = vsub.f32 %v4170, %v4202
  %v4235 = vsub.f32 %v4171, %v4205
  %v4236 = vsub.f32 %v4172, %v4208
  %v4237 = vsub.f32 %v4173, %v4211
  %v4238 = vsub.f32 %v4174, %v4214
  %v4239 = vsub.f32 %v4175, %v4217
  %v4240 = vsub.f32 %v4176, %v4220
  %v4241 = vsub.f32 %v4177, %v4223
  %v4242 = vsub.f32 %v4178, %v4226
  %v4243 = vmul.f32 %v4227, 1.442695
  %v4244 = vpow.pop %v4243
  %v4245 = vmul.f32 %v4228, 1.442695
  %v4246 = vpow.pop %v4245
  %v4247 = vmul.f32 %v4229, 1.442695
  %v4248 = vpow.pop %v4247
  %v4249 = vmul.f32 %v4230, 1.442695
  %v4250 = vpow.pop %v4249
  %v4251 = vmul.f32 %v4231, 1.442695
  %v4252 = vpow.pop %v4251
  %v4253 = vmul.f32 %v4232, 1.442695
  %v4254 = vpow.pop %v4253
  %v4255 = vmul.f32 %v4233, 1.442695
  %v4256 = vpow.pop %v4255
  %v4257 = vmul.f32 %v4234, 1.442695
  %v4258 = vpow.pop %v4257
  %v4259 = vmul.f32 %v4235, 1.442695
  %v4260 = vpow.pop %v4259
  %v4261 = vmul.f32 %v4236, 1.442695
  %v4262 = vpow.pop %v4261
  %v4263 = vmul.f32 %v4237, 1.442695
  %v4264 = vpow.pop %v4263
  %v4265 = vmul.f32 %v4238, 1.442695
  %v4266 = vpow.pop %v4265
  %v4267 = vmul.f32 %v4239, 1.442695
  %v4268 = vpow.pop %v4267
  %v4269 = vmul.f32 %v4240, 1.442695
  %v4270 = vpow.pop %v4269
  %v4271 = vmul.f32 %v4241, 1.442695
  %v4272 = vpow.pop %v4271
  %v4273 = vmul.f32 %v4242, 1.442695
  %v4274 = vpow.pop %v4273
  %v4275 = vsel %vm3518, %v4244, 0.0
  %4276 = vadd.xlane.f32.xlu0 %v4275
  %v4277 = vpop.xlane.xlu0 %4276
  %v4278 = vsel %vm3518, %v4246, 0.0
  %4279 = vadd.xlane.f32.xlu0 %v4278
  %v4280 = vpop.xlane.xlu0 %4279
  %v4281 = vsel %vm3518, %v4248, 0.0
  %4282 = vadd.xlane.f32.xlu0 %v4281
  %v4283 = vpop.xlane.xlu0 %4282
  %v4284 = vsel %vm3518, %v4250, 0.0
  %4285 = vadd.xlane.f32.xlu0 %v4284
  %v4286 = vpop.xlane.xlu0 %4285
  %v4287 = vsel %vm3518, %v4252, 0.0
  %4288 = vadd.xlane.f32.xlu0 %v4287
  %v4289 = vpop.xlane.xlu0 %4288
  %v4290 = vsel %vm3518, %v4254, 0.0
  %4291 = vadd.xlane.f32.xlu0 %v4290
  %v4292 = vpop.xlane.xlu0 %4291
  %v4293 = vsel %vm3518, %v4256, 0.0
  %4294 = vadd.xlane.f32.xlu0 %v4293
  %v4295 = vpop.xlane.xlu0 %4294
  %v4296 = vsel %vm3518, %v4258, 0.0
  %4297 = vadd.xlane.f32.xlu0 %v4296
  %v4298 = vpop.xlane.xlu0 %4297
  %v4299 = vsel %vm3518, %v4260, 0.0
  %4300 = vadd.xlane.f32.xlu0 %v4299
  %v4301 = vpop.xlane.xlu0 %4300
  %v4302 = vsel %vm3518, %v4262, 0.0
  %4303 = vadd.xlane.f32.xlu0 %v4302
  %v4304 = vpop.xlane.xlu0 %4303
  %v4305 = vsel %vm3518, %v4264, 0.0
  %4306 = vadd.xlane.f32.xlu0 %v4305
  %v4307 = vpop.xlane.xlu0 %4306
  %v4308 = vsel %vm3518, %v4266, 0.0
  %4309 = vadd.xlane.f32.xlu0 %v4308
  %v4310 = vpop.xlane.xlu0 %4309
  %v4311 = vsel %vm3518, %v4268, 0.0
  %4312 = vadd.xlane.f32.xlu0 %v4311
  %v4313 = vpop.xlane.xlu0 %4312
  %v4314 = vsel %vm3518, %v4270, 0.0
  %4315 = vadd.xlane.f32.xlu0 %v4314
  %v4316 = vpop.xlane.xlu0 %4315
  %v4317 = vsel %vm3518, %v4272, 0.0
  %4318 = vadd.xlane.f32.xlu0 %v4317
  %v4319 = vpop.xlane.xlu0 %4318
  %v4320 = vsel %vm3518, %v4274, 0.0
  %4321 = vadd.xlane.f32.xlu0 %v4320
  %v4322 = vpop.xlane.xlu0 %4321
  %v4323 = vlog2.pop %v4277
  %v4324 = vmul.f32 %v4323, 0.6931472
  %v4325 = vlog2.pop %v4280
  %v4326 = vmul.f32 %v4325, 0.6931472
  %v4327 = vlog2.pop %v4283
  %v4328 = vmul.f32 %v4327, 0.6931472
  %v4329 = vlog2.pop %v4286
  %v4330 = vmul.f32 %v4329, 0.6931472
  %v4331 = vlog2.pop %v4289
  %v4332 = vmul.f32 %v4331, 0.6931472
  %v4333 = vlog2.pop %v4292
  %v4334 = vmul.f32 %v4333, 0.6931472
  %v4335 = vlog2.pop %v4295
  %v4336 = vmul.f32 %v4335, 0.6931472
  %v4337 = vlog2.pop %v4298
  %v4338 = vmul.f32 %v4337, 0.6931472
  %v4339 = vlog2.pop %v4301
  %v4340 = vmul.f32 %v4339, 0.6931472
  %v4341 = vlog2.pop %v4304
  %v4342 = vmul.f32 %v4341, 0.6931472
  %v4343 = vlog2.pop %v4307
  %v4344 = vmul.f32 %v4343, 0.6931472
  %v4345 = vlog2.pop %v4310
  %v4346 = vmul.f32 %v4345, 0.6931472
  %v4347 = vlog2.pop %v4313
  %v4348 = vmul.f32 %v4347, 0.6931472
  %v4349 = vlog2.pop %v4316
  %v4350 = vmul.f32 %v4349, 0.6931472
  %v4351 = vlog2.pop %v4319
  %v4352 = vmul.f32 %v4351, 0.6931472
  %v4353 = vlog2.pop %v4322
  %v4354 = vmul.f32 %v4353, 0.6931472
  %v4355 = vsub.f32 %v4227, %v4324
  %v4356 = vsub.f32 %v4228, %v4326
  %v4357 = vsub.f32 %v4229, %v4328
  %v4358 = vsub.f32 %v4230, %v4330
  %v4359 = vsub.f32 %v4231, %v4332
  %v4360 = vsub.f32 %v4232, %v4334
  %v4361 = vsub.f32 %v4233, %v4336
  %v4362 = vsub.f32 %v4234, %v4338
  %v4363 = vsub.f32 %v4235, %v4340
  %v4364 = vsub.f32 %v4236, %v4342
  %v4365 = vsub.f32 %v4237, %v4344
  %v4366 = vsub.f32 %v4238, %v4346
  %v4367 = vsub.f32 %v4239, %v4348
  %v4368 = vsub.f32 %v4240, %v4350
  %v4369 = vsub.f32 %v4241, %v4352
  %v4370 = vsub.f32 %v4242, %v4354
  %4371 = vst.msk [vmem:[%s11] sm:$0xff] %vm3518, %v4355
  %4372 = vst.msk [vmem:[%s11 + $0x8] sm:$0xff] %vm3518, %v4356
  %4373 = vst.msk [vmem:[%s11 + $0x10] sm:$0xff] %vm3518, %v4357
  %4374 = vst.msk [vmem:[%s11 + $0x18] sm:$0xff] %vm3518, %v4358
  %4375 = vst.msk [vmem:[%s11 + $0x20] sm:$0xff] %vm3518, %v4359
  %4376 = vst.msk [vmem:[%s11 + $0x28] sm:$0xff] %vm3518, %v4360
  %4377 = vst.msk [vmem:[%s11 + $0x30] sm:$0xff] %vm3518, %v4361
  %4378 = vst.msk [vmem:[%s11 + $0x38] sm:$0xff] %vm3518, %v4362
  %4379 = vst.msk [vmem:[%s11 + $0x40] sm:$0xff] %vm3518, %v4363
  %4380 = vst.msk [vmem:[%s11 + $0x48] sm:$0xff] %vm3518, %v4364
  %4381 = vst.msk [vmem:[%s11 + $0x50] sm:$0xff] %vm3518, %v4365
  %4382 = vst.msk [vmem:[%s11 + $0x58] sm:$0xff] %vm3518, %v4366
  %4383 = vst.msk [vmem:[%s11 + $0x60] sm:$0xff] %vm3518, %v4367
  %4384 = vst.msk [vmem:[%s11 + $0x68] sm:$0xff] %vm3518, %v4368
  %4385 = vst.msk [vmem:[%s11 + $0x70] sm:$0xff] %vm3518, %v4369
  %4386 = vst.msk [vmem:[%s11 + $0x78] sm:$0xff] %vm3518, %v4370
  // Predicated region
  $region46: #{tpu_custom_call.1} parent=0 // pred_check
    _
  $region47: #{tpu_custom_call.1} parent=0 // pred_check_branch
    %4388 = sbr.rel (0) target = $region49
  $region48: #{tpu_custom_call.1} parent=0 // pred_region
    _
  $region49: #{tpu_custom_call.1} parent=0 // pred_fallthru
    _
  // Predicated region
  $region50: #{tpu_custom_call.1} parent=0 // pred_check
    _
  $region51: #{tpu_custom_call.1} parent=0 // pred_check_branch
    %4390 = sbr.rel (0) target = $region53
  $region52: #{tpu_custom_call.1} parent=0 // pred_region
    _
  $region53: #{tpu_custom_call.1} parent=0 // pred_fallthru
    _

</llo_original>
